<compile_context>
chip_gen: v5e
topology: v5e:2x2
jax: 0.10.0
libtpu: 0.0.40
codegen_flags: <defaults>
</compile_context>

<pallas_src>
import numpy as np
import jax
import jax.numpy as jnp
from jax import lax
from jax.experimental import pallas as pl
from jax.experimental.pallas import tpu as pltpu


def _make_kernel(Cin, Cmid, Cout, D, H, W):
    S = D * H * W
    HW = H * W
    P = HW + W + 1  # max |flat shift| of a (-1,0,1)^3 neighborhood

    def kernel(x_ref, mask_ref, w1_ref, b1_ref, a1_ref, w2_ref, b2_ref, a2_ref,
               out_ref):
        # x_ref   : (1, Cin, S + 2P)    bf16, flat spatial, halo-padded with zeros
        # mask_ref: (27, S)             bf16 0/1 validity mask per (-1,0,1)^3 offset
        # w1_ref  : (Cmid, 27*Cin)      bf16 packed conv weights
        # b1_ref  : (Cmid, 1) f32       conv bias;      a1_ref: (Cmid, 1) PReLU slopes
        # w2_ref  : (8, Cout, 8*Cmid)   bf16 packed deconv weights per output parity
        # b2_ref  : (Cout, 1) f32       deconv bias;    a2_ref: (Cout, 1) PReLU slopes
        # out_ref : (1, 8*Cout, S) f32  parity-major deconv output
        xb = x_ref[0]            # (Cin, S + 2P)
        masks = mask_ref[...]    # (27, S)

        def shifted(src, a, b, c):
            # src: (C, S + 2P) flat + halo-padded; returns src shifted by (a, b, c)
            # in (d, h, w), zeroed where the neighbor is outside the volume.
            delta = a * HW + b * W + c
            k = (a + 1) * 9 + (b + 1) * 3 + (c + 1)
            return src[:, P + delta:P + delta + S] * masks[k:k + 1]

        # ---- stage 1: Conv3d(k=3, pad=1) + PReLU; h stays in VMEM --------------
        cols = []
        for kd in range(3):
            for kh in range(3):
                for kw in range(3):
                    cols.append(shifted(xb, kd - 1, kh - 1, kw - 1))   # (Cin, S)
        col = jnp.concatenate(cols, axis=0)                            # (27*Cin, S)
        h = jnp.dot(w1_ref[...], col, preferred_element_type=jnp.float32)
        h = h + b1_ref[...]
        h = jnp.where(h > 0.0, h, a1_ref[...] * h)                     # (Cmid, S) f32

        # flat halo-padded bf16 copy of h for the deconv taps
        zpad = jnp.zeros((Cmid, P), jnp.bfloat16)
        hf = jnp.concatenate([zpad, h.astype(jnp.bfloat16), zpad], axis=1)

        # ---- stage 2: ConvTranspose3d(k=4, s=2, p=1) + PReLU -------------------
        # parity decomposition:
        #   out[2q+pd, 2r+ph, 2s+pw] =
        #     sum_{td,th,tw in {0,1}} W2[:, :, 3-pd-2td, 3-ph-2th, 3-pw-2tw]
        #                             . h[q+pd+td-1, r+ph+th-1, s+pw+tw-1]
        ys = []
        for pd in range(2):
            for ph in range(2):
                for pw in range(2):
                    p = pd * 4 + ph * 2 + pw
                    taps = []
                    for td in range(2):
                        for th in range(2):
                            for tw in range(2):
                                taps.append(shifted(hf, pd + td - 1,
                                                    ph + th - 1,
                                                    pw + tw - 1))       # (Cmid, S)
                    slab = jnp.concatenate(taps, axis=0)                # (8*Cmid, S)
                    y = jnp.dot(w2_ref[p], slab,
                                preferred_element_type=jnp.float32)     # (Cout, S)
                    y = y + b2_ref[...]
                    ys.append(jnp.where(y > 0.0, y, a2_ref[...] * y))
        out_ref[0] = jnp.concatenate(ys, axis=0)                        # (8*Cout, S)

    return kernel


@jax.jit
def decoder_block_forward(x, w1, b1, a1, w2, b2, a2):
    """x: (N, Cin, D, H, W) f32 -> (N, Cout, 2D, 2H, 2W) f32 (PyTorch NCDHW)."""
    N, Cin, D, H, W = x.shape
    Cmid = w1.shape[0]
    Cout = w2.shape[1]
    S = D * H * W
    HW = H * W
    P = HW + W + 1

    # flat, halo-padded bf16 input: (N, Cin, S + 2P)
    xf = jnp.pad(x.reshape(N, Cin, S), ((0, 0), (0, 0), (P, P))).astype(jnp.bfloat16)

    # 0/1 validity masks for every (-1,0,1)^3 neighborhood offset, shape (27, S)
    s = np.arange(S)
    wi, hi, di = s % W, (s // W) % H, s // HW
    mlist = []
    for a in (-1, 0, 1):
        for b in (-1, 0, 1):
            for c in (-1, 0, 1):
                mlist.append((di + a >= 0) & (di + a < D) &
                             (hi + b >= 0) & (hi + b < H) &
                             (wi + c >= 0) & (wi + c < W))
    masks = jnp.asarray(np.stack(mlist).astype(np.float32), dtype=jnp.bfloat16)

    # packed conv weights: (Cmid, 27*Cin), column = tap*Cin + cin, tap = kd*9+kh*3+kw
    w1m = jnp.transpose(w1.reshape(Cmid, Cin, 27), (0, 2, 1)).reshape(Cmid, 27 * Cin)
    w1m = w1m.astype(jnp.bfloat16)

    # packed deconv weights per output parity: (8, Cout, 8*Cmid),
    # column = tap*Cmid + cmid with tap = td*4+th*2+tw,
    # value  = W2[cmid, cout, 3-pd-2td, 3-ph-2th, 3-pw-2tw]
    parts = []
    for pd in range(2):
        for ph in range(2):
            for pw in range(2):
                taps = []
                for td in range(2):
                    for th in range(2):
                        for tw in range(2):
                            taps.append(jnp.transpose(
                                w2[:, :, 3 - pd - 2 * td, 3 - ph - 2 * th,
                                   3 - pw - 2 * tw]))                  # (Cout, Cmid)
                parts.append(jnp.concatenate(taps, axis=1))             # (Cout, 8*Cmid)
    w2m = jnp.stack(parts, axis=0).astype(jnp.bfloat16)                 # (8, Cout, 8*Cmid)

    b1c = b1.reshape(Cmid, 1).astype(jnp.float32)
    a1c = a1.reshape(Cmid, 1).astype(jnp.float32)
    b2c = b2.reshape(Cout, 1).astype(jnp.float32)
    a2c = a2.reshape(Cout, 1).astype(jnp.float32)

    kernel = _make_kernel(Cin, Cmid, Cout, D, H, W)
    out8 = pl.pallas_call(
        kernel,
        out_shape=jax.ShapeDtypeStruct((N, 8 * Cout, S), jnp.float32),
        grid=(N,),
        in_specs=[
            pl.BlockSpec((1, Cin, S + 2 * P), lambda n: (n, 0, 0)),
            pl.BlockSpec((27, S), lambda n: (0, 0)),
            pl.BlockSpec((Cmid, 27 * Cin), lambda n: (0, 0)),
            pl.BlockSpec((Cmid, 1), lambda n: (0, 0)),
            pl.BlockSpec((Cmid, 1), lambda n: (0, 0)),
            pl.BlockSpec((8, Cout, 8 * Cmid), lambda n: (0, 0, 0)),
            pl.BlockSpec((Cout, 1), lambda n: (0, 0)),
            pl.BlockSpec((Cout, 1), lambda n: (0, 0)),
        ],
        out_specs=pl.BlockSpec((1, 8 * Cout, S), lambda n: (n, 0, 0)),
        compiler_params=pltpu.CompilerParams(dimension_semantics=("parallel",)),
    )(xf, masks, w1m, b1c, a1c, w2m, b2c, a2c)

    # parity-major (N, 8*Cout, S) -> NCDHW (N, Cout, 2D, 2H, 2W)
    out = out8.reshape(N, 2, 2, 2, Cout, D, H, W)
    out = out.transpose(0, 4, 5, 1, 6, 2, 7, 3)
    return out.reshape(N, Cout, 2 * D, 2 * H, 2 * W)


def _reference(x, w1, b1, a1, w2, b2, a2):
    # Pure-lax reference with operands quantized to bf16 to match the kernel's
    # bf16-operand / f32-accumulate MXU precision (vs a pure f32 reference the
    # kernel differs at the ~1e-2 level expected from bf16 matmuls).
    bf = lambda t: t.astype(jnp.bfloat16).astype(jnp.float32)
    dn = ('NCDHW', 'OIDHW', 'NCDHW')
    y1 = lax.conv_general_dilated(bf(x), bf(w1), (1, 1, 1), [(1, 1)] * 3,
                                  dimension_numbers=dn,
                                  precision=lax.Precision.HIGHEST)
    y1 = y1 + b1.reshape(1, -1, 1, 1, 1)
    y1 = jnp.where(y1 > 0.0, y1, a1.reshape(1, -1, 1, 1, 1) * y1)
    # ConvTranspose3d(k=4, s=2, p=1) == conv of the 2x-dilated input, padded by
    # (k-1-p)=2, with the spatially flipped, channel-transposed kernel.
    w2c = jnp.flip(w2, axis=(2, 3, 4)).transpose(1, 0, 2, 3, 4)
    y2 = lax.conv_general_dilated(bf(y1), bf(w2c), (1, 1, 1), [(2, 2)] * 3,
                                  lhs_dilation=(2, 2, 2),
                                  dimension_numbers=dn,
                                  precision=lax.Precision.HIGHEST)
    y2 = y2 + b2.reshape(1, -1, 1, 1, 1)
    return jnp.where(y2 > 0.0, y2, a2.reshape(1, -1, 1, 1, 1) * y2)


if __name__ == "__main__":
    N, Cin, Cmid, Cout = 2, 4, 8, 4
    D = H = W = 8

    key = jax.random.PRNGKey(0)
    ks = jax.random.split(key, 7)
    x = jax.random.normal(ks[0], (N, Cin, D, H, W), jnp.float32)
    w1 = jax.random.normal(ks[1], (Cmid, Cin, 3, 3, 3), jnp.float32) * 0.1
    b1 = jax.random.normal(ks[2], (Cmid,), jnp.float32) * 0.1
    a1 = 0.25 + 0.05 * jax.random.normal(ks[3], (Cmid,), jnp.float32)   # PReLU(middle)
    w2 = jax.random.normal(ks[4], (Cmid, Cout, 4, 4, 4), jnp.float32) * 0.1
    b2 = jax.random.normal(ks[5], (Cout,), jnp.float32) * 0.1
    a2 = 0.25 + 0.05 * jax.random.normal(ks[6], (Cout,), jnp.float32)   # PReLU(out)

    out = jax.block_until_ready(decoder_block_forward(x, w1, b1, a1, w2, b2, a2))
    assert out.shape == (N, Cout, 2 * D, 2 * H, 2 * W), out.shape

    ref = jax.block_until_ready(_reference(x, w1, b1, a1, w2, b2, a2))
    np.testing.assert_allclose(np.asarray(out), np.asarray(ref), rtol=2e-2, atol=2e-2)

    print("KERNEL_OK")
</pallas_src>

<mosaic_0001>
module attributes {stable_mosaic.version = 11 : i64} {
  func.func @kernel(%arg0: i32, %arg1: memref<1x4x658xbf16, #tpu.memory_space<vmem>>, %arg2: memref<27x512xbf16, #tpu.memory_space<vmem>>, %arg3: memref<8x108xbf16, #tpu.memory_space<vmem>>, %arg4: memref<8x1xf32, #tpu.memory_space<vmem>>, %arg5: memref<8x1xf32, #tpu.memory_space<vmem>>, %arg6: memref<8x4x64xbf16, #tpu.memory_space<vmem>>, %arg7: memref<4x1xf32, #tpu.memory_space<vmem>>, %arg8: memref<4x1xf32, #tpu.memory_space<vmem>>, %arg9: memref<1x32x512xf32, #tpu.memory_space<vmem>>) attributes {dimension_semantics = [#tpu.dimension_semantics<parallel>], iteration_bounds = array<i64: 2>, scalar_prefetch = 0 : i64, scratch_operands = 0 : i64, tpu.core_type = #tpu.core_type<tc>, window_params = [{transform_indices = @transform_0, window_bounds = array<i64: 1, 4, 658>}, {pipeline_mode = #tpu.pipeline_mode<synchronous>, transform_indices = @transform_1, window_bounds = array<i64: 27, 512>}, {pipeline_mode = #tpu.pipeline_mode<synchronous>, transform_indices = @transform_2, window_bounds = array<i64: 8, 108>}, {pipeline_mode = #tpu.pipeline_mode<synchronous>, transform_indices = @transform_3, window_bounds = array<i64: 8, 1>}, {pipeline_mode = #tpu.pipeline_mode<synchronous>, transform_indices = @transform_4, window_bounds = array<i64: 8, 1>}, {pipeline_mode = #tpu.pipeline_mode<synchronous>, transform_indices = @transform_5, window_bounds = array<i64: 8, 4, 64>}, {pipeline_mode = #tpu.pipeline_mode<synchronous>, transform_indices = @transform_6, window_bounds = array<i64: 4, 1>}, {pipeline_mode = #tpu.pipeline_mode<synchronous>, transform_indices = @transform_7, window_bounds = array<i64: 4, 1>}, {transform_indices = @transform_8, window_bounds = array<i64: 1, 32, 512>}]} {
    %c0 = arith.constant 0 : index
    %c0_0 = arith.constant 0 : index
    %c0_1 = arith.constant 0 : index
    %0 = vector.load %arg1[%c0, %c0_0, %c0_1] : memref<1x4x658xbf16, #tpu.memory_space<vmem>>, vector<1x4x658xbf16>
    %1 = vector.shape_cast %0 : vector<1x4x658xbf16> to vector<4x658xbf16>
    %c0_2 = arith.constant 0 : index
    %c0_3 = arith.constant 0 : index
    %2 = vector.load %arg2[%c0_2, %c0_3] : memref<27x512xbf16, #tpu.memory_space<vmem>>, vector<27x512xbf16>
    %3 = vector.extract_strided_slice %1 {offsets = [0, 0], sizes = [4, 512], strides = [1, 1]} : vector<4x658xbf16> to vector<4x512xbf16>
    %4 = vector.extract_strided_slice %2 {offsets = [0, 0], sizes = [1, 512], strides = [1, 1]} : vector<27x512xbf16> to vector<1x512xbf16>
    %5 = vector.broadcast %4 : vector<1x512xbf16> to vector<4x512xbf16>
    %6 = arith.mulf %3, %5 : vector<4x512xbf16>
    %7 = vector.extract_strided_slice %1 {offsets = [0, 1], sizes = [4, 512], strides = [1, 1]} : vector<4x658xbf16> to vector<4x512xbf16>
    %8 = vector.extract_strided_slice %2 {offsets = [1, 0], sizes = [1, 512], strides = [1, 1]} : vector<27x512xbf16> to vector<1x512xbf16>
    %9 = vector.broadcast %8 : vector<1x512xbf16> to vector<4x512xbf16>
    %10 = arith.mulf %7, %9 : vector<4x512xbf16>
    %11 = vector.extract_strided_slice %1 {offsets = [0, 2], sizes = [4, 512], strides = [1, 1]} : vector<4x658xbf16> to vector<4x512xbf16>
    %12 = vector.extract_strided_slice %2 {offsets = [2, 0], sizes = [1, 512], strides = [1, 1]} : vector<27x512xbf16> to vector<1x512xbf16>
    %13 = vector.broadcast %12 : vector<1x512xbf16> to vector<4x512xbf16>
    %14 = arith.mulf %11, %13 : vector<4x512xbf16>
    %15 = vector.extract_strided_slice %1 {offsets = [0, 8], sizes = [4, 512], strides = [1, 1]} : vector<4x658xbf16> to vector<4x512xbf16>
    %16 = vector.extract_strided_slice %2 {offsets = [3, 0], sizes = [1, 512], strides = [1, 1]} : vector<27x512xbf16> to vector<1x512xbf16>
    %17 = vector.broadcast %16 : vector<1x512xbf16> to vector<4x512xbf16>
    %18 = arith.mulf %15, %17 : vector<4x512xbf16>
    %19 = vector.extract_strided_slice %1 {offsets = [0, 9], sizes = [4, 512], strides = [1, 1]} : vector<4x658xbf16> to vector<4x512xbf16>
    %20 = vector.extract_strided_slice %2 {offsets = [4, 0], sizes = [1, 512], strides = [1, 1]} : vector<27x512xbf16> to vector<1x512xbf16>
    %21 = vector.broadcast %20 : vector<1x512xbf16> to vector<4x512xbf16>
    %22 = arith.mulf %19, %21 : vector<4x512xbf16>
    %23 = vector.extract_strided_slice %1 {offsets = [0, 10], sizes = [4, 512], strides = [1, 1]} : vector<4x658xbf16> to vector<4x512xbf16>
    %24 = vector.extract_strided_slice %2 {offsets = [5, 0], sizes = [1, 512], strides = [1, 1]} : vector<27x512xbf16> to vector<1x512xbf16>
    %25 = vector.broadcast %24 : vector<1x512xbf16> to vector<4x512xbf16>
    %26 = arith.mulf %23, %25 : vector<4x512xbf16>
    %27 = vector.extract_strided_slice %1 {offsets = [0, 16], sizes = [4, 512], strides = [1, 1]} : vector<4x658xbf16> to vector<4x512xbf16>
    %28 = vector.extract_strided_slice %2 {offsets = [6, 0], sizes = [1, 512], strides = [1, 1]} : vector<27x512xbf16> to vector<1x512xbf16>
    %29 = vector.broadcast %28 : vector<1x512xbf16> to vector<4x512xbf16>
    %30 = arith.mulf %27, %29 : vector<4x512xbf16>
    %31 = vector.extract_strided_slice %1 {offsets = [0, 17], sizes = [4, 512], strides = [1, 1]} : vector<4x658xbf16> to vector<4x512xbf16>
    %32 = vector.extract_strided_slice %2 {offsets = [7, 0], sizes = [1, 512], strides = [1, 1]} : vector<27x512xbf16> to vector<1x512xbf16>
    %33 = vector.broadcast %32 : vector<1x512xbf16> to vector<4x512xbf16>
    %34 = arith.mulf %31, %33 : vector<4x512xbf16>
    %35 = vector.extract_strided_slice %1 {offsets = [0, 18], sizes = [4, 512], strides = [1, 1]} : vector<4x658xbf16> to vector<4x512xbf16>
    %36 = vector.extract_strided_slice %2 {offsets = [8, 0], sizes = [1, 512], strides = [1, 1]} : vector<27x512xbf16> to vector<1x512xbf16>
    %37 = vector.broadcast %36 : vector<1x512xbf16> to vector<4x512xbf16>
    %38 = arith.mulf %35, %37 : vector<4x512xbf16>
    %39 = vector.extract_strided_slice %1 {offsets = [0, 64], sizes = [4, 512], strides = [1, 1]} : vector<4x658xbf16> to vector<4x512xbf16>
    %40 = vector.extract_strided_slice %2 {offsets = [9, 0], sizes = [1, 512], strides = [1, 1]} : vector<27x512xbf16> to vector<1x512xbf16>
    %41 = vector.broadcast %40 : vector<1x512xbf16> to vector<4x512xbf16>
    %42 = arith.mulf %39, %41 : vector<4x512xbf16>
    %43 = vector.extract_strided_slice %1 {offsets = [0, 65], sizes = [4, 512], strides = [1, 1]} : vector<4x658xbf16> to vector<4x512xbf16>
    %44 = vector.extract_strided_slice %2 {offsets = [10, 0], sizes = [1, 512], strides = [1, 1]} : vector<27x512xbf16> to vector<1x512xbf16>
    %45 = vector.broadcast %44 : vector<1x512xbf16> to vector<4x512xbf16>
    %46 = arith.mulf %43, %45 : vector<4x512xbf16>
    %47 = vector.extract_strided_slice %1 {offsets = [0, 66], sizes = [4, 512], strides = [1, 1]} : vector<4x658xbf16> to vector<4x512xbf16>
    %48 = vector.extract_strided_slice %2 {offsets = [11, 0], sizes = [1, 512], strides = [1, 1]} : vector<27x512xbf16> to vector<1x512xbf16>
    %49 = vector.broadcast %48 : vector<1x512xbf16> to vector<4x512xbf16>
    %50 = arith.mulf %47, %49 : vector<4x512xbf16>
    %51 = vector.extract_strided_slice %1 {offsets = [0, 72], sizes = [4, 512], strides = [1, 1]} : vector<4x658xbf16> to vector<4x512xbf16>
    %52 = vector.extract_strided_slice %2 {offsets = [12, 0], sizes = [1, 512], strides = [1, 1]} : vector<27x512xbf16> to vector<1x512xbf16>
    %53 = vector.broadcast %52 : vector<1x512xbf16> to vector<4x512xbf16>
    %54 = arith.mulf %51, %53 : vector<4x512xbf16>
    %55 = vector.extract_strided_slice %1 {offsets = [0, 73], sizes = [4, 512], strides = [1, 1]} : vector<4x658xbf16> to vector<4x512xbf16>
    %56 = vector.extract_strided_slice %2 {offsets = [13, 0], sizes = [1, 512], strides = [1, 1]} : vector<27x512xbf16> to vector<1x512xbf16>
    %57 = vector.broadcast %56 : vector<1x512xbf16> to vector<4x512xbf16>
    %58 = arith.mulf %55, %57 : vector<4x512xbf16>
    %59 = vector.extract_strided_slice %1 {offsets = [0, 74], sizes = [4, 512], strides = [1, 1]} : vector<4x658xbf16> to vector<4x512xbf16>
    %60 = vector.extract_strided_slice %2 {offsets = [14, 0], sizes = [1, 512], strides = [1, 1]} : vector<27x512xbf16> to vector<1x512xbf16>
    %61 = vector.broadcast %60 : vector<1x512xbf16> to vector<4x512xbf16>
    %62 = arith.mulf %59, %61 : vector<4x512xbf16>
    %63 = vector.extract_strided_slice %1 {offsets = [0, 80], sizes = [4, 512], strides = [1, 1]} : vector<4x658xbf16> to vector<4x512xbf16>
    %64 = vector.extract_strided_slice %2 {offsets = [15, 0], sizes = [1, 512], strides = [1, 1]} : vector<27x512xbf16> to vector<1x512xbf16>
    %65 = vector.broadcast %64 : vector<1x512xbf16> to vector<4x512xbf16>
    %66 = arith.mulf %63, %65 : vector<4x512xbf16>
    %67 = vector.extract_strided_slice %1 {offsets = [0, 81], sizes = [4, 512], strides = [1, 1]} : vector<4x658xbf16> to vector<4x512xbf16>
    %68 = vector.extract_strided_slice %2 {offsets = [16, 0], sizes = [1, 512], strides = [1, 1]} : vector<27x512xbf16> to vector<1x512xbf16>
    %69 = vector.broadcast %68 : vector<1x512xbf16> to vector<4x512xbf16>
    %70 = arith.mulf %67, %69 : vector<4x512xbf16>
    %71 = vector.extract_strided_slice %1 {offsets = [0, 82], sizes = [4, 512], strides = [1, 1]} : vector<4x658xbf16> to vector<4x512xbf16>
    %72 = vector.extract_strided_slice %2 {offsets = [17, 0], sizes = [1, 512], strides = [1, 1]} : vector<27x512xbf16> to vector<1x512xbf16>
    %73 = vector.broadcast %72 : vector<1x512xbf16> to vector<4x512xbf16>
    %74 = arith.mulf %71, %73 : vector<4x512xbf16>
    %75 = vector.extract_strided_slice %1 {offsets = [0, 128], sizes = [4, 512], strides = [1, 1]} : vector<4x658xbf16> to vector<4x512xbf16>
    %76 = vector.extract_strided_slice %2 {offsets = [18, 0], sizes = [1, 512], strides = [1, 1]} : vector<27x512xbf16> to vector<1x512xbf16>
    %77 = vector.broadcast %76 : vector<1x512xbf16> to vector<4x512xbf16>
    %78 = arith.mulf %75, %77 : vector<4x512xbf16>
    %79 = vector.extract_strided_slice %1 {offsets = [0, 129], sizes = [4, 512], strides = [1, 1]} : vector<4x658xbf16> to vector<4x512xbf16>
    %80 = vector.extract_strided_slice %2 {offsets = [19, 0], sizes = [1, 512], strides = [1, 1]} : vector<27x512xbf16> to vector<1x512xbf16>
    %81 = vector.broadcast %80 : vector<1x512xbf16> to vector<4x512xbf16>
    %82 = arith.mulf %79, %81 : vector<4x512xbf16>
    %83 = vector.extract_strided_slice %1 {offsets = [0, 130], sizes = [4, 512], strides = [1, 1]} : vector<4x658xbf16> to vector<4x512xbf16>
    %84 = vector.extract_strided_slice %2 {offsets = [20, 0], sizes = [1, 512], strides = [1, 1]} : vector<27x512xbf16> to vector<1x512xbf16>
    %85 = vector.broadcast %84 : vector<1x512xbf16> to vector<4x512xbf16>
    %86 = arith.mulf %83, %85 : vector<4x512xbf16>
    %87 = vector.extract_strided_slice %1 {offsets = [0, 136], sizes = [4, 512], strides = [1, 1]} : vector<4x658xbf16> to vector<4x512xbf16>
    %88 = vector.extract_strided_slice %2 {offsets = [21, 0], sizes = [1, 512], strides = [1, 1]} : vector<27x512xbf16> to vector<1x512xbf16>
    %89 = vector.broadcast %88 : vector<1x512xbf16> to vector<4x512xbf16>
    %90 = arith.mulf %87, %89 : vector<4x512xbf16>
    %91 = vector.extract_strided_slice %1 {offsets = [0, 137], sizes = [4, 512], strides = [1, 1]} : vector<4x658xbf16> to vector<4x512xbf16>
    %92 = vector.extract_strided_slice %2 {offsets = [22, 0], sizes = [1, 512], strides = [1, 1]} : vector<27x512xbf16> to vector<1x512xbf16>
    %93 = vector.broadcast %92 : vector<1x512xbf16> to vector<4x512xbf16>
    %94 = arith.mulf %91, %93 : vector<4x512xbf16>
    %95 = vector.extract_strided_slice %1 {offsets = [0, 138], sizes = [4, 512], strides = [1, 1]} : vector<4x658xbf16> to vector<4x512xbf16>
    %96 = vector.extract_strided_slice %2 {offsets = [23, 0], sizes = [1, 512], strides = [1, 1]} : vector<27x512xbf16> to vector<1x512xbf16>
    %97 = vector.broadcast %96 : vector<1x512xbf16> to vector<4x512xbf16>
    %98 = arith.mulf %95, %97 : vector<4x512xbf16>
    %99 = vector.extract_strided_slice %1 {offsets = [0, 144], sizes = [4, 512], strides = [1, 1]} : vector<4x658xbf16> to vector<4x512xbf16>
    %100 = vector.extract_strided_slice %2 {offsets = [24, 0], sizes = [1, 512], strides = [1, 1]} : vector<27x512xbf16> to vector<1x512xbf16>
    %101 = vector.broadcast %100 : vector<1x512xbf16> to vector<4x512xbf16>
    %102 = arith.mulf %99, %101 : vector<4x512xbf16>
    %103 = vector.extract_strided_slice %1 {offsets = [0, 145], sizes = [4, 512], strides = [1, 1]} : vector<4x658xbf16> to vector<4x512xbf16>
    %104 = vector.extract_strided_slice %2 {offsets = [25, 0], sizes = [1, 512], strides = [1, 1]} : vector<27x512xbf16> to vector<1x512xbf16>
    %105 = vector.broadcast %104 : vector<1x512xbf16> to vector<4x512xbf16>
    %106 = arith.mulf %103, %105 : vector<4x512xbf16>
    %107 = vector.extract_strided_slice %1 {offsets = [0, 146], sizes = [4, 512], strides = [1, 1]} : vector<4x658xbf16> to vector<4x512xbf16>
    %108 = vector.extract_strided_slice %2 {offsets = [26, 0], sizes = [1, 512], strides = [1, 1]} : vector<27x512xbf16> to vector<1x512xbf16>
    %109 = vector.broadcast %108 : vector<1x512xbf16> to vector<4x512xbf16>
    %110 = arith.mulf %107, %109 : vector<4x512xbf16>
    %111 = tpu.concatenate %6, %10, %14, %18, %22, %26, %30, %34, %38, %42, %46, %50, %54, %58, %62, %66 in 0 : vector<4x512xbf16>, vector<4x512xbf16>, vector<4x512xbf16>, vector<4x512xbf16>, vector<4x512xbf16>, vector<4x512xbf16>, vector<4x512xbf16>, vector<4x512xbf16>, vector<4x512xbf16>, vector<4x512xbf16>, vector<4x512xbf16>, vector<4x512xbf16>, vector<4x512xbf16>, vector<4x512xbf16>, vector<4x512xbf16>, vector<4x512xbf16> -> vector<64x512xbf16>
    %112 = tpu.concatenate %70, %74, %78, %82, %86, %90, %94, %98, %102, %106, %110 in 0 : vector<4x512xbf16>, vector<4x512xbf16>, vector<4x512xbf16>, vector<4x512xbf16>, vector<4x512xbf16>, vector<4x512xbf16>, vector<4x512xbf16>, vector<4x512xbf16>, vector<4x512xbf16>, vector<4x512xbf16>, vector<4x512xbf16> -> vector<44x512xbf16>
    %113 = tpu.concatenate %111, %112 in 0 : vector<64x512xbf16>, vector<44x512xbf16> -> vector<108x512xbf16>
    %c0_4 = arith.constant 0 : index
    %c0_5 = arith.constant 0 : index
    %114 = vector.load %arg3[%c0_4, %c0_5] : memref<8x108xbf16, #tpu.memory_space<vmem>>, vector<8x108xbf16>
    %cst = arith.constant dense<0.000000e+00> : vector<8x512xf32>
    %115 = tpu.matmul %114, %113, %cst {dimension_numbers = #tpu.dot_dimension_numbers<[1], [0], [0], [1], [0, 0, 1, 1], [], []>} : vector<8x108xbf16>, vector<108x512xbf16>, vector<8x512xf32> -> vector<8x512xf32>
    %c0_6 = arith.constant 0 : index
    %c0_7 = arith.constant 0 : index
    %116 = vector.load %arg4[%c0_6, %c0_7] : memref<8x1xf32, #tpu.memory_space<vmem>>, vector<8x1xf32>
    %117 = vector.broadcast %116 : vector<8x1xf32> to vector<8x512xf32>
    %118 = arith.addf %115, %117 : vector<8x512xf32>
    %cst_8 = arith.constant 0.000000e+00 : f32
    %119 = vector.broadcast %cst_8 : f32 to vector<8x512xf32>
    %120 = arith.cmpf ogt, %118, %119 : vector<8x512xf32>
    %c0_9 = arith.constant 0 : index
    %c0_10 = arith.constant 0 : index
    %121 = vector.load %arg5[%c0_9, %c0_10] : memref<8x1xf32, #tpu.memory_space<vmem>>, vector<8x1xf32>
    %122 = vector.broadcast %121 : vector<8x1xf32> to vector<8x512xf32>
    %123 = arith.mulf %122, %118 : vector<8x512xf32>
    %124 = arith.select %120, %118, %123 : vector<8x512xi1>, vector<8x512xf32>
    %cst_11 = arith.constant 0.000000e+00 : bf16
    %125 = vector.broadcast %cst_11 : bf16 to vector<8x73xbf16>
    %126 = arith.truncf %124 : vector<8x512xf32> to vector<8x512xbf16>
    %127 = tpu.concatenate %125, %126, %125 in 1 : vector<8x73xbf16>, vector<8x512xbf16>, vector<8x73xbf16> -> vector<8x658xbf16>
    %128 = vector.extract_strided_slice %127 {offsets = [0, 0], sizes = [8, 512], strides = [1, 1]} : vector<8x658xbf16> to vector<8x512xbf16>
    %129 = vector.extract_strided_slice %2 {offsets = [0, 0], sizes = [1, 512], strides = [1, 1]} : vector<27x512xbf16> to vector<1x512xbf16>
    %130 = vector.broadcast %129 : vector<1x512xbf16> to vector<8x512xbf16>
    %131 = arith.mulf %128, %130 : vector<8x512xbf16>
    %132 = vector.extract_strided_slice %127 {offsets = [0, 1], sizes = [8, 512], strides = [1, 1]} : vector<8x658xbf16> to vector<8x512xbf16>
    %133 = vector.extract_strided_slice %2 {offsets = [1, 0], sizes = [1, 512], strides = [1, 1]} : vector<27x512xbf16> to vector<1x512xbf16>
    %134 = vector.broadcast %133 : vector<1x512xbf16> to vector<8x512xbf16>
    %135 = arith.mulf %132, %134 : vector<8x512xbf16>
    %136 = vector.extract_strided_slice %127 {offsets = [0, 8], sizes = [8, 512], strides = [1, 1]} : vector<8x658xbf16> to vector<8x512xbf16>
    %137 = vector.extract_strided_slice %2 {offsets = [3, 0], sizes = [1, 512], strides = [1, 1]} : vector<27x512xbf16> to vector<1x512xbf16>
    %138 = vector.broadcast %137 : vector<1x512xbf16> to vector<8x512xbf16>
    %139 = arith.mulf %136, %138 : vector<8x512xbf16>
    %140 = vector.extract_strided_slice %127 {offsets = [0, 9], sizes = [8, 512], strides = [1, 1]} : vector<8x658xbf16> to vector<8x512xbf16>
    %141 = vector.extract_strided_slice %2 {offsets = [4, 0], sizes = [1, 512], strides = [1, 1]} : vector<27x512xbf16> to vector<1x512xbf16>
    %142 = vector.broadcast %141 : vector<1x512xbf16> to vector<8x512xbf16>
    %143 = arith.mulf %140, %142 : vector<8x512xbf16>
    %144 = vector.extract_strided_slice %127 {offsets = [0, 64], sizes = [8, 512], strides = [1, 1]} : vector<8x658xbf16> to vector<8x512xbf16>
    %145 = vector.extract_strided_slice %2 {offsets = [9, 0], sizes = [1, 512], strides = [1, 1]} : vector<27x512xbf16> to vector<1x512xbf16>
    %146 = vector.broadcast %145 : vector<1x512xbf16> to vector<8x512xbf16>
    %147 = arith.mulf %144, %146 : vector<8x512xbf16>
    %148 = vector.extract_strided_slice %127 {offsets = [0, 65], sizes = [8, 512], strides = [1, 1]} : vector<8x658xbf16> to vector<8x512xbf16>
    %149 = vector.extract_strided_slice %2 {offsets = [10, 0], sizes = [1, 512], strides = [1, 1]} : vector<27x512xbf16> to vector<1x512xbf16>
    %150 = vector.broadcast %149 : vector<1x512xbf16> to vector<8x512xbf16>
    %151 = arith.mulf %148, %150 : vector<8x512xbf16>
    %152 = vector.extract_strided_slice %127 {offsets = [0, 72], sizes = [8, 512], strides = [1, 1]} : vector<8x658xbf16> to vector<8x512xbf16>
    %153 = vector.extract_strided_slice %2 {offsets = [12, 0], sizes = [1, 512], strides = [1, 1]} : vector<27x512xbf16> to vector<1x512xbf16>
    %154 = vector.broadcast %153 : vector<1x512xbf16> to vector<8x512xbf16>
    %155 = arith.mulf %152, %154 : vector<8x512xbf16>
    %156 = vector.extract_strided_slice %127 {offsets = [0, 73], sizes = [8, 512], strides = [1, 1]} : vector<8x658xbf16> to vector<8x512xbf16>
    %157 = vector.extract_strided_slice %2 {offsets = [13, 0], sizes = [1, 512], strides = [1, 1]} : vector<27x512xbf16> to vector<1x512xbf16>
    %158 = vector.broadcast %157 : vector<1x512xbf16> to vector<8x512xbf16>
    %159 = arith.mulf %156, %158 : vector<8x512xbf16>
    %160 = tpu.concatenate %131, %135, %139, %143, %147, %151, %155, %159 in 0 : vector<8x512xbf16>, vector<8x512xbf16>, vector<8x512xbf16>, vector<8x512xbf16>, vector<8x512xbf16>, vector<8x512xbf16>, vector<8x512xbf16>, vector<8x512xbf16> -> vector<64x512xbf16>
    %c0_12 = arith.constant 0 : index
    %c0_13 = arith.constant 0 : index
    %c0_14 = arith.constant 0 : index
    %161 = vector.load %arg6[%c0_12, %c0_13, %c0_14] : memref<8x4x64xbf16, #tpu.memory_space<vmem>>, vector<1x4x64xbf16>
    %162 = vector.shape_cast %161 : vector<1x4x64xbf16> to vector<4x64xbf16>
    %cst_15 = arith.constant dense<0.000000e+00> : vector<4x512xf32>
    %163 = tpu.matmul %162, %160, %cst_15 {dimension_numbers = #tpu.dot_dimension_numbers<[1], [0], [0], [1], [0, 0, 1, 1], [], []>} : vector<4x64xbf16>, vector<64x512xbf16>, vector<4x512xf32> -> vector<4x512xf32>
    %c0_16 = arith.constant 0 : index
    %c0_17 = arith.constant 0 : index
    %164 = vector.load %arg7[%c0_16, %c0_17] : memref<4x1xf32, #tpu.memory_space<vmem>>, vector<4x1xf32>
    %165 = vector.broadcast %164 : vector<4x1xf32> to vector<4x512xf32>
    %166 = arith.addf %163, %165 : vector<4x512xf32>
    %cst_18 = arith.constant 0.000000e+00 : f32
    %167 = vector.broadcast %cst_18 : f32 to vector<4x512xf32>
    %168 = arith.cmpf ogt, %166, %167 : vector<4x512xf32>
    %c0_19 = arith.constant 0 : index
    %c0_20 = arith.constant 0 : index
    %169 = vector.load %arg8[%c0_19, %c0_20] : memref<4x1xf32, #tpu.memory_space<vmem>>, vector<4x1xf32>
    %170 = vector.broadcast %169 : vector<4x1xf32> to vector<4x512xf32>
    %171 = arith.mulf %170, %166 : vector<4x512xf32>
    %172 = arith.select %168, %166, %171 : vector<4x512xi1>, vector<4x512xf32>
    %173 = vector.extract_strided_slice %127 {offsets = [0, 1], sizes = [8, 512], strides = [1, 1]} : vector<8x658xbf16> to vector<8x512xbf16>
    %174 = vector.extract_strided_slice %2 {offsets = [1, 0], sizes = [1, 512], strides = [1, 1]} : vector<27x512xbf16> to vector<1x512xbf16>
    %175 = vector.broadcast %174 : vector<1x512xbf16> to vector<8x512xbf16>
    %176 = arith.mulf %173, %175 : vector<8x512xbf16>
    %177 = vector.extract_strided_slice %127 {offsets = [0, 2], sizes = [8, 512], strides = [1, 1]} : vector<8x658xbf16> to vector<8x512xbf16>
    %178 = vector.extract_strided_slice %2 {offsets = [2, 0], sizes = [1, 512], strides = [1, 1]} : vector<27x512xbf16> to vector<1x512xbf16>
    %179 = vector.broadcast %178 : vector<1x512xbf16> to vector<8x512xbf16>
    %180 = arith.mulf %177, %179 : vector<8x512xbf16>
    %181 = vector.extract_strided_slice %127 {offsets = [0, 9], sizes = [8, 512], strides = [1, 1]} : vector<8x658xbf16> to vector<8x512xbf16>
    %182 = vector.extract_strided_slice %2 {offsets = [4, 0], sizes = [1, 512], strides = [1, 1]} : vector<27x512xbf16> to vector<1x512xbf16>
    %183 = vector.broadcast %182 : vector<1x512xbf16> to vector<8x512xbf16>
    %184 = arith.mulf %181, %183 : vector<8x512xbf16>
    %185 = vector.extract_strided_slice %127 {offsets = [0, 10], sizes = [8, 512], strides = [1, 1]} : vector<8x658xbf16> to vector<8x512xbf16>
    %186 = vector.extract_strided_slice %2 {offsets = [5, 0], sizes = [1, 512], strides = [1, 1]} : vector<27x512xbf16> to vector<1x512xbf16>
    %187 = vector.broadcast %186 : vector<1x512xbf16> to vector<8x512xbf16>
    %188 = arith.mulf %185, %187 : vector<8x512xbf16>
    %189 = vector.extract_strided_slice %127 {offsets = [0, 65], sizes = [8, 512], strides = [1, 1]} : vector<8x658xbf16> to vector<8x512xbf16>
    %190 = vector.extract_strided_slice %2 {offsets = [10, 0], sizes = [1, 512], strides = [1, 1]} : vector<27x512xbf16> to vector<1x512xbf16>
    %191 = vector.broadcast %190 : vector<1x512xbf16> to vector<8x512xbf16>
    %192 = arith.mulf %189, %191 : vector<8x512xbf16>
    %193 = vector.extract_strided_slice %127 {offsets = [0, 66], sizes = [8, 512], strides = [1, 1]} : vector<8x658xbf16> to vector<8x512xbf16>
    %194 = vector.extract_strided_slice %2 {offsets = [11, 0], sizes = [1, 512], strides = [1, 1]} : vector<27x512xbf16> to vector<1x512xbf16>
    %195 = vector.broadcast %194 : vector<1x512xbf16> to vector<8x512xbf16>
    %196 = arith.mulf %193, %195 : vector<8x512xbf16>
    %197 = vector.extract_strided_slice %127 {offsets = [0, 73], sizes = [8, 512], strides = [1, 1]} : vector<8x658xbf16> to vector<8x512xbf16>
    %198 = vector.extract_strided_slice %2 {offsets = [13, 0], sizes = [1, 512], strides = [1, 1]} : vector<27x512xbf16> to vector<1x512xbf16>
    %199 = vector.broadcast %198 : vector<1x512xbf16> to vector<8x512xbf16>
    %200 = arith.mulf %197, %199 : vector<8x512xbf16>
    %201 = vector.extract_strided_slice %127 {offsets = [0, 74], sizes = [8, 512], strides = [1, 1]} : vector<8x658xbf16> to vector<8x512xbf16>
    %202 = vector.extract_strided_slice %2 {offsets = [14, 0], sizes = [1, 512], strides = [1, 1]} : vector<27x512xbf16> to vector<1x512xbf16>
    %203 = vector.broadcast %202 : vector<1x512xbf16> to vector<8x512xbf16>
    %204 = arith.mulf %201, %203 : vector<8x512xbf16>
    %205 = tpu.concatenate %176, %180, %184, %188, %192, %196, %200, %204 in 0 : vector<8x512xbf16>, vector<8x512xbf16>, vector<8x512xbf16>, vector<8x512xbf16>, vector<8x512xbf16>, vector<8x512xbf16>, vector<8x512xbf16>, vector<8x512xbf16> -> vector<64x512xbf16>
    %c1 = arith.constant 1 : index
    %c0_21 = arith.constant 0 : index
    %c0_22 = arith.constant 0 : index
    %206 = vector.load %arg6[%c1, %c0_21, %c0_22] : memref<8x4x64xbf16, #tpu.memory_space<vmem>>, vector<1x4x64xbf16>
    %207 = vector.shape_cast %206 : vector<1x4x64xbf16> to vector<4x64xbf16>
    %cst_23 = arith.constant dense<0.000000e+00> : vector<4x512xf32>
    %208 = tpu.matmul %207, %205, %cst_23 {dimension_numbers = #tpu.dot_dimension_numbers<[1], [0], [0], [1], [0, 0, 1, 1], [], []>} : vector<4x64xbf16>, vector<64x512xbf16>, vector<4x512xf32> -> vector<4x512xf32>
    %c0_24 = arith.constant 0 : index
    %c0_25 = arith.constant 0 : index
    %209 = vector.load %arg7[%c0_24, %c0_25] : memref<4x1xf32, #tpu.memory_space<vmem>>, vector<4x1xf32>
    %210 = vector.broadcast %209 : vector<4x1xf32> to vector<4x512xf32>
    %211 = arith.addf %208, %210 : vector<4x512xf32>
    %cst_26 = arith.constant 0.000000e+00 : f32
    %212 = vector.broadcast %cst_26 : f32 to vector<4x512xf32>
    %213 = arith.cmpf ogt, %211, %212 : vector<4x512xf32>
    %c0_27 = arith.constant 0 : index
    %c0_28 = arith.constant 0 : index
    %214 = vector.load %arg8[%c0_27, %c0_28] : memref<4x1xf32, #tpu.memory_space<vmem>>, vector<4x1xf32>
    %215 = vector.broadcast %214 : vector<4x1xf32> to vector<4x512xf32>
    %216 = arith.mulf %215, %211 : vector<4x512xf32>
    %217 = arith.select %213, %211, %216 : vector<4x512xi1>, vector<4x512xf32>
    %218 = vector.extract_strided_slice %127 {offsets = [0, 8], sizes = [8, 512], strides = [1, 1]} : vector<8x658xbf16> to vector<8x512xbf16>
    %219 = vector.extract_strided_slice %2 {offsets = [3, 0], sizes = [1, 512], strides = [1, 1]} : vector<27x512xbf16> to vector<1x512xbf16>
    %220 = vector.broadcast %219 : vector<1x512xbf16> to vector<8x512xbf16>
    %221 = arith.mulf %218, %220 : vector<8x512xbf16>
    %222 = vector.extract_strided_slice %127 {offsets = [0, 9], sizes = [8, 512], strides = [1, 1]} : vector<8x658xbf16> to vector<8x512xbf16>
    %223 = vector.extract_strided_slice %2 {offsets = [4, 0], sizes = [1, 512], strides = [1, 1]} : vector<27x512xbf16> to vector<1x512xbf16>
    %224 = vector.broadcast %223 : vector<1x512xbf16> to vector<8x512xbf16>
    %225 = arith.mulf %222, %224 : vector<8x512xbf16>
    %226 = vector.extract_strided_slice %127 {offsets = [0, 16], sizes = [8, 512], strides = [1, 1]} : vector<8x658xbf16> to vector<8x512xbf16>
    %227 = vector.extract_strided_slice %2 {offsets = [6, 0], sizes = [1, 512], strides = [1, 1]} : vector<27x512xbf16> to vector<1x512xbf16>
    %228 = vector.broadcast %227 : vector<1x512xbf16> to vector<8x512xbf16>
    %229 = arith.mulf %226, %228 : vector<8x512xbf16>
    %230 = vector.extract_strided_slice %127 {offsets = [0, 17], sizes = [8, 512], strides = [1, 1]} : vector<8x658xbf16> to vector<8x512xbf16>
    %231 = vector.extract_strided_slice %2 {offsets = [7, 0], sizes = [1, 512], strides = [1, 1]} : vector<27x512xbf16> to vector<1x512xbf16>
    %232 = vector.broadcast %231 : vector<1x512xbf16> to vector<8x512xbf16>
    %233 = arith.mulf %230, %232 : vector<8x512xbf16>
    %234 = vector.extract_strided_slice %127 {offsets = [0, 72], sizes = [8, 512], strides = [1, 1]} : vector<8x658xbf16> to vector<8x512xbf16>
    %235 = vector.extract_strided_slice %2 {offsets = [12, 0], sizes = [1, 512], strides = [1, 1]} : vector<27x512xbf16> to vector<1x512xbf16>
    %236 = vector.broadcast %235 : vector<1x512xbf16> to vector<8x512xbf16>
    %237 = arith.mulf %234, %236 : vector<8x512xbf16>
    %238 = vector.extract_strided_slice %127 {offsets = [0, 73], sizes = [8, 512], strides = [1, 1]} : vector<8x658xbf16> to vector<8x512xbf16>
    %239 = vector.extract_strided_slice %2 {offsets = [13, 0], sizes = [1, 512], strides = [1, 1]} : vector<27x512xbf16> to vector<1x512xbf16>
    %240 = vector.broadcast %239 : vector<1x512xbf16> to vector<8x512xbf16>
    %241 = arith.mulf %238, %240 : vector<8x512xbf16>
    %242 = vector.extract_strided_slice %127 {offsets = [0, 80], sizes = [8, 512], strides = [1, 1]} : vector<8x658xbf16> to vector<8x512xbf16>
    %243 = vector.extract_strided_slice %2 {offsets = [15, 0], sizes = [1, 512], strides = [1, 1]} : vector<27x512xbf16> to vector<1x512xbf16>
    %244 = vector.broadcast %243 : vector<1x512xbf16> to vector<8x512xbf16>
    %245 = arith.mulf %242, %244 : vector<8x512xbf16>
    %246 = vector.extract_strided_slice %127 {offsets = [0, 81], sizes = [8, 512], strides = [1, 1]} : vector<8x658xbf16> to vector<8x512xbf16>
    %247 = vector.extract_strided_slice %2 {offsets = [16, 0], sizes = [1, 512], strides = [1, 1]} : vector<27x512xbf16> to vector<1x512xbf16>
    %248 = vector.broadcast %247 : vector<1x512xbf16> to vector<8x512xbf16>
    %249 = arith.mulf %246, %248 : vector<8x512xbf16>
    %250 = tpu.concatenate %221, %225, %229, %233, %237, %241, %245, %249 in 0 : vector<8x512xbf16>, vector<8x512xbf16>, vector<8x512xbf16>, vector<8x512xbf16>, vector<8x512xbf16>, vector<8x512xbf16>, vector<8x512xbf16>, vector<8x512xbf16> -> vector<64x512xbf16>
    %c2 = arith.constant 2 : index
    %c0_29 = arith.constant 0 : index
    %c0_30 = arith.constant 0 : index
    %251 = vector.load %arg6[%c2, %c0_29, %c0_30] : memref<8x4x64xbf16, #tpu.memory_space<vmem>>, vector<1x4x64xbf16>
    %252 = vector.shape_cast %251 : vector<1x4x64xbf16> to vector<4x64xbf16>
    %cst_31 = arith.constant dense<0.000000e+00> : vector<4x512xf32>
    %253 = tpu.matmul %252, %250, %cst_31 {dimension_numbers = #tpu.dot_dimension_numbers<[1], [0], [0], [1], [0, 0, 1, 1], [], []>} : vector<4x64xbf16>, vector<64x512xbf16>, vector<4x512xf32> -> vector<4x512xf32>
    %c0_32 = arith.constant 0 : index
    %c0_33 = arith.constant 0 : index
    %254 = vector.load %arg7[%c0_32, %c0_33] : memref<4x1xf32, #tpu.memory_space<vmem>>, vector<4x1xf32>
    %255 = vector.broadcast %254 : vector<4x1xf32> to vector<4x512xf32>
    %256 = arith.addf %253, %255 : vector<4x512xf32>
    %cst_34 = arith.constant 0.000000e+00 : f32
    %257 = vector.broadcast %cst_34 : f32 to vector<4x512xf32>
    %258 = arith.cmpf ogt, %256, %257 : vector<4x512xf32>
    %c0_35 = arith.constant 0 : index
    %c0_36 = arith.constant 0 : index
    %259 = vector.load %arg8[%c0_35, %c0_36] : memref<4x1xf32, #tpu.memory_space<vmem>>, vector<4x1xf32>
    %260 = vector.broadcast %259 : vector<4x1xf32> to vector<4x512xf32>
    %261 = arith.mulf %260, %256 : vector<4x512xf32>
    %262 = arith.select %258, %256, %261 : vector<4x512xi1>, vector<4x512xf32>
    %263 = vector.extract_strided_slice %127 {offsets = [0, 9], sizes = [8, 512], strides = [1, 1]} : vector<8x658xbf16> to vector<8x512xbf16>
    %264 = vector.extract_strided_slice %2 {offsets = [4, 0], sizes = [1, 512], strides = [1, 1]} : vector<27x512xbf16> to vector<1x512xbf16>
    %265 = vector.broadcast %264 : vector<1x512xbf16> to vector<8x512xbf16>
    %266 = arith.mulf %263, %265 : vector<8x512xbf16>
    %267 = vector.extract_strided_slice %127 {offsets = [0, 10], sizes = [8, 512], strides = [1, 1]} : vector<8x658xbf16> to vector<8x512xbf16>
    %268 = vector.extract_strided_slice %2 {offsets = [5, 0], sizes = [1, 512], strides = [1, 1]} : vector<27x512xbf16> to vector<1x512xbf16>
    %269 = vector.broadcast %268 : vector<1x512xbf16> to vector<8x512xbf16>
    %270 = arith.mulf %267, %269 : vector<8x512xbf16>
    %271 = vector.extract_strided_slice %127 {offsets = [0, 17], sizes = [8, 512], strides = [1, 1]} : vector<8x658xbf16> to vector<8x512xbf16>
    %272 = vector.extract_strided_slice %2 {offsets = [7, 0], sizes = [1, 512], strides = [1, 1]} : vector<27x512xbf16> to vector<1x512xbf16>
    %273 = vector.broadcast %272 : vector<1x512xbf16> to vector<8x512xbf16>
    %274 = arith.mulf %271, %273 : vector<8x512xbf16>
    %275 = vector.extract_strided_slice %127 {offsets = [0, 18], sizes = [8, 512], strides = [1, 1]} : vector<8x658xbf16> to vector<8x512xbf16>
    %276 = vector.extract_strided_slice %2 {offsets = [8, 0], sizes = [1, 512], strides = [1, 1]} : vector<27x512xbf16> to vector<1x512xbf16>
    %277 = vector.broadcast %276 : vector<1x512xbf16> to vector<8x512xbf16>
    %278 = arith.mulf %275, %277 : vector<8x512xbf16>
    %279 = vector.extract_strided_slice %127 {offsets = [0, 73], sizes = [8, 512], strides = [1, 1]} : vector<8x658xbf16> to vector<8x512xbf16>
    %280 = vector.extract_strided_slice %2 {offsets = [13, 0], sizes = [1, 512], strides = [1, 1]} : vector<27x512xbf16> to vector<1x512xbf16>
    %281 = vector.broadcast %280 : vector<1x512xbf16> to vector<8x512xbf16>
    %282 = arith.mulf %279, %281 : vector<8x512xbf16>
    %283 = vector.extract_strided_slice %127 {offsets = [0, 74], sizes = [8, 512], strides = [1, 1]} : vector<8x658xbf16> to vector<8x512xbf16>
    %284 = vector.extract_strided_slice %2 {offsets = [14, 0], sizes = [1, 512], strides = [1, 1]} : vector<27x512xbf16> to vector<1x512xbf16>
    %285 = vector.broadcast %284 : vector<1x512xbf16> to vector<8x512xbf16>
    %286 = arith.mulf %283, %285 : vector<8x512xbf16>
    %287 = vector.extract_strided_slice %127 {offsets = [0, 81], sizes = [8, 512], strides = [1, 1]} : vector<8x658xbf16> to vector<8x512xbf16>
    %288 = vector.extract_strided_slice %2 {offsets = [16, 0], sizes = [1, 512], strides = [1, 1]} : vector<27x512xbf16> to vector<1x512xbf16>
    %289 = vector.broadcast %288 : vector<1x512xbf16> to vector<8x512xbf16>
    %290 = arith.mulf %287, %289 : vector<8x512xbf16>
    %291 = vector.extract_strided_slice %127 {offsets = [0, 82], sizes = [8, 512], strides = [1, 1]} : vector<8x658xbf16> to vector<8x512xbf16>
    %292 = vector.extract_strided_slice %2 {offsets = [17, 0], sizes = [1, 512], strides = [1, 1]} : vector<27x512xbf16> to vector<1x512xbf16>
    %293 = vector.broadcast %292 : vector<1x512xbf16> to vector<8x512xbf16>
    %294 = arith.mulf %291, %293 : vector<8x512xbf16>
    %295 = tpu.concatenate %266, %270, %274, %278, %282, %286, %290, %294 in 0 : vector<8x512xbf16>, vector<8x512xbf16>, vector<8x512xbf16>, vector<8x512xbf16>, vector<8x512xbf16>, vector<8x512xbf16>, vector<8x512xbf16>, vector<8x512xbf16> -> vector<64x512xbf16>
    %c3 = arith.constant 3 : index
    %c0_37 = arith.constant 0 : index
    %c0_38 = arith.constant 0 : index
    %296 = vector.load %arg6[%c3, %c0_37, %c0_38] : memref<8x4x64xbf16, #tpu.memory_space<vmem>>, vector<1x4x64xbf16>
    %297 = vector.shape_cast %296 : vector<1x4x64xbf16> to vector<4x64xbf16>
    %cst_39 = arith.constant dense<0.000000e+00> : vector<4x512xf32>
    %298 = tpu.matmul %297, %295, %cst_39 {dimension_numbers = #tpu.dot_dimension_numbers<[1], [0], [0], [1], [0, 0, 1, 1], [], []>} : vector<4x64xbf16>, vector<64x512xbf16>, vector<4x512xf32> -> vector<4x512xf32>
    %c0_40 = arith.constant 0 : index
    %c0_41 = arith.constant 0 : index
    %299 = vector.load %arg7[%c0_40, %c0_41] : memref<4x1xf32, #tpu.memory_space<vmem>>, vector<4x1xf32>
    %300 = vector.broadcast %299 : vector<4x1xf32> to vector<4x512xf32>
    %301 = arith.addf %298, %300 : vector<4x512xf32>
    %cst_42 = arith.constant 0.000000e+00 : f32
    %302 = vector.broadcast %cst_42 : f32 to vector<4x512xf32>
    %303 = arith.cmpf ogt, %301, %302 : vector<4x512xf32>
    %c0_43 = arith.constant 0 : index
    %c0_44 = arith.constant 0 : index
    %304 = vector.load %arg8[%c0_43, %c0_44] : memref<4x1xf32, #tpu.memory_space<vmem>>, vector<4x1xf32>
    %305 = vector.broadcast %304 : vector<4x1xf32> to vector<4x512xf32>
    %306 = arith.mulf %305, %301 : vector<4x512xf32>
    %307 = arith.select %303, %301, %306 : vector<4x512xi1>, vector<4x512xf32>
    %308 = vector.extract_strided_slice %127 {offsets = [0, 64], sizes = [8, 512], strides = [1, 1]} : vector<8x658xbf16> to vector<8x512xbf16>
    %309 = vector.extract_strided_slice %2 {offsets = [9, 0], sizes = [1, 512], strides = [1, 1]} : vector<27x512xbf16> to vector<1x512xbf16>
    %310 = vector.broadcast %309 : vector<1x512xbf16> to vector<8x512xbf16>
    %311 = arith.mulf %308, %310 : vector<8x512xbf16>
    %312 = vector.extract_strided_slice %127 {offsets = [0, 65], sizes = [8, 512], strides = [1, 1]} : vector<8x658xbf16> to vector<8x512xbf16>
    %313 = vector.extract_strided_slice %2 {offsets = [10, 0], sizes = [1, 512], strides = [1, 1]} : vector<27x512xbf16> to vector<1x512xbf16>
    %314 = vector.broadcast %313 : vector<1x512xbf16> to vector<8x512xbf16>
    %315 = arith.mulf %312, %314 : vector<8x512xbf16>
    %316 = vector.extract_strided_slice %127 {offsets = [0, 72], sizes = [8, 512], strides = [1, 1]} : vector<8x658xbf16> to vector<8x512xbf16>
    %317 = vector.extract_strided_slice %2 {offsets = [12, 0], sizes = [1, 512], strides = [1, 1]} : vector<27x512xbf16> to vector<1x512xbf16>
    %318 = vector.broadcast %317 : vector<1x512xbf16> to vector<8x512xbf16>
    %319 = arith.mulf %316, %318 : vector<8x512xbf16>
    %320 = vector.extract_strided_slice %127 {offsets = [0, 73], sizes = [8, 512], strides = [1, 1]} : vector<8x658xbf16> to vector<8x512xbf16>
    %321 = vector.extract_strided_slice %2 {offsets = [13, 0], sizes = [1, 512], strides = [1, 1]} : vector<27x512xbf16> to vector<1x512xbf16>
    %322 = vector.broadcast %321 : vector<1x512xbf16> to vector<8x512xbf16>
    %323 = arith.mulf %320, %322 : vector<8x512xbf16>
    %324 = vector.extract_strided_slice %127 {offsets = [0, 128], sizes = [8, 512], strides = [1, 1]} : vector<8x658xbf16> to vector<8x512xbf16>
    %325 = vector.extract_strided_slice %2 {offsets = [18, 0], sizes = [1, 512], strides = [1, 1]} : vector<27x512xbf16> to vector<1x512xbf16>
    %326 = vector.broadcast %325 : vector<1x512xbf16> to vector<8x512xbf16>
    %327 = arith.mulf %324, %326 : vector<8x512xbf16>
    %328 = vector.extract_strided_slice %127 {offsets = [0, 129], sizes = [8, 512], strides = [1, 1]} : vector<8x658xbf16> to vector<8x512xbf16>
    %329 = vector.extract_strided_slice %2 {offsets = [19, 0], sizes = [1, 512], strides = [1, 1]} : vector<27x512xbf16> to vector<1x512xbf16>
    %330 = vector.broadcast %329 : vector<1x512xbf16> to vector<8x512xbf16>
    %331 = arith.mulf %328, %330 : vector<8x512xbf16>
    %332 = vector.extract_strided_slice %127 {offsets = [0, 136], sizes = [8, 512], strides = [1, 1]} : vector<8x658xbf16> to vector<8x512xbf16>
    %333 = vector.extract_strided_slice %2 {offsets = [21, 0], sizes = [1, 512], strides = [1, 1]} : vector<27x512xbf16> to vector<1x512xbf16>
    %334 = vector.broadcast %333 : vector<1x512xbf16> to vector<8x512xbf16>
    %335 = arith.mulf %332, %334 : vector<8x512xbf16>
    %336 = vector.extract_strided_slice %127 {offsets = [0, 137], sizes = [8, 512], strides = [1, 1]} : vector<8x658xbf16> to vector<8x512xbf16>
    %337 = vector.extract_strided_slice %2 {offsets = [22, 0], sizes = [1, 512], strides = [1, 1]} : vector<27x512xbf16> to vector<1x512xbf16>
    %338 = vector.broadcast %337 : vector<1x512xbf16> to vector<8x512xbf16>
    %339 = arith.mulf %336, %338 : vector<8x512xbf16>
    %340 = tpu.concatenate %311, %315, %319, %323, %327, %331, %335, %339 in 0 : vector<8x512xbf16>, vector<8x512xbf16>, vector<8x512xbf16>, vector<8x512xbf16>, vector<8x512xbf16>, vector<8x512xbf16>, vector<8x512xbf16>, vector<8x512xbf16> -> vector<64x512xbf16>
    %c4 = arith.constant 4 : index
    %c0_45 = arith.constant 0 : index
    %c0_46 = arith.constant 0 : index
    %341 = vector.load %arg6[%c4, %c0_45, %c0_46] : memref<8x4x64xbf16, #tpu.memory_space<vmem>>, vector<1x4x64xbf16>
    %342 = vector.shape_cast %341 : vector<1x4x64xbf16> to vector<4x64xbf16>
    %cst_47 = arith.constant dense<0.000000e+00> : vector<4x512xf32>
    %343 = tpu.matmul %342, %340, %cst_47 {dimension_numbers = #tpu.dot_dimension_numbers<[1], [0], [0], [1], [0, 0, 1, 1], [], []>} : vector<4x64xbf16>, vector<64x512xbf16>, vector<4x512xf32> -> vector<4x512xf32>
    %c0_48 = arith.constant 0 : index
    %c0_49 = arith.constant 0 : index
    %344 = vector.load %arg7[%c0_48, %c0_49] : memref<4x1xf32, #tpu.memory_space<vmem>>, vector<4x1xf32>
    %345 = vector.broadcast %344 : vector<4x1xf32> to vector<4x512xf32>
    %346 = arith.addf %343, %345 : vector<4x512xf32>
    %cst_50 = arith.constant 0.000000e+00 : f32
    %347 = vector.broadcast %cst_50 : f32 to vector<4x512xf32>
    %348 = arith.cmpf ogt, %346, %347 : vector<4x512xf32>
    %c0_51 = arith.constant 0 : index
    %c0_52 = arith.constant 0 : index
    %349 = vector.load %arg8[%c0_51, %c0_52] : memref<4x1xf32, #tpu.memory_space<vmem>>, vector<4x1xf32>
    %350 = vector.broadcast %349 : vector<4x1xf32> to vector<4x512xf32>
    %351 = arith.mulf %350, %346 : vector<4x512xf32>
    %352 = arith.select %348, %346, %351 : vector<4x512xi1>, vector<4x512xf32>
    %353 = vector.extract_strided_slice %127 {offsets = [0, 65], sizes = [8, 512], strides = [1, 1]} : vector<8x658xbf16> to vector<8x512xbf16>
    %354 = vector.extract_strided_slice %2 {offsets = [10, 0], sizes = [1, 512], strides = [1, 1]} : vector<27x512xbf16> to vector<1x512xbf16>
    %355 = vector.broadcast %354 : vector<1x512xbf16> to vector<8x512xbf16>
    %356 = arith.mulf %353, %355 : vector<8x512xbf16>
    %357 = vector.extract_strided_slice %127 {offsets = [0, 66], sizes = [8, 512], strides = [1, 1]} : vector<8x658xbf16> to vector<8x512xbf16>
    %358 = vector.extract_strided_slice %2 {offsets = [11, 0], sizes = [1, 512], strides = [1, 1]} : vector<27x512xbf16> to vector<1x512xbf16>
    %359 = vector.broadcast %358 : vector<1x512xbf16> to vector<8x512xbf16>
    %360 = arith.mulf %357, %359 : vector<8x512xbf16>
    %361 = vector.extract_strided_slice %127 {offsets = [0, 73], sizes = [8, 512], strides = [1, 1]} : vector<8x658xbf16> to vector<8x512xbf16>
    %362 = vector.extract_strided_slice %2 {offsets = [13, 0], sizes = [1, 512], strides = [1, 1]} : vector<27x512xbf16> to vector<1x512xbf16>
    %363 = vector.broadcast %362 : vector<1x512xbf16> to vector<8x512xbf16>
    %364 = arith.mulf %361, %363 : vector<8x512xbf16>
    %365 = vector.extract_strided_slice %127 {offsets = [0, 74], sizes = [8, 512], strides = [1, 1]} : vector<8x658xbf16> to vector<8x512xbf16>
    %366 = vector.extract_strided_slice %2 {offsets = [14, 0], sizes = [1, 512], strides = [1, 1]} : vector<27x512xbf16> to vector<1x512xbf16>
    %367 = vector.broadcast %366 : vector<1x512xbf16> to vector<8x512xbf16>
    %368 = arith.mulf %365, %367 : vector<8x512xbf16>
    %369 = vector.extract_strided_slice %127 {offsets = [0, 129], sizes = [8, 512], strides = [1, 1]} : vector<8x658xbf16> to vector<8x512xbf16>
    %370 = vector.extract_strided_slice %2 {offsets = [19, 0], sizes = [1, 512], strides = [1, 1]} : vector<27x512xbf16> to vector<1x512xbf16>
    %371 = vector.broadcast %370 : vector<1x512xbf16> to vector<8x512xbf16>
    %372 = arith.mulf %369, %371 : vector<8x512xbf16>
    %373 = vector.extract_strided_slice %127 {offsets = [0, 130], sizes = [8, 512], strides = [1, 1]} : vector<8x658xbf16> to vector<8x512xbf16>
    %374 = vector.extract_strided_slice %2 {offsets = [20, 0], sizes = [1, 512], strides = [1, 1]} : vector<27x512xbf16> to vector<1x512xbf16>
    %375 = vector.broadcast %374 : vector<1x512xbf16> to vector<8x512xbf16>
    %376 = arith.mulf %373, %375 : vector<8x512xbf16>
    %377 = vector.extract_strided_slice %127 {offsets = [0, 137], sizes = [8, 512], strides = [1, 1]} : vector<8x658xbf16> to vector<8x512xbf16>
    %378 = vector.extract_strided_slice %2 {offsets = [22, 0], sizes = [1, 512], strides = [1, 1]} : vector<27x512xbf16> to vector<1x512xbf16>
    %379 = vector.broadcast %378 : vector<1x512xbf16> to vector<8x512xbf16>
    %380 = arith.mulf %377, %379 : vector<8x512xbf16>
    %381 = vector.extract_strided_slice %127 {offsets = [0, 138], sizes = [8, 512], strides = [1, 1]} : vector<8x658xbf16> to vector<8x512xbf16>
    %382 = vector.extract_strided_slice %2 {offsets = [23, 0], sizes = [1, 512], strides = [1, 1]} : vector<27x512xbf16> to vector<1x512xbf16>
    %383 = vector.broadcast %382 : vector<1x512xbf16> to vector<8x512xbf16>
    %384 = arith.mulf %381, %383 : vector<8x512xbf16>
    %385 = tpu.concatenate %356, %360, %364, %368, %372, %376, %380, %384 in 0 : vector<8x512xbf16>, vector<8x512xbf16>, vector<8x512xbf16>, vector<8x512xbf16>, vector<8x512xbf16>, vector<8x512xbf16>, vector<8x512xbf16>, vector<8x512xbf16> -> vector<64x512xbf16>
    %c5 = arith.constant 5 : index
    %c0_53 = arith.constant 0 : index
    %c0_54 = arith.constant 0 : index
    %386 = vector.load %arg6[%c5, %c0_53, %c0_54] : memref<8x4x64xbf16, #tpu.memory_space<vmem>>, vector<1x4x64xbf16>
    %387 = vector.shape_cast %386 : vector<1x4x64xbf16> to vector<4x64xbf16>
    %cst_55 = arith.constant dense<0.000000e+00> : vector<4x512xf32>
    %388 = tpu.matmul %387, %385, %cst_55 {dimension_numbers = #tpu.dot_dimension_numbers<[1], [0], [0], [1], [0, 0, 1, 1], [], []>} : vector<4x64xbf16>, vector<64x512xbf16>, vector<4x512xf32> -> vector<4x512xf32>
    %c0_56 = arith.constant 0 : index
    %c0_57 = arith.constant 0 : index
    %389 = vector.load %arg7[%c0_56, %c0_57] : memref<4x1xf32, #tpu.memory_space<vmem>>, vector<4x1xf32>
    %390 = vector.broadcast %389 : vector<4x1xf32> to vector<4x512xf32>
    %391 = arith.addf %388, %390 : vector<4x512xf32>
    %cst_58 = arith.constant 0.000000e+00 : f32
    %392 = vector.broadcast %cst_58 : f32 to vector<4x512xf32>
    %393 = arith.cmpf ogt, %391, %392 : vector<4x512xf32>
    %c0_59 = arith.constant 0 : index
    %c0_60 = arith.constant 0 : index
    %394 = vector.load %arg8[%c0_59, %c0_60] : memref<4x1xf32, #tpu.memory_space<vmem>>, vector<4x1xf32>
    %395 = vector.broadcast %394 : vector<4x1xf32> to vector<4x512xf32>
    %396 = arith.mulf %395, %391 : vector<4x512xf32>
    %397 = arith.select %393, %391, %396 : vector<4x512xi1>, vector<4x512xf32>
    %398 = vector.extract_strided_slice %127 {offsets = [0, 72], sizes = [8, 512], strides = [1, 1]} : vector<8x658xbf16> to vector<8x512xbf16>
    %399 = vector.extract_strided_slice %2 {offsets = [12, 0], sizes = [1, 512], strides = [1, 1]} : vector<27x512xbf16> to vector<1x512xbf16>
    %400 = vector.broadcast %399 : vector<1x512xbf16> to vector<8x512xbf16>
    %401 = arith.mulf %398, %400 : vector<8x512xbf16>
    %402 = vector.extract_strided_slice %127 {offsets = [0, 73], sizes = [8, 512], strides = [1, 1]} : vector<8x658xbf16> to vector<8x512xbf16>
    %403 = vector.extract_strided_slice %2 {offsets = [13, 0], sizes = [1, 512], strides = [1, 1]} : vector<27x512xbf16> to vector<1x512xbf16>
    %404 = vector.broadcast %403 : vector<1x512xbf16> to vector<8x512xbf16>
    %405 = arith.mulf %402, %404 : vector<8x512xbf16>
    %406 = vector.extract_strided_slice %127 {offsets = [0, 80], sizes = [8, 512], strides = [1, 1]} : vector<8x658xbf16> to vector<8x512xbf16>
    %407 = vector.extract_strided_slice %2 {offsets = [15, 0], sizes = [1, 512], strides = [1, 1]} : vector<27x512xbf16> to vector<1x512xbf16>
    %408 = vector.broadcast %407 : vector<1x512xbf16> to vector<8x512xbf16>
    %409 = arith.mulf %406, %408 : vector<8x512xbf16>
    %410 = vector.extract_strided_slice %127 {offsets = [0, 81], sizes = [8, 512], strides = [1, 1]} : vector<8x658xbf16> to vector<8x512xbf16>
    %411 = vector.extract_strided_slice %2 {offsets = [16, 0], sizes = [1, 512], strides = [1, 1]} : vector<27x512xbf16> to vector<1x512xbf16>
    %412 = vector.broadcast %411 : vector<1x512xbf16> to vector<8x512xbf16>
    %413 = arith.mulf %410, %412 : vector<8x512xbf16>
    %414 = vector.extract_strided_slice %127 {offsets = [0, 136], sizes = [8, 512], strides = [1, 1]} : vector<8x658xbf16> to vector<8x512xbf16>
    %415 = vector.extract_strided_slice %2 {offsets = [21, 0], sizes = [1, 512], strides = [1, 1]} : vector<27x512xbf16> to vector<1x512xbf16>
    %416 = vector.broadcast %415 : vector<1x512xbf16> to vector<8x512xbf16>
    %417 = arith.mulf %414, %416 : vector<8x512xbf16>
    %418 = vector.extract_strided_slice %127 {offsets = [0, 137], sizes = [8, 512], strides = [1, 1]} : vector<8x658xbf16> to vector<8x512xbf16>
    %419 = vector.extract_strided_slice %2 {offsets = [22, 0], sizes = [1, 512], strides = [1, 1]} : vector<27x512xbf16> to vector<1x512xbf16>
    %420 = vector.broadcast %419 : vector<1x512xbf16> to vector<8x512xbf16>
    %421 = arith.mulf %418, %420 : vector<8x512xbf16>
    %422 = vector.extract_strided_slice %127 {offsets = [0, 144], sizes = [8, 512], strides = [1, 1]} : vector<8x658xbf16> to vector<8x512xbf16>
    %423 = vector.extract_strided_slice %2 {offsets = [24, 0], sizes = [1, 512], strides = [1, 1]} : vector<27x512xbf16> to vector<1x512xbf16>
    %424 = vector.broadcast %423 : vector<1x512xbf16> to vector<8x512xbf16>
    %425 = arith.mulf %422, %424 : vector<8x512xbf16>
    %426 = vector.extract_strided_slice %127 {offsets = [0, 145], sizes = [8, 512], strides = [1, 1]} : vector<8x658xbf16> to vector<8x512xbf16>
    %427 = vector.extract_strided_slice %2 {offsets = [25, 0], sizes = [1, 512], strides = [1, 1]} : vector<27x512xbf16> to vector<1x512xbf16>
    %428 = vector.broadcast %427 : vector<1x512xbf16> to vector<8x512xbf16>
    %429 = arith.mulf %426, %428 : vector<8x512xbf16>
    %430 = tpu.concatenate %401, %405, %409, %413, %417, %421, %425, %429 in 0 : vector<8x512xbf16>, vector<8x512xbf16>, vector<8x512xbf16>, vector<8x512xbf16>, vector<8x512xbf16>, vector<8x512xbf16>, vector<8x512xbf16>, vector<8x512xbf16> -> vector<64x512xbf16>
    %c6 = arith.constant 6 : index
    %c0_61 = arith.constant 0 : index
    %c0_62 = arith.constant 0 : index
    %431 = vector.load %arg6[%c6, %c0_61, %c0_62] : memref<8x4x64xbf16, #tpu.memory_space<vmem>>, vector<1x4x64xbf16>
    %432 = vector.shape_cast %431 : vector<1x4x64xbf16> to vector<4x64xbf16>
    %cst_63 = arith.constant dense<0.000000e+00> : vector<4x512xf32>
    %433 = tpu.matmul %432, %430, %cst_63 {dimension_numbers = #tpu.dot_dimension_numbers<[1], [0], [0], [1], [0, 0, 1, 1], [], []>} : vector<4x64xbf16>, vector<64x512xbf16>, vector<4x512xf32> -> vector<4x512xf32>
    %c0_64 = arith.constant 0 : index
    %c0_65 = arith.constant 0 : index
    %434 = vector.load %arg7[%c0_64, %c0_65] : memref<4x1xf32, #tpu.memory_space<vmem>>, vector<4x1xf32>
    %435 = vector.broadcast %434 : vector<4x1xf32> to vector<4x512xf32>
    %436 = arith.addf %433, %435 : vector<4x512xf32>
    %cst_66 = arith.constant 0.000000e+00 : f32
    %437 = vector.broadcast %cst_66 : f32 to vector<4x512xf32>
    %438 = arith.cmpf ogt, %436, %437 : vector<4x512xf32>
    %c0_67 = arith.constant 0 : index
    %c0_68 = arith.constant 0 : index
    %439 = vector.load %arg8[%c0_67, %c0_68] : memref<4x1xf32, #tpu.memory_space<vmem>>, vector<4x1xf32>
    %440 = vector.broadcast %439 : vector<4x1xf32> to vector<4x512xf32>
    %441 = arith.mulf %440, %436 : vector<4x512xf32>
    %442 = arith.select %438, %436, %441 : vector<4x512xi1>, vector<4x512xf32>
    %443 = vector.extract_strided_slice %127 {offsets = [0, 73], sizes = [8, 512], strides = [1, 1]} : vector<8x658xbf16> to vector<8x512xbf16>
    %444 = vector.extract_strided_slice %2 {offsets = [13, 0], sizes = [1, 512], strides = [1, 1]} : vector<27x512xbf16> to vector<1x512xbf16>
    %445 = vector.broadcast %444 : vector<1x512xbf16> to vector<8x512xbf16>
    %446 = arith.mulf %443, %445 : vector<8x512xbf16>
    %447 = vector.extract_strided_slice %127 {offsets = [0, 74], sizes = [8, 512], strides = [1, 1]} : vector<8x658xbf16> to vector<8x512xbf16>
    %448 = vector.extract_strided_slice %2 {offsets = [14, 0], sizes = [1, 512], strides = [1, 1]} : vector<27x512xbf16> to vector<1x512xbf16>
    %449 = vector.broadcast %448 : vector<1x512xbf16> to vector<8x512xbf16>
    %450 = arith.mulf %447, %449 : vector<8x512xbf16>
    %451 = vector.extract_strided_slice %127 {offsets = [0, 81], sizes = [8, 512], strides = [1, 1]} : vector<8x658xbf16> to vector<8x512xbf16>
    %452 = vector.extract_strided_slice %2 {offsets = [16, 0], sizes = [1, 512], strides = [1, 1]} : vector<27x512xbf16> to vector<1x512xbf16>
    %453 = vector.broadcast %452 : vector<1x512xbf16> to vector<8x512xbf16>
    %454 = arith.mulf %451, %453 : vector<8x512xbf16>
    %455 = vector.extract_strided_slice %127 {offsets = [0, 82], sizes = [8, 512], strides = [1, 1]} : vector<8x658xbf16> to vector<8x512xbf16>
    %456 = vector.extract_strided_slice %2 {offsets = [17, 0], sizes = [1, 512], strides = [1, 1]} : vector<27x512xbf16> to vector<1x512xbf16>
    %457 = vector.broadcast %456 : vector<1x512xbf16> to vector<8x512xbf16>
    %458 = arith.mulf %455, %457 : vector<8x512xbf16>
    %459 = vector.extract_strided_slice %127 {offsets = [0, 137], sizes = [8, 512], strides = [1, 1]} : vector<8x658xbf16> to vector<8x512xbf16>
    %460 = vector.extract_strided_slice %2 {offsets = [22, 0], sizes = [1, 512], strides = [1, 1]} : vector<27x512xbf16> to vector<1x512xbf16>
    %461 = vector.broadcast %460 : vector<1x512xbf16> to vector<8x512xbf16>
    %462 = arith.mulf %459, %461 : vector<8x512xbf16>
    %463 = vector.extract_strided_slice %127 {offsets = [0, 138], sizes = [8, 512], strides = [1, 1]} : vector<8x658xbf16> to vector<8x512xbf16>
    %464 = vector.extract_strided_slice %2 {offsets = [23, 0], sizes = [1, 512], strides = [1, 1]} : vector<27x512xbf16> to vector<1x512xbf16>
    %465 = vector.broadcast %464 : vector<1x512xbf16> to vector<8x512xbf16>
    %466 = arith.mulf %463, %465 : vector<8x512xbf16>
    %467 = vector.extract_strided_slice %127 {offsets = [0, 145], sizes = [8, 512], strides = [1, 1]} : vector<8x658xbf16> to vector<8x512xbf16>
    %468 = vector.extract_strided_slice %2 {offsets = [25, 0], sizes = [1, 512], strides = [1, 1]} : vector<27x512xbf16> to vector<1x512xbf16>
    %469 = vector.broadcast %468 : vector<1x512xbf16> to vector<8x512xbf16>
    %470 = arith.mulf %467, %469 : vector<8x512xbf16>
    %471 = vector.extract_strided_slice %127 {offsets = [0, 146], sizes = [8, 512], strides = [1, 1]} : vector<8x658xbf16> to vector<8x512xbf16>
    %472 = vector.extract_strided_slice %2 {offsets = [26, 0], sizes = [1, 512], strides = [1, 1]} : vector<27x512xbf16> to vector<1x512xbf16>
    %473 = vector.broadcast %472 : vector<1x512xbf16> to vector<8x512xbf16>
    %474 = arith.mulf %471, %473 : vector<8x512xbf16>
    %475 = tpu.concatenate %446, %450, %454, %458, %462, %466, %470, %474 in 0 : vector<8x512xbf16>, vector<8x512xbf16>, vector<8x512xbf16>, vector<8x512xbf16>, vector<8x512xbf16>, vector<8x512xbf16>, vector<8x512xbf16>, vector<8x512xbf16> -> vector<64x512xbf16>
    %c7 = arith.constant 7 : index
    %c0_69 = arith.constant 0 : index
    %c0_70 = arith.constant 0 : index
    %476 = vector.load %arg6[%c7, %c0_69, %c0_70] : memref<8x4x64xbf16, #tpu.memory_space<vmem>>, vector<1x4x64xbf16>
    %477 = vector.shape_cast %476 : vector<1x4x64xbf16> to vector<4x64xbf16>
    %cst_71 = arith.constant dense<0.000000e+00> : vector<4x512xf32>
    %478 = tpu.matmul %477, %475, %cst_71 {dimension_numbers = #tpu.dot_dimension_numbers<[1], [0], [0], [1], [0, 0, 1, 1], [], []>} : vector<4x64xbf16>, vector<64x512xbf16>, vector<4x512xf32> -> vector<4x512xf32>
    %c0_72 = arith.constant 0 : index
    %c0_73 = arith.constant 0 : index
    %479 = vector.load %arg7[%c0_72, %c0_73] : memref<4x1xf32, #tpu.memory_space<vmem>>, vector<4x1xf32>
    %480 = vector.broadcast %479 : vector<4x1xf32> to vector<4x512xf32>
    %481 = arith.addf %478, %480 : vector<4x512xf32>
    %cst_74 = arith.constant 0.000000e+00 : f32
    %482 = vector.broadcast %cst_74 : f32 to vector<4x512xf32>
    %483 = arith.cmpf ogt, %481, %482 : vector<4x512xf32>
    %c0_75 = arith.constant 0 : index
    %c0_76 = arith.constant 0 : index
    %484 = vector.load %arg8[%c0_75, %c0_76] : memref<4x1xf32, #tpu.memory_space<vmem>>, vector<4x1xf32>
    %485 = vector.broadcast %484 : vector<4x1xf32> to vector<4x512xf32>
    %486 = arith.mulf %485, %481 : vector<4x512xf32>
    %487 = arith.select %483, %481, %486 : vector<4x512xi1>, vector<4x512xf32>
    %488 = tpu.concatenate %172, %217, %262, %307, %352, %397, %442, %487 in 0 : vector<4x512xf32>, vector<4x512xf32>, vector<4x512xf32>, vector<4x512xf32>, vector<4x512xf32>, vector<4x512xf32>, vector<4x512xf32>, vector<4x512xf32> -> vector<32x512xf32>
    %c0_77 = arith.constant 0 : index
    %c0_78 = arith.constant 0 : index
    %c0_79 = arith.constant 0 : index
    %489 = vector.load %arg9[%c0_77, %c0_78, %c0_79] : memref<1x32x512xf32, #tpu.memory_space<vmem>>, vector<1x32x512xf32>
    %490 = vector.shape_cast %489 : vector<1x32x512xf32> to vector<32x512xf32>
    %491 = vector.shape_cast %488 : vector<32x512xf32> to vector<1x32x512xf32>
    tpu.vector_store %arg9[%c0_77, %c0_78, %c0_79], %491 {strides = array<i32>} : memref<1x32x512xf32, #tpu.memory_space<vmem>>, vector<1x32x512xf32>,
    return
  }
  func.func @transform_0(%arg0: i32) -> (i32, i32, i32) {
    %c0_i32 = arith.constant 0 : i32
    %c0_i32_0 = arith.constant 0 : i32
    %c0_i32_1 = arith.constant 0 : i32
    return %arg0, %c0_i32, %c0_i32_0 : i32, i32, i32
  }
  func.func @transform_1(%arg0: i32) -> (i32, i32) {
    %c0_i32 = arith.constant 0 : i32
    %c0_i32_0 = arith.constant 0 : i32
    %c0_i32_1 = arith.constant 0 : i32
    return %c0_i32, %c0_i32_0 : i32, i32
  }
  func.func @transform_2(%arg0: i32) -> (i32, i32) {
    %c0_i32 = arith.constant 0 : i32
    %c0_i32_0 = arith.constant 0 : i32
    %c0_i32_1 = arith.constant 0 : i32
    return %c0_i32, %c0_i32_0 : i32, i32
  }
  func.func @transform_3(%arg0: i32) -> (i32, i32) {
    %c0_i32 = arith.constant 0 : i32
    %c0_i32_0 = arith.constant 0 : i32
    %c0_i32_1 = arith.constant 0 : i32
    return %c0_i32, %c0_i32_0 : i32, i32
  }
  func.func @transform_4(%arg0: i32) -> (i32, i32) {
    %c0_i32 = arith.constant 0 : i32
    %c0_i32_0 = arith.constant 0 : i32
    %c0_i32_1 = arith.constant 0 : i32
    return %c0_i32, %c0_i32_0 : i32, i32
  }
  func.func @transform_5(%arg0: i32) -> (i32, i32, i32) {
    %c0_i32 = arith.constant 0 : i32
    %c0_i32_0 = arith.constant 0 : i32
    %c0_i32_1 = arith.constant 0 : i32
    %c0_i32_2 = arith.constant 0 : i32
    return %c0_i32, %c0_i32_0, %c0_i32_1 : i32, i32, i32
  }
  func.func @transform_6(%arg0: i32) -> (i32, i32) {
    %c0_i32 = arith.constant 0 : i32
    %c0_i32_0 = arith.constant 0 : i32
    %c0_i32_1 = arith.constant 0 : i32
    return %c0_i32, %c0_i32_0 : i32, i32
  }
  func.func @transform_7(%arg0: i32) -> (i32, i32) {
    %c0_i32 = arith.constant 0 : i32
    %c0_i32_0 = arith.constant 0 : i32
    %c0_i32_1 = arith.constant 0 : i32
    return %c0_i32, %c0_i32_0 : i32, i32
  }
  func.func @transform_8(%arg0: i32) -> (i32, i32, i32) {
    %c0_i32 = arith.constant 0 : i32
    %c0_i32_0 = arith.constant 0 : i32
    %c0_i32_1 = arith.constant 0 : i32
    return %arg0, %c0_i32, %c0_i32_0 : i32, i32, i32
  }
}

</mosaic_0001>

<llo_original>
// kernel: decoder_block_forward.1
$region0: #{decoder_block_forward.1}
  #allocation0 [shape = 'u32[]', space=smem, size = 0x4, offset = 0x4, fixed_abs, tag = 'smem constant byte address 0x4 - core index']
  #allocation1 [shape = 'u32[72,128]{1,0:T(1,128)}', space=vmem, size = 0x9000, scoped, tag = 'internal scratch']
  %s0 = inlined_call_operand.vmem [shape: bf16[2,4,658], index: 0, kind: input, shape index: {}]
  %s1 = inlined_call_operand.hbm [shape: bf16[27,512], index: 1, kind: input, shape index: {}]
  %s2 = inlined_call_operand.vmem [shape: bf16[8,108], index: 2, kind: input, shape index: {}]
  %s3 = inlined_call_operand.vmem [shape: f32[8,1], index: 3, kind: input, shape index: {}]
  %s4 = inlined_call_operand.vmem [shape: f32[8,1], index: 4, kind: input, shape index: {}]
  %s5 = inlined_call_operand.vmem [shape: bf16[8,4,64], index: 5, kind: input, shape index: {}]
  %s6 = inlined_call_operand.vmem [shape: f32[4,1], index: 6, kind: input, shape index: {}]
  %s7 = inlined_call_operand.vmem [shape: f32[4,1], index: 7, kind: input, shape index: {}]
  %s8 = inlined_call_operand.vmem [shape: f32[2,32,512], index: 8, kind: output, shape index: {}]
  %s9 = sld [smem:[#allocation0]]
  $region69: #{decoder_block_forward.1} parent=0
    _
  %s11 = ssub.s32 1, %s9
  %s12 = scalar_select 0, %s11, %s9
  $region1: #{decoder_block_forward.1} parent=0
    #allocation2 [shape = 'u8[32768]{0}', space=vmem, size = 0x8000, scoped, tag = 'input window, operand 1, single buffered']
    #allocation3 [shape = 's32[2]{0}', space=sflag, size = 0x8, scoped, tag = 'scoped memory for decoder_block_forward.1']
    %13 = vsyncpa [#allocation3], 0
    loop: start=0, step=1, limit=4
    $region2: #{decoder_block_forward.1} parent=1 // loop_pre_header
      _
    $region3: #{decoder_block_forward.1} parent=1 // loop_header
      %s15 = sphi 0, %s19
      %p16 = scmp.ge.s32.totalorder %s15, 4
      %s25 = sphi 0, %s27
      %s28 = sphi 0, %s25
      %s29 = sphi 0, %s28
      %s45 = sphi 0, %s29
      %s49 = sphi 0, %s49
      %s51 = sphi 0, %s49
      %s52 = sphi 0, %s51
      %s66 = sphi 0, %s52
      %s70 = sphi 0, %s70
      %s72 = sphi 0, %s70
      %s73 = sphi 0, %s72
      %s87 = sphi 0, %s73
      %s91 = sphi 0, %s91
      %s93 = sphi 0, %s91
      %s94 = sphi 0, %s93
      %s108 = sphi 0, %s94
      %s112 = sphi 0, %s112
      %s114 = sphi 0, %s112
      %s115 = sphi 0, %s114
      %s129 = sphi 0, %s115
      %s133 = sphi 0, %s133
      %s135 = sphi 0, %s133
      %s136 = sphi 0, %s135
      %s150 = sphi 0, %s136
      %s154 = sphi 0, %s154
      %s156 = sphi 0, %s154
      %s157 = sphi 0, %s156
      %s171 = sphi 0, %s157
      %s175 = sphi 0, %s175
      %s177 = sphi 0, %s175
      %s178 = sphi 0, %s177
      %s192 = sphi 0, %s178
      %s198 = sphi 0, %s200
      %s201 = sphi 0, %s198
      %s202 = sphi 0, %s201
      %s218 = sphi 0, %s202
    $region4: #{decoder_block_forward.1} parent=1 // loop_header_branch
      %18 = sbr.rel (%p16) target = $region8
    $region5: #{decoder_block_forward.1} parent=1 // loop_body
      %s20 = ssub.s32 %s15, 1
      %s21 = ssub.s32 %s15, 2
      %s22 = sadd.s32 %s15, 1
      %s23 = ssub.s32 %s15, %s22
      %p24 = scmp.eq.s32.totalorder %s23, 0
      %s26 = sadd.s32 %s25, 1
      %s27 = scalar_select %p24, %s25, %s26
      %p30 = pneg %p24
      %p31 = scmp.eq.s32.totalorder %s15, 1
      %p32 = por %p30, %p31
      %p33 = scmp.ne.s32.totalorder %s25, %s28
      %p34 = scmp.eq.s32.totalorder %s15, 0
      %p35 = por %p33, %p34
      %p36 = scmp.ne.s32.totalorder %s25, %s28
      %p37 = scmp.eq.s32.totalorder %s20, 1
      %p38 = por %p36, %p37
      %p39 = scmp.ne.s32.totalorder %s28, %s29
      %p40 = scmp.eq.s32.totalorder %s20, 0
      %p41 = por %p39, %p40
      %p42 = scmp.ne.s32.totalorder %s28, %s29
      %p43 = scmp.eq.s32.totalorder %s21, 1
      %p44 = por %p42, %p43
      %p46 = scmp.ne.s32.totalorder %s29, %s45
      %p47 = scmp.eq.s32.totalorder %s21, 0
      %p48 = por %p46, %p47
      %s50 = sadd.s32 %s49, 1
      %p53 = scmp.eq.s32.totalorder %s15, 1
      %p54 = scmp.ne.s32.totalorder %s49, %s51
      %p55 = scmp.eq.s32.totalorder %s15, 0
      %p56 = por %p54, %p55
      %p57 = scmp.ne.s32.totalorder %s49, %s51
      %p58 = scmp.eq.s32.totalorder %s20, 1
      %p59 = por %p57, %p58
      %p60 = scmp.ne.s32.totalorder %s51, %s52
      %p61 = scmp.eq.s32.totalorder %s20, 0
      %p62 = por %p60, %p61
      %p63 = scmp.ne.s32.totalorder %s51, %s52
      %p64 = scmp.eq.s32.totalorder %s21, 1
      %p65 = por %p63, %p64
      %p67 = scmp.ne.s32.totalorder %s52, %s66
      %p68 = scmp.eq.s32.totalorder %s21, 0
      %p69 = por %p67, %p68
      %s71 = sadd.s32 %s70, 1
      %p74 = scmp.eq.s32.totalorder %s15, 1
      %p75 = scmp.ne.s32.totalorder %s70, %s72
      %p76 = scmp.eq.s32.totalorder %s15, 0
      %p77 = por %p75, %p76
      %p78 = scmp.ne.s32.totalorder %s70, %s72
      %p79 = scmp.eq.s32.totalorder %s20, 1
      %p80 = por %p78, %p79
      %p81 = scmp.ne.s32.totalorder %s72, %s73
      %p82 = scmp.eq.s32.totalorder %s20, 0
      %p83 = por %p81, %p82
      %p84 = scmp.ne.s32.totalorder %s72, %s73
      %p85 = scmp.eq.s32.totalorder %s21, 1
      %p86 = por %p84, %p85
      %p88 = scmp.ne.s32.totalorder %s73, %s87
      %p89 = scmp.eq.s32.totalorder %s21, 0
      %p90 = por %p88, %p89
      %s92 = sadd.s32 %s91, 1
      %p95 = scmp.eq.s32.totalorder %s15, 1
      %p96 = scmp.ne.s32.totalorder %s91, %s93
      %p97 = scmp.eq.s32.totalorder %s15, 0
      %p98 = por %p96, %p97
      %p99 = scmp.ne.s32.totalorder %s91, %s93
      %p100 = scmp.eq.s32.totalorder %s20, 1
      %p101 = por %p99, %p100
      %p102 = scmp.ne.s32.totalorder %s93, %s94
      %p103 = scmp.eq.s32.totalorder %s20, 0
      %p104 = por %p102, %p103
      %p105 = scmp.ne.s32.totalorder %s93, %s94
      %p106 = scmp.eq.s32.totalorder %s21, 1
      %p107 = por %p105, %p106
      %p109 = scmp.ne.s32.totalorder %s94, %s108
      %p110 = scmp.eq.s32.totalorder %s21, 0
      %p111 = por %p109, %p110
      %s113 = sadd.s32 %s112, 1
      %p116 = scmp.eq.s32.totalorder %s15, 1
      %p117 = scmp.ne.s32.totalorder %s112, %s114
      %p118 = scmp.eq.s32.totalorder %s15, 0
      %p119 = por %p117, %p118
      %p120 = scmp.ne.s32.totalorder %s112, %s114
      %p121 = scmp.eq.s32.totalorder %s20, 1
      %p122 = por %p120, %p121
      %p123 = scmp.ne.s32.totalorder %s114, %s115
      %p124 = scmp.eq.s32.totalorder %s20, 0
      %p125 = por %p123, %p124
      %p126 = scmp.ne.s32.totalorder %s114, %s115
      %p127 = scmp.eq.s32.totalorder %s21, 1
      %p128 = por %p126, %p127
      %p130 = scmp.ne.s32.totalorder %s115, %s129
      %p131 = scmp.eq.s32.totalorder %s21, 0
      %p132 = por %p130, %p131
      %s134 = sadd.s32 %s133, 1
      %p137 = scmp.eq.s32.totalorder %s15, 1
      %p138 = scmp.ne.s32.totalorder %s133, %s135
      %p139 = scmp.eq.s32.totalorder %s15, 0
      %p140 = por %p138, %p139
      %p141 = scmp.ne.s32.totalorder %s133, %s135
      %p142 = scmp.eq.s32.totalorder %s20, 1
      %p143 = por %p141, %p142
      %p144 = scmp.ne.s32.totalorder %s135, %s136
      %p145 = scmp.eq.s32.totalorder %s20, 0
      %p146 = por %p144, %p145
      %p147 = scmp.ne.s32.totalorder %s135, %s136
      %p148 = scmp.eq.s32.totalorder %s21, 1
      %p149 = por %p147, %p148
      %p151 = scmp.ne.s32.totalorder %s136, %s150
      %p152 = scmp.eq.s32.totalorder %s21, 0
      %p153 = por %p151, %p152
      %s155 = sadd.s32 %s154, 1
      %p158 = scmp.eq.s32.totalorder %s15, 1
      %p159 = scmp.ne.s32.totalorder %s154, %s156
      %p160 = scmp.eq.s32.totalorder %s15, 0
      %p161 = por %p159, %p160
      %p162 = scmp.ne.s32.totalorder %s154, %s156
      %p163 = scmp.eq.s32.totalorder %s20, 1
      %p164 = por %p162, %p163
      %p165 = scmp.ne.s32.totalorder %s156, %s157
      %p166 = scmp.eq.s32.totalorder %s20, 0
      %p167 = por %p165, %p166
      %p168 = scmp.ne.s32.totalorder %s156, %s157
      %p169 = scmp.eq.s32.totalorder %s21, 1
      %p170 = por %p168, %p169
      %p172 = scmp.ne.s32.totalorder %s157, %s171
      %p173 = scmp.eq.s32.totalorder %s21, 0
      %p174 = por %p172, %p173
      %s176 = sadd.s32 %s175, 1
      %p179 = scmp.eq.s32.totalorder %s15, 1
      %p180 = scmp.ne.s32.totalorder %s175, %s177
      %p181 = scmp.eq.s32.totalorder %s15, 0
      %p182 = por %p180, %p181
      %p183 = scmp.ne.s32.totalorder %s175, %s177
      %p184 = scmp.eq.s32.totalorder %s20, 1
      %p185 = por %p183, %p184
      %p186 = scmp.ne.s32.totalorder %s177, %s178
      %p187 = scmp.eq.s32.totalorder %s20, 0
      %p188 = por %p186, %p187
      %p189 = scmp.ne.s32.totalorder %s177, %s178
      %p190 = scmp.eq.s32.totalorder %s21, 1
      %p191 = por %p189, %p190
      %p193 = scmp.ne.s32.totalorder %s178, %s192
      %p194 = scmp.eq.s32.totalorder %s21, 0
      %p195 = por %p193, %p194
      %s196 = ssub.s32 %s15, %s22
      %p197 = scmp.eq.s32.totalorder %s196, 0
      %s199 = sadd.s32 %s198, 1
      %s200 = scalar_select %p197, %s198, %s199
      %p203 = pneg %p197
      %p204 = scmp.eq.s32.totalorder %s15, 1
      %p205 = por %p203, %p204
      %p206 = scmp.ne.s32.totalorder %s198, %s201
      %p207 = scmp.eq.s32.totalorder %s15, 0
      %p208 = por %p206, %p207
      %p209 = scmp.ne.s32.totalorder %s198, %s201
      %p210 = scmp.eq.s32.totalorder %s20, 1
      %p211 = por %p209, %p210
      %p212 = scmp.ne.s32.totalorder %s201, %s202
      %p213 = scmp.eq.s32.totalorder %s20, 0
      %p214 = por %p212, %p213
      %p215 = scmp.ne.s32.totalorder %s201, %s202
      %p216 = scmp.eq.s32.totalorder %s21, 1
      %p217 = por %p215, %p216
      %p219 = scmp.ne.s32.totalorder %s202, %s218
      %p220 = scmp.eq.s32.totalorder %s21, 0
      %p221 = por %p219, %p220
      %p222 = scmp.le.s32.totalorder 1, %s15
      %p223 = scmp.lt.s32.totalorder %s15, 3
      %p224 = pnand %p222, %p223
      %p225 = pneg %p224
      // Predicated region
      $region9: #{decoder_block_forward.1} parent=5 // pred_check
        _
      $region10: #{decoder_block_forward.1} parent=5 // pred_check_branch
        %227 = sbr.rel (%p224) target = $region12
      $region11: #{decoder_block_forward.1} parent=5 // pred_region
        %s228 = ssub.s32 %s15, 1
        // Predicated region
        $region13: #{decoder_block_forward.1} parent=11 // pred_check
          %p229 = pneg %p62
        $region14: #{decoder_block_forward.1} parent=11 // pred_check_branch
          %231 = sbr.rel (%p229) target = $region16
        $region15: #{decoder_block_forward.1} parent=11 // pred_region
          %233 = vsyncadd [#allocation3], 0
          %s234 = sshll.u32 %s1, 4
          %s235 = int_to_ptr.hbm [resolvable:$true] %s234
          %s236 = sshll.u32 [#allocation2], 4
          %s237 = int_to_ptr.vmem [resolvable:$true] %s236
          %242 = dma.hbm_to_vmem [thread:$0]  %s235, 1024, %s237, [#allocation3], 256, 256, 16
        $region16: #{decoder_block_forward.1} parent=11 // pred_fallthru
          _
        // Predicated region
        $region17: #{decoder_block_forward.1} parent=11 // pred_check
          %p243 = pneg %p83
        $region18: #{decoder_block_forward.1} parent=11 // pred_check_branch
          %245 = sbr.rel (%p243) target = $region20
        $region19: #{decoder_block_forward.1} parent=11 // pred_region
          _
        $region20: #{decoder_block_forward.1} parent=11 // pred_fallthru
          _
        // Predicated region
        $region21: #{decoder_block_forward.1} parent=11 // pred_check
          %p246 = pneg %p104
        $region22: #{decoder_block_forward.1} parent=11 // pred_check_branch
          %248 = sbr.rel (%p246) target = $region24
        $region23: #{decoder_block_forward.1} parent=11 // pred_region
          _
        $region24: #{decoder_block_forward.1} parent=11 // pred_fallthru
          _
        // Predicated region
        $region25: #{decoder_block_forward.1} parent=11 // pred_check
          %p249 = pneg %p125
        $region26: #{decoder_block_forward.1} parent=11 // pred_check_branch
          %251 = sbr.rel (%p249) target = $region28
        $region27: #{decoder_block_forward.1} parent=11 // pred_region
          _
        $region28: #{decoder_block_forward.1} parent=11 // pred_fallthru
          _
        // Predicated region
        $region29: #{decoder_block_forward.1} parent=11 // pred_check
          %p252 = pneg %p146
        $region30: #{decoder_block_forward.1} parent=11 // pred_check_branch
          %254 = sbr.rel (%p252) target = $region32
        $region31: #{decoder_block_forward.1} parent=11 // pred_region
          _
        $region32: #{decoder_block_forward.1} parent=11 // pred_fallthru
          _
        // Predicated region
        $region33: #{decoder_block_forward.1} parent=11 // pred_check
          %p255 = pneg %p167
        $region34: #{decoder_block_forward.1} parent=11 // pred_check_branch
          %257 = sbr.rel (%p255) target = $region36
        $region35: #{decoder_block_forward.1} parent=11 // pred_region
          _
        $region36: #{decoder_block_forward.1} parent=11 // pred_fallthru
          _
        // Predicated region
        $region37: #{decoder_block_forward.1} parent=11 // pred_check
          %p258 = pneg %p188
        $region38: #{decoder_block_forward.1} parent=11 // pred_check_branch
          %260 = sbr.rel (%p258) target = $region40
        $region39: #{decoder_block_forward.1} parent=11 // pred_region
          _
        $region40: #{decoder_block_forward.1} parent=11 // pred_fallthru
          _
      $region12: #{decoder_block_forward.1} parent=5 // pred_fallthru
        _
      %p261 = scmp.lt.s32.totalorder %s15, 2
      // Predicated region
      $region41: #{decoder_block_forward.1} parent=5 // pred_check
        %p262 = pneg %p261
      $region42: #{decoder_block_forward.1} parent=5 // pred_check_branch
        %264 = sbr.rel (%p262) target = $region44
      $region43: #{decoder_block_forward.1} parent=5 // pred_region
        // Predicated region
        $region45: #{decoder_block_forward.1} parent=43 // pred_check
          %p265 = pneg %p35
        $region46: #{decoder_block_forward.1} parent=43 // pred_check_branch
          %267 = sbr.rel (%p265) target = $region48
        $region47: #{decoder_block_forward.1} parent=43 // pred_region
          %p268 = scmp.lt.s32.totalorder %s15, 1
          %s269 = scalar_select %p268, %s15, 1
          %s270 = smul.addr %s269, 6
          %s271 = smul.addr %s270, 2
          %s272 = scalar_lea.vmem %s0, %s271
        $region48: #{decoder_block_forward.1} parent=43 // pred_fallthru
          _
      $region44: #{decoder_block_forward.1} parent=5 // pred_fallthru
        _
      %p273 = scmp.le.s32.totalorder 1, %s15
      %p274 = scmp.lt.s32.totalorder %s15, 3
      %p275 = pnand %p273, %p274
      %p276 = pneg %p275
      // Predicated region
      $region49: #{decoder_block_forward.1} parent=5 // pred_check
        _
      $region50: #{decoder_block_forward.1} parent=5 // pred_check_branch
        %278 = sbr.rel (%p275) target = $region52
      $region51: #{decoder_block_forward.1} parent=5 // pred_region
        %s279 = ssub.s32 %s15, 1
        // Predicated region
        $region53: #{decoder_block_forward.1} parent=51 // pred_check
          %p280 = pneg %p62
        $region54: #{decoder_block_forward.1} parent=51 // pred_check_branch
          %282 = sbr.rel (%p280) target = $region56
        $region55: #{decoder_block_forward.1} parent=51 // pred_region
          %284 = dma.done [#allocation3], 1024
        $region56: #{decoder_block_forward.1} parent=51 // pred_fallthru
          _
        %p285 = scmp.lt.s32.totalorder %s20, 1
        %s286 = scalar_select %p285, %s20, 1
        %s287 = smul.addr %s286, 6
        %s288 = smul.addr %s287, 2
        %s289 = scalar_lea.vmem %s0, %s288
        %p290 = pneg %p41
        %p291 = pneg %p38
        %p292 = pneg %p62
        %p293 = pneg %p59
        %p294 = pneg %p83
        %p295 = pneg %p80
        %p296 = pneg %p104
        %p297 = pneg %p101
        %p298 = pneg %p125
        %p299 = pneg %p122
        %p300 = pneg %p146
        %p301 = pneg %p143
        %p302 = pneg %p167
        %p303 = pneg %p164
        %p304 = pneg %p188
        %p305 = pneg %p185
        %p306 = pneg %p214
        %p307 = pneg %p211
        %p308 = scmp.lt.s32.totalorder %s20, 1
        %s309 = scalar_select %p308, %s20, 1
        %s310 = smul.addr %s309, 16
        %s311 = smul.addr %s310, 8
        %s312 = scalar_lea.vmem %s8, %s311
        %p313 = scmp.lt.s32.totalorder %s20, 1
        %s314 = scalar_select %p313, %s20, 1
        %s315 = smul.addr %s314, 6
        %s316 = smul.addr %s315, 2
        %s317 = scalar_lea.vmem %s0, %s316
        %p318 = scmp.lt.s32.totalorder %s20, 1
        %s319 = scalar_select %p318, %s20, 1
        %s320 = smul.addr %s319, 16
        %s321 = smul.addr %s320, 8
        %s322 = scalar_lea.vmem %s8, %s321
        %v324 = vld [vmem:[%s317] sm:$0xff]
        %v325 = vld [vmem:[%s317 + $0x8] sm:$0xf]
        %v326 = vld [vmem:[#allocation2] sm:$0xff]
        %v327 = vld [vmem:[#allocation2 + $0x8] sm:$0xff]
        %v328 = vld [vmem:[#allocation2 + $0x10] sm:$0xff]
        %v329 = vld [vmem:[#allocation2 + $0x18] sm:$0xff]
        %v330 = vld [vmem:[#allocation2 + $0x20] sm:$0xff]
        %v331 = vld [vmem:[#allocation2 + $0x28] sm:$0xff]
        %v332 = vld [vmem:[#allocation2 + $0x30] sm:$0x33]
        %v333 = vld [vmem:[#allocation2 + $0x38] sm:$0x33]
        %v336 = vunpack.c.l.b16 %v326
        %v337 = vunpack.c.h.b16 %v326
        %v338 = vunpack.c.l.b16 %v327
        %v339 = vunpack.c.h.b16 %v327
        %v340 = vpack.c.b16 %v336, %v336
        %v341 = vpack.c.b16 %v337, %v337
        %v342 = vpack.c.b16 %v338, %v338
        %v343 = vpack.c.b16 %v339, %v339
        %v345 = vpack.i.b16 %v340, %v340
        %v347 = vperm.slane %v345, 0
        %v349 = vpack.i.b16 %v341, %v341
        %v351 = vperm.slane %v349, 0
        %v353 = vpack.i.b16 %v342, %v342
        %v355 = vperm.slane %v353, 0
        %v357 = vpack.i.b16 %v343, %v343
        %v359 = vperm.slane %v357, 0
        %v360 = vunpack.c.l.bf16 %v324
        %v361 = vunpack.c.h.bf16 %v324
        %v362 = vunpack.c.l.bf16 %v347
        %v363 = vunpack.c.l.bf16 %v351
        %v364 = vunpack.c.l.bf16 %v355
        %v365 = vunpack.c.l.bf16 %v359
        %v370 = vrot.slane %v363, 4
        %v371 = vrot.slane %v365, 4
        %vm372 = vcmask 1043456
        %v373 = vsel %vm372, %v362, %v370
        %v374 = vsel %vm372, %v364, %v371
        %v377 = vmul.f32 %v360, %v373
        %v378 = vmul.f32 %v361, %v374
        %381 = vst [vmem:[#allocation1] ss:$2 sm:$0xff] %v377
        %s382 = scalar_lea.vmem [#allocation1], 16
        %383 = vst [vmem:[%s382] ss:$2 sm:$0xff] %v378
        %v384 = vld.sshfl [vmem:[#allocation1] sm:$0xff pattern:$0x75316420]
        %v385 = vld.sshfl [vmem:[#allocation1 + $0x8] sm:$0xff pattern:$0x75316420]
        %v386 = vld.sshfl [vmem:[#allocation1 + $0x10] sm:$0xff pattern:$0x75316420]
        %v387 = vld.sshfl [vmem:[#allocation1 + $0x18] sm:$0xff pattern:$0x75316420]
        %v392 = vpack.c.bf16 %v385, %v384
        %v393 = vpack.c.bf16 %v387, %v386
        %v394 = vshrl.u32 %v340, 16
        %v395 = vpack.i.b16 %v394, %v394
        %v397 = vperm.slane %v395, 0
        %v398 = vshrl.u32 %v341, 16
        %v399 = vpack.i.b16 %v398, %v398
        %v401 = vperm.slane %v399, 0
        %v402 = vshrl.u32 %v342, 16
        %v403 = vpack.i.b16 %v402, %v402
        %v405 = vperm.slane %v403, 0
        %v406 = vshrl.u32 %v343, 16
        %v407 = vpack.i.b16 %v406, %v406
        %v409 = vperm.slane %v407, 0
        %v410 = vunpack.c.l.bf16 %v325
        %v411 = vunpack.c.l.bf16 %v397
        %v412 = vunpack.c.l.bf16 %v401
        %v413 = vunpack.c.l.bf16 %v405
        %v414 = vunpack.c.l.bf16 %v409
        %v419 = vrot.slane %v412, 4
        %v420 = vrot.slane %v414, 4
        %v421 = vsel %vm372, %v411, %v419
        %v422 = vsel %vm372, %v413, %v420
        %423 = vrot.lane.b32.xlu0 %v421, 1
        %v424 = vpop.permute.xlu0 %423
        %425 = vrot.lane.b32.xlu0 %v422, 1
        %v426 = vpop.permute.xlu0 %425
        %v427 = vrot.slane %v424, 4
        %v428 = vrot.slane %v426, 4
        %vm429 = vcmask 7168
        %v430 = vsel %vm429, %v427, %v424
        %v431 = vsel %vm372, %v427, %v428
        %v432 = vsel %vm429, %v431, %v426
        %v436 = vmul.f32 %v360, %v430
        %v437 = vmul.f32 %v361, %v432
        %v438 = vmul.f32 %v410, %v428
        %442 = vst [vmem:[#allocation1] ss:$2 sm:$0xff] %v436
        %s443 = scalar_lea.vmem [#allocation1], 16
        %444 = vst [vmem:[%s443] ss:$2 sm:$0xff] %v437
        %s445 = scalar_lea.vmem [#allocation1], 32
        %446 = vst [vmem:[%s445] ss:$2 sm:$0xff] %v438
        %v447 = vld.sshfl [vmem:[#allocation1] sm:$0xff pattern:$0x75316420]
        %v448 = vld.sshfl [vmem:[#allocation1 + $0x8] sm:$0xff pattern:$0x75316420]
        %v449 = vld.sshfl [vmem:[#allocation1 + $0x10] sm:$0xff pattern:$0x75316420]
        %v450 = vld.sshfl [vmem:[#allocation1 + $0x18] sm:$0xff pattern:$0x75316420]
        %v451 = vld.sshfl [vmem:[#allocation1 + $0x20] sm:$0xff pattern:$0x75316420]
        %v457 = vpack.c.bf16 %v448, %v447
        %v458 = vpack.c.bf16 %v450, %v449
        %v459 = vpack.c.bf16 %v451, %v451
        %v460 = vperm.slane %v345, 1
        %v461 = vperm.slane %v349, 1
        %v462 = vperm.slane %v353, 1
        %v463 = vperm.slane %v357, 1
        %v464 = vunpack.c.l.bf16 %v460
        %v465 = vunpack.c.l.bf16 %v461
        %v466 = vunpack.c.l.bf16 %v462
        %v467 = vunpack.c.l.bf16 %v463
        %v472 = vrot.slane %v465, 4
        %v473 = vrot.slane %v467, 4
        %v474 = vsel %vm372, %v464, %v472
        %v475 = vsel %vm372, %v466, %v473
        %476 = vrot.lane.b32.xlu0 %v474, 2
        %v477 = vpop.permute.xlu0 %476
        %478 = vrot.lane.b32.xlu0 %v475, 2
        %v479 = vpop.permute.xlu0 %478
        %v480 = vrot.slane %v477, 4
        %v481 = vrot.slane %v479, 4
        %vm482 = vcmask 15360
        %v483 = vsel %vm482, %v480, %v477
        %v484 = vsel %vm372, %v480, %v481
        %v485 = vsel %vm482, %v484, %v479
        %v489 = vmul.f32 %v360, %v483
        %v490 = vmul.f32 %v361, %v485
        %v491 = vmul.f32 %v410, %v481
        %495 = vst [vmem:[#allocation1] ss:$2 sm:$0xff] %v489
        %s496 = scalar_lea.vmem [#allocation1], 16
        %497 = vst [vmem:[%s496] ss:$2 sm:$0xff] %v490
        %s498 = scalar_lea.vmem [#allocation1], 32
        %499 = vst [vmem:[%s498] ss:$2 sm:$0xff] %v491
        %v500 = vld.sshfl [vmem:[#allocation1] sm:$0xff pattern:$0x75316420]
        %v501 = vld.sshfl [vmem:[#allocation1 + $0x8] sm:$0xff pattern:$0x75316420]
        %v502 = vld.sshfl [vmem:[#allocation1 + $0x10] sm:$0xff pattern:$0x75316420]
        %v503 = vld.sshfl [vmem:[#allocation1 + $0x18] sm:$0xff pattern:$0x75316420]
        %v504 = vld.sshfl [vmem:[#allocation1 + $0x20] sm:$0xff pattern:$0x75316420]
        %v510 = vpack.c.bf16 %v501, %v500
        %v511 = vpack.c.bf16 %v503, %v502
        %v512 = vpack.c.bf16 %v504, %v504
        %v513 = vperm.slane %v395, 1
        %v514 = vperm.slane %v399, 1
        %v515 = vperm.slane %v403, 1
        %v516 = vperm.slane %v407, 1
        %v517 = vunpack.c.l.bf16 %v513
        %v518 = vunpack.c.l.bf16 %v514
        %v519 = vunpack.c.l.bf16 %v515
        %v520 = vunpack.c.l.bf16 %v516
        %v525 = vrot.slane %v518, 4
        %v526 = vrot.slane %v520, 4
        %v527 = vsel %vm372, %v517, %v525
        %v528 = vsel %vm372, %v519, %v526
        %529 = vrot.lane.b32.xlu0 %v527, 8
        %v530 = vpop.permute.xlu0 %529
        %531 = vrot.lane.b32.xlu0 %v528, 8
        %v532 = vpop.permute.xlu0 %531
        %v533 = vrot.slane %v530, 4
        %v534 = vrot.slane %v532, 4
        %vm535 = vcmask 64512
        %v536 = vsel %vm535, %v533, %v530
        %v537 = vsel %vm372, %v533, %v534
        %v538 = vsel %vm535, %v537, %v532
        %v542 = vmul.f32 %v360, %v536
        %v543 = vmul.f32 %v361, %v538
        %v544 = vmul.f32 %v410, %v534
        %548 = vst [vmem:[#allocation1] ss:$2 sm:$0xff] %v542
        %s549 = scalar_lea.vmem [#allocation1], 16
        %550 = vst [vmem:[%s549] ss:$2 sm:$0xff] %v543
        %s551 = scalar_lea.vmem [#allocation1], 32
        %552 = vst [vmem:[%s551] ss:$2 sm:$0xff] %v544
        %v553 = vld.sshfl [vmem:[#allocation1] sm:$0xff pattern:$0x75316420]
        %v554 = vld.sshfl [vmem:[#allocation1 + $0x8] sm:$0xff pattern:$0x75316420]
        %v555 = vld.sshfl [vmem:[#allocation1 + $0x10] sm:$0xff pattern:$0x75316420]
        %v556 = vld.sshfl [vmem:[#allocation1 + $0x18] sm:$0xff pattern:$0x75316420]
        %v557 = vld.sshfl [vmem:[#allocation1 + $0x20] sm:$0xff pattern:$0x75316420]
        %v563 = vpack.c.bf16 %v554, %v553
        %v564 = vpack.c.bf16 %v556, %v555
        %v565 = vpack.c.bf16 %v557, %v557
        %v566 = vperm.slane %v345, 2
        %v567 = vperm.slane %v349, 2
        %v568 = vperm.slane %v353, 2
        %v569 = vperm.slane %v357, 2
        %v570 = vunpack.c.l.bf16 %v566
        %v571 = vunpack.c.l.bf16 %v567
        %v572 = vunpack.c.l.bf16 %v568
        %v573 = vunpack.c.l.bf16 %v569
        %v578 = vrot.slane %v571, 4
        %v579 = vrot.slane %v573, 4
        %v580 = vsel %vm372, %v570, %v578
        %v581 = vsel %vm372, %v572, %v579
        %582 = vrot.lane.b32.xlu0 %v580, 9
        %v583 = vpop.permute.xlu0 %582
        %584 = vrot.lane.b32.xlu0 %v581, 9
        %v585 = vpop.permute.xlu0 %584
        %v586 = vrot.slane %v583, 4
        %v587 = vrot.slane %v585, 4
        %vm588 = vcmask 72704
        %v589 = vsel %vm588, %v586, %v583
        %v590 = vsel %vm372, %v586, %v587
        %v591 = vsel %vm588, %v590, %v585
        %v595 = vmul.f32 %v360, %v589
        %v596 = vmul.f32 %v361, %v591
        %v597 = vmul.f32 %v410, %v587
        %601 = vst [vmem:[#allocation1] ss:$2 sm:$0xff] %v595
        %s602 = scalar_lea.vmem [#allocation1], 16
        %603 = vst [vmem:[%s602] ss:$2 sm:$0xff] %v596
        %s604 = scalar_lea.vmem [#allocation1], 32
        %605 = vst [vmem:[%s604] ss:$2 sm:$0xff] %v597
        %v606 = vld.sshfl [vmem:[#allocation1] sm:$0xff pattern:$0x75316420]
        %v607 = vld.sshfl [vmem:[#allocation1 + $0x8] sm:$0xff pattern:$0x75316420]
        %v608 = vld.sshfl [vmem:[#allocation1 + $0x10] sm:$0xff pattern:$0x75316420]
        %v609 = vld.sshfl [vmem:[#allocation1 + $0x18] sm:$0xff pattern:$0x75316420]
        %v610 = vld.sshfl [vmem:[#allocation1 + $0x20] sm:$0xff pattern:$0x75316420]
        %v616 = vpack.c.bf16 %v607, %v606
        %v617 = vpack.c.bf16 %v609, %v608
        %v618 = vpack.c.bf16 %v610, %v610
        %v619 = vperm.slane %v395, 2
        %v620 = vperm.slane %v399, 2
        %v621 = vperm.slane %v403, 2
        %v622 = vperm.slane %v407, 2
        %v623 = vunpack.c.l.bf16 %v619
        %v624 = vunpack.c.l.bf16 %v620
        %v625 = vunpack.c.l.bf16 %v621
        %v626 = vunpack.c.l.bf16 %v622
        %v631 = vrot.slane %v624, 4
        %v632 = vrot.slane %v626, 4
        %v633 = vsel %vm372, %v623, %v631
        %v634 = vsel %vm372, %v625, %v632
        %635 = vrot.lane.b32.xlu0 %v633, 10
        %v636 = vpop.permute.xlu0 %635
        %637 = vrot.lane.b32.xlu0 %v634, 10
        %v638 = vpop.permute.xlu0 %637
        %v639 = vrot.slane %v636, 4
        %v640 = vrot.slane %v638, 4
        %vm641 = vcmask 80896
        %v642 = vsel %vm641, %v639, %v636
        %v643 = vsel %vm372, %v639, %v640
        %v644 = vsel %vm641, %v643, %v638
        %v648 = vmul.f32 %v360, %v642
        %v649 = vmul.f32 %v361, %v644
        %v650 = vmul.f32 %v410, %v640
        %654 = vst [vmem:[#allocation1] ss:$2 sm:$0xff] %v648
        %s655 = scalar_lea.vmem [#allocation1], 16
        %656 = vst [vmem:[%s655] ss:$2 sm:$0xff] %v649
        %s657 = scalar_lea.vmem [#allocation1], 32
        %658 = vst [vmem:[%s657] ss:$2 sm:$0xff] %v650
        %v659 = vld.sshfl [vmem:[#allocation1] sm:$0xff pattern:$0x75316420]
        %v660 = vld.sshfl [vmem:[#allocation1 + $0x8] sm:$0xff pattern:$0x75316420]
        %v661 = vld.sshfl [vmem:[#allocation1 + $0x10] sm:$0xff pattern:$0x75316420]
        %v662 = vld.sshfl [vmem:[#allocation1 + $0x18] sm:$0xff pattern:$0x75316420]
        %v663 = vld.sshfl [vmem:[#allocation1 + $0x20] sm:$0xff pattern:$0x75316420]
        %v669 = vpack.c.bf16 %v660, %v659
        %v670 = vpack.c.bf16 %v662, %v661
        %v671 = vpack.c.bf16 %v663, %v663
        %v672 = vperm.slane %v345, 3
        %v673 = vperm.slane %v349, 3
        %v674 = vperm.slane %v353, 3
        %v675 = vperm.slane %v357, 3
        %v676 = vunpack.c.l.bf16 %v672
        %v677 = vunpack.c.l.bf16 %v673
        %v678 = vunpack.c.l.bf16 %v674
        %v679 = vunpack.c.l.bf16 %v675
        %v684 = vrot.slane %v677, 4
        %v685 = vrot.slane %v679, 4
        %v686 = vsel %vm372, %v676, %v684
        %v687 = vsel %vm372, %v678, %v685
        %688 = vrot.lane.b32.xlu0 %v686, 16
        %v689 = vpop.permute.xlu0 %688
        %690 = vrot.lane.b32.xlu0 %v687, 16
        %v691 = vpop.permute.xlu0 %690
        %v692 = vrot.slane %v689, 4
        %v693 = vrot.slane %v691, 4
        %vm694 = vcmask 130048
        %v695 = vsel %vm694, %v692, %v689
        %v696 = vsel %vm372, %v692, %v693
        %v697 = vsel %vm694, %v696, %v691
        %v701 = vmul.f32 %v360, %v695
        %v702 = vmul.f32 %v361, %v697
        %v703 = vmul.f32 %v410, %v693
        %707 = vst [vmem:[#allocation1] ss:$2 sm:$0xff] %v701
        %s708 = scalar_lea.vmem [#allocation1], 16
        %709 = vst [vmem:[%s708] ss:$2 sm:$0xff] %v702
        %s710 = scalar_lea.vmem [#allocation1], 32
        %711 = vst [vmem:[%s710] ss:$2 sm:$0xff] %v703
        %v712 = vld.sshfl [vmem:[#allocation1] sm:$0xff pattern:$0x75316420]
        %v713 = vld.sshfl [vmem:[#allocation1 + $0x8] sm:$0xff pattern:$0x75316420]
        %v714 = vld.sshfl [vmem:[#allocation1 + $0x10] sm:$0xff pattern:$0x75316420]
        %v715 = vld.sshfl [vmem:[#allocation1 + $0x18] sm:$0xff pattern:$0x75316420]
        %v716 = vld.sshfl [vmem:[#allocation1 + $0x20] sm:$0xff pattern:$0x75316420]
        %v722 = vpack.c.bf16 %v713, %v712
        %v723 = vpack.c.bf16 %v715, %v714
        %v724 = vpack.c.bf16 %v716, %v716
        %v725 = vperm.slane %v395, 3
        %v726 = vperm.slane %v399, 3
        %v727 = vperm.slane %v403, 3
        %v728 = vperm.slane %v407, 3
        %v729 = vunpack.c.l.bf16 %v725
        %v730 = vunpack.c.l.bf16 %v726
        %v731 = vunpack.c.l.bf16 %v727
        %v732 = vunpack.c.l.bf16 %v728
        %v737 = vrot.slane %v730, 4
        %v738 = vrot.slane %v732, 4
        %v739 = vsel %vm372, %v729, %v737
        %v740 = vsel %vm372, %v731, %v738
        %741 = vrot.lane.b32.xlu0 %v739, 17
        %v742 = vpop.permute.xlu0 %741
        %743 = vrot.lane.b32.xlu0 %v740, 17
        %v744 = vpop.permute.xlu0 %743
        %v745 = vrot.slane %v742, 4
        %v746 = vrot.slane %v744, 4
        %vm747 = vcmask 138240
        %v748 = vsel %vm747, %v745, %v742
        %v749 = vsel %vm372, %v745, %v746
        %v750 = vsel %vm747, %v749, %v744
        %v754 = vmul.f32 %v360, %v748
        %v755 = vmul.f32 %v361, %v750
        %v756 = vmul.f32 %v410, %v746
        %760 = vst [vmem:[#allocation1] ss:$2 sm:$0xff] %v754
        %s761 = scalar_lea.vmem [#allocation1], 16
        %762 = vst [vmem:[%s761] ss:$2 sm:$0xff] %v755
        %s763 = scalar_lea.vmem [#allocation1], 32
        %764 = vst [vmem:[%s763] ss:$2 sm:$0xff] %v756
        %v765 = vld.sshfl [vmem:[#allocation1] sm:$0xff pattern:$0x75316420]
        %v766 = vld.sshfl [vmem:[#allocation1 + $0x8] sm:$0xff pattern:$0x75316420]
        %v767 = vld.sshfl [vmem:[#allocation1 + $0x10] sm:$0xff pattern:$0x75316420]
        %v768 = vld.sshfl [vmem:[#allocation1 + $0x18] sm:$0xff pattern:$0x75316420]
        %v769 = vld.sshfl [vmem:[#allocation1 + $0x20] sm:$0xff pattern:$0x75316420]
        %v775 = vpack.c.bf16 %v766, %v765
        %v776 = vpack.c.bf16 %v768, %v767
        %v777 = vpack.c.bf16 %v769, %v769
        %v780 = vunpack.c.l.b16 %v328
        %v781 = vunpack.c.h.b16 %v328
        %v782 = vunpack.c.l.b16 %v329
        %v783 = vunpack.c.h.b16 %v329
        %v784 = vpack.c.b16 %v780, %v780
        %v785 = vpack.c.b16 %v781, %v781
        %v786 = vpack.c.b16 %v782, %v782
        %v787 = vpack.c.b16 %v783, %v783
        %v789 = vpack.i.b16 %v784, %v784
        %v791 = vperm.slane %v789, 0
        %v793 = vpack.i.b16 %v785, %v785
        %v795 = vperm.slane %v793, 0
        %v797 = vpack.i.b16 %v786, %v786
        %v799 = vperm.slane %v797, 0
        %v801 = vpack.i.b16 %v787, %v787
        %v803 = vperm.slane %v801, 0
        %v804 = vunpack.c.l.bf16 %v791
        %v805 = vunpack.c.l.bf16 %v795
        %v806 = vunpack.c.l.bf16 %v799
        %v807 = vunpack.c.l.bf16 %v803
        %v812 = vrot.slane %v805, 4
        %v813 = vrot.slane %v807, 4
        %v814 = vsel %vm372, %v804, %v812
        %v815 = vsel %vm372, %v806, %v813
        %816 = vrot.lane.b32.xlu0 %v814, 18
        %v817 = vpop.permute.xlu0 %816
        %818 = vrot.lane.b32.xlu0 %v815, 18
        %v819 = vpop.permute.xlu0 %818
        %v820 = vrot.slane %v817, 4
        %v821 = vrot.slane %v819, 4
        %vm822 = vcmask 146432
        %v823 = vsel %vm822, %v820, %v817
        %v824 = vsel %vm372, %v820, %v821
        %v825 = vsel %vm822, %v824, %v819
        %v829 = vmul.f32 %v360, %v823
        %v830 = vmul.f32 %v361, %v825
        %v831 = vmul.f32 %v410, %v821
        %835 = vst [vmem:[#allocation1] ss:$2 sm:$0xff] %v829
        %s836 = scalar_lea.vmem [#allocation1], 16
        %837 = vst [vmem:[%s836] ss:$2 sm:$0xff] %v830
        %s838 = scalar_lea.vmem [#allocation1], 32
        %839 = vst [vmem:[%s838] ss:$2 sm:$0xff] %v831
        %v840 = vld.sshfl [vmem:[#allocation1] sm:$0xff pattern:$0x75316420]
        %v841 = vld.sshfl [vmem:[#allocation1 + $0x8] sm:$0xff pattern:$0x75316420]
        %v842 = vld.sshfl [vmem:[#allocation1 + $0x10] sm:$0xff pattern:$0x75316420]
        %v843 = vld.sshfl [vmem:[#allocation1 + $0x18] sm:$0xff pattern:$0x75316420]
        %v844 = vld.sshfl [vmem:[#allocation1 + $0x20] sm:$0xff pattern:$0x75316420]
        %v850 = vpack.c.bf16 %v841, %v840
        %v851 = vpack.c.bf16 %v843, %v842
        %v852 = vpack.c.bf16 %v844, %v844
        %v853 = vshrl.u32 %v784, 16
        %v854 = vpack.i.b16 %v853, %v853
        %v856 = vperm.slane %v854, 0
        %v857 = vshrl.u32 %v785, 16
        %v858 = vpack.i.b16 %v857, %v857
        %v860 = vperm.slane %v858, 0
        %v861 = vshrl.u32 %v786, 16
        %v862 = vpack.i.b16 %v861, %v861
        %v864 = vperm.slane %v862, 0
        %v865 = vshrl.u32 %v787, 16
        %v866 = vpack.i.b16 %v865, %v865
        %v868 = vperm.slane %v866, 0
        %v869 = vunpack.c.l.bf16 %v856
        %v870 = vunpack.c.l.bf16 %v860
        %v871 = vunpack.c.l.bf16 %v864
        %v872 = vunpack.c.l.bf16 %v868
        %v877 = vrot.slane %v870, 4
        %v878 = vrot.slane %v872, 4
        %v879 = vsel %vm372, %v869, %v877
        %v880 = vsel %vm372, %v871, %v878
        %881 = vrot.lane.b32.xlu0 %v879, 64
        %v882 = vpop.permute.xlu0 %881
        %883 = vrot.lane.b32.xlu0 %v880, 64
        %v884 = vpop.permute.xlu0 %883
        %v885 = vrot.slane %v882, 4
        %v886 = vrot.slane %v884, 4
        %vm887 = vcmask 523264
        %v888 = vsel %vm887, %v885, %v882
        %v889 = vsel %vm372, %v885, %v886
        %v890 = vsel %vm887, %v889, %v884
        %v894 = vmul.f32 %v360, %v888
        %v895 = vmul.f32 %v361, %v890
        %v896 = vmul.f32 %v410, %v886
        %900 = vst [vmem:[#allocation1] ss:$2 sm:$0xff] %v894
        %s901 = scalar_lea.vmem [#allocation1], 16
        %902 = vst [vmem:[%s901] ss:$2 sm:$0xff] %v895
        %s903 = scalar_lea.vmem [#allocation1], 32
        %904 = vst [vmem:[%s903] ss:$2 sm:$0xff] %v896
        %v905 = vld.sshfl [vmem:[#allocation1] sm:$0xff pattern:$0x75316420]
        %v906 = vld.sshfl [vmem:[#allocation1 + $0x8] sm:$0xff pattern:$0x75316420]
        %v907 = vld.sshfl [vmem:[#allocation1 + $0x10] sm:$0xff pattern:$0x75316420]
        %v908 = vld.sshfl [vmem:[#allocation1 + $0x18] sm:$0xff pattern:$0x75316420]
        %v909 = vld.sshfl [vmem:[#allocation1 + $0x20] sm:$0xff pattern:$0x75316420]
        %v915 = vpack.c.bf16 %v906, %v905
        %v916 = vpack.c.bf16 %v908, %v907
        %v917 = vpack.c.bf16 %v909, %v909
        %v918 = vperm.slane %v789, 1
        %v919 = vperm.slane %v793, 1
        %v920 = vperm.slane %v797, 1
        %v921 = vperm.slane %v801, 1
        %v922 = vunpack.c.l.bf16 %v918
        %v923 = vunpack.c.l.bf16 %v919
        %v924 = vunpack.c.l.bf16 %v920
        %v925 = vunpack.c.l.bf16 %v921
        %v930 = vrot.slane %v923, 4
        %v931 = vrot.slane %v925, 4
        %v932 = vsel %vm372, %v922, %v930
        %v933 = vsel %vm372, %v924, %v931
        %934 = vrot.lane.b32.xlu0 %v932, 65
        %v935 = vpop.permute.xlu0 %934
        %936 = vrot.lane.b32.xlu0 %v933, 65
        %v937 = vpop.permute.xlu0 %936
        %v938 = vrot.slane %v935, 4
        %v939 = vrot.slane %v937, 4
        %vm940 = vcmask 531456
        %v941 = vsel %vm940, %v938, %v935
        %v942 = vsel %vm372, %v938, %v939
        %v943 = vsel %vm940, %v942, %v937
        %v947 = vmul.f32 %v360, %v941
        %v948 = vmul.f32 %v361, %v943
        %v949 = vmul.f32 %v410, %v939
        %953 = vst [vmem:[#allocation1] ss:$2 sm:$0xff] %v947
        %s954 = scalar_lea.vmem [#allocation1], 16
        %955 = vst [vmem:[%s954] ss:$2 sm:$0xff] %v948
        %s956 = scalar_lea.vmem [#allocation1], 32
        %957 = vst [vmem:[%s956] ss:$2 sm:$0xff] %v949
        %v958 = vld.sshfl [vmem:[#allocation1] sm:$0xff pattern:$0x75316420]
        %v959 = vld.sshfl [vmem:[#allocation1 + $0x8] sm:$0xff pattern:$0x75316420]
        %v960 = vld.sshfl [vmem:[#allocation1 + $0x10] sm:$0xff pattern:$0x75316420]
        %v961 = vld.sshfl [vmem:[#allocation1 + $0x18] sm:$0xff pattern:$0x75316420]
        %v962 = vld.sshfl [vmem:[#allocation1 + $0x20] sm:$0xff pattern:$0x75316420]
        %v968 = vpack.c.bf16 %v959, %v958
        %v969 = vpack.c.bf16 %v961, %v960
        %v970 = vpack.c.bf16 %v962, %v962
        %v971 = vperm.slane %v854, 1
        %v972 = vperm.slane %v858, 1
        %v973 = vperm.slane %v862, 1
        %v974 = vperm.slane %v866, 1
        %v975 = vunpack.c.l.bf16 %v971
        %v976 = vunpack.c.l.bf16 %v972
        %v977 = vunpack.c.l.bf16 %v973
        %v978 = vunpack.c.l.bf16 %v974
        %v983 = vrot.slane %v976, 4
        %v984 = vrot.slane %v978, 4
        %v985 = vsel %vm372, %v975, %v983
        %v986 = vsel %vm372, %v977, %v984
        %987 = vrot.lane.b32.xlu0 %v985, 66
        %v988 = vpop.permute.xlu0 %987
        %989 = vrot.lane.b32.xlu0 %v986, 66
        %v990 = vpop.permute.xlu0 %989
        %v991 = vrot.slane %v988, 4
        %v992 = vrot.slane %v990, 4
        %vm993 = vcmask 539648
        %v994 = vsel %vm993, %v991, %v988
        %v995 = vsel %vm372, %v991, %v992
        %v996 = vsel %vm993, %v995, %v990
        %v1000 = vmul.f32 %v360, %v994
        %v1001 = vmul.f32 %v361, %v996
        %v1002 = vmul.f32 %v410, %v992
        %1006 = vst [vmem:[#allocation1] ss:$2 sm:$0xff] %v1000
        %s1007 = scalar_lea.vmem [#allocation1], 16
        %1008 = vst [vmem:[%s1007] ss:$2 sm:$0xff] %v1001
        %s1009 = scalar_lea.vmem [#allocation1], 32
        %1010 = vst [vmem:[%s1009] ss:$2 sm:$0xff] %v1002
        %v1011 = vld.sshfl [vmem:[#allocation1] sm:$0xff pattern:$0x75316420]
        %v1012 = vld.sshfl [vmem:[#allocation1 + $0x8] sm:$0xff pattern:$0x75316420]
        %v1013 = vld.sshfl [vmem:[#allocation1 + $0x10] sm:$0xff pattern:$0x75316420]
        %v1014 = vld.sshfl [vmem:[#allocation1 + $0x18] sm:$0xff pattern:$0x75316420]
        %v1015 = vld.sshfl [vmem:[#allocation1 + $0x20] sm:$0xff pattern:$0x75316420]
        %v1021 = vpack.c.bf16 %v1012, %v1011
        %v1022 = vpack.c.bf16 %v1014, %v1013
        %v1023 = vpack.c.bf16 %v1015, %v1015
        %v1024 = vperm.slane %v789, 2
        %v1025 = vperm.slane %v793, 2
        %v1026 = vperm.slane %v797, 2
        %v1027 = vperm.slane %v801, 2
        %v1028 = vunpack.c.l.bf16 %v1024
        %v1029 = vunpack.c.l.bf16 %v1025
        %v1030 = vunpack.c.l.bf16 %v1026
        %v1031 = vunpack.c.l.bf16 %v1027
        %v1036 = vrot.slane %v1029, 4
        %v1037 = vrot.slane %v1031, 4
        %v1038 = vsel %vm372, %v1028, %v1036
        %v1039 = vsel %vm372, %v1030, %v1037
        %1040 = vrot.lane.b32.xlu0 %v1038, 72
        %v1041 = vpop.permute.xlu0 %1040
        %1042 = vrot.lane.b32.xlu0 %v1039, 72
        %v1043 = vpop.permute.xlu0 %1042
        %v1044 = vrot.slane %v1041, 4
        %v1045 = vrot.slane %v1043, 4
        %vm1046 = vcmask 588800
        %v1047 = vsel %vm1046, %v1044, %v1041
        %v1048 = vsel %vm372, %v1044, %v1045
        %v1049 = vsel %vm1046, %v1048, %v1043
        %v1053 = vmul.f32 %v360, %v1047
        %v1054 = vmul.f32 %v361, %v1049
        %v1055 = vmul.f32 %v410, %v1045
        %1059 = vst [vmem:[#allocation1] ss:$2 sm:$0xff] %v1053
        %s1060 = scalar_lea.vmem [#allocation1], 16
        %1061 = vst [vmem:[%s1060] ss:$2 sm:$0xff] %v1054
        %s1062 = scalar_lea.vmem [#allocation1], 32
        %1063 = vst [vmem:[%s1062] ss:$2 sm:$0xff] %v1055
        %v1064 = vld.sshfl [vmem:[#allocation1] sm:$0xff pattern:$0x75316420]
        %v1065 = vld.sshfl [vmem:[#allocation1 + $0x8] sm:$0xff pattern:$0x75316420]
        %v1066 = vld.sshfl [vmem:[#allocation1 + $0x10] sm:$0xff pattern:$0x75316420]
        %v1067 = vld.sshfl [vmem:[#allocation1 + $0x18] sm:$0xff pattern:$0x75316420]
        %v1068 = vld.sshfl [vmem:[#allocation1 + $0x20] sm:$0xff pattern:$0x75316420]
        %v1074 = vpack.c.bf16 %v1065, %v1064
        %v1075 = vpack.c.bf16 %v1067, %v1066
        %v1076 = vpack.c.bf16 %v1068, %v1068
        %v1077 = vperm.slane %v854, 2
        %v1078 = vperm.slane %v858, 2
        %v1079 = vperm.slane %v862, 2
        %v1080 = vperm.slane %v866, 2
        %v1081 = vunpack.c.l.bf16 %v1077
        %v1082 = vunpack.c.l.bf16 %v1078
        %v1083 = vunpack.c.l.bf16 %v1079
        %v1084 = vunpack.c.l.bf16 %v1080
        %v1089 = vrot.slane %v1082, 4
        %v1090 = vrot.slane %v1084, 4
        %v1091 = vsel %vm372, %v1081, %v1089
        %v1092 = vsel %vm372, %v1083, %v1090
        %1093 = vrot.lane.b32.xlu0 %v1091, 73
        %v1094 = vpop.permute.xlu0 %1093
        %1095 = vrot.lane.b32.xlu0 %v1092, 73
        %v1096 = vpop.permute.xlu0 %1095
        %v1097 = vrot.slane %v1094, 4
        %v1098 = vrot.slane %v1096, 4
        %vm1099 = vcmask 596992
        %v1100 = vsel %vm1099, %v1097, %v1094
        %v1101 = vsel %vm372, %v1097, %v1098
        %v1102 = vsel %vm1099, %v1101, %v1096
        %v1106 = vmul.f32 %v360, %v1100
        %v1107 = vmul.f32 %v361, %v1102
        %v1108 = vmul.f32 %v410, %v1098
        %1112 = vst [vmem:[#allocation1] ss:$2 sm:$0xff] %v1106
        %s1113 = scalar_lea.vmem [#allocation1], 16
        %1114 = vst [vmem:[%s1113] ss:$2 sm:$0xff] %v1107
        %s1115 = scalar_lea.vmem [#allocation1], 32
        %1116 = vst [vmem:[%s1115] ss:$2 sm:$0xff] %v1108
        %v1117 = vld.sshfl [vmem:[#allocation1] sm:$0xff pattern:$0x75316420]
        %v1118 = vld.sshfl [vmem:[#allocation1 + $0x8] sm:$0xff pattern:$0x75316420]
        %v1119 = vld.sshfl [vmem:[#allocation1 + $0x10] sm:$0xff pattern:$0x75316420]
        %v1120 = vld.sshfl [vmem:[#allocation1 + $0x18] sm:$0xff pattern:$0x75316420]
        %v1121 = vld.sshfl [vmem:[#allocation1 + $0x20] sm:$0xff pattern:$0x75316420]
        %v1127 = vpack.c.bf16 %v1118, %v1117
        %v1128 = vpack.c.bf16 %v1120, %v1119
        %v1129 = vpack.c.bf16 %v1121, %v1121
        %v1130 = vperm.slane %v789, 3
        %v1131 = vperm.slane %v793, 3
        %v1132 = vperm.slane %v797, 3
        %v1133 = vperm.slane %v801, 3
        %v1134 = vunpack.c.l.bf16 %v1130
        %v1135 = vunpack.c.l.bf16 %v1131
        %v1136 = vunpack.c.l.bf16 %v1132
        %v1137 = vunpack.c.l.bf16 %v1133
        %v1142 = vrot.slane %v1135, 4
        %v1143 = vrot.slane %v1137, 4
        %v1144 = vsel %vm372, %v1134, %v1142
        %v1145 = vsel %vm372, %v1136, %v1143
        %1146 = vrot.lane.b32.xlu0 %v1144, 74
        %v1147 = vpop.permute.xlu0 %1146
        %1148 = vrot.lane.b32.xlu0 %v1145, 74
        %v1149 = vpop.permute.xlu0 %1148
        %v1150 = vrot.slane %v1147, 4
        %v1151 = vrot.slane %v1149, 4
        %vm1152 = vcmask 605184
        %v1153 = vsel %vm1152, %v1150, %v1147
        %v1154 = vsel %vm372, %v1150, %v1151
        %v1155 = vsel %vm1152, %v1154, %v1149
        %v1159 = vmul.f32 %v360, %v1153
        %v1160 = vmul.f32 %v361, %v1155
        %v1161 = vmul.f32 %v410, %v1151
        %1165 = vst [vmem:[#allocation1] ss:$2 sm:$0xff] %v1159
        %s1166 = scalar_lea.vmem [#allocation1], 16
        %1167 = vst [vmem:[%s1166] ss:$2 sm:$0xff] %v1160
        %s1168 = scalar_lea.vmem [#allocation1], 32
        %1169 = vst [vmem:[%s1168] ss:$2 sm:$0xff] %v1161
        %v1170 = vld.sshfl [vmem:[#allocation1] sm:$0xff pattern:$0x75316420]
        %v1171 = vld.sshfl [vmem:[#allocation1 + $0x8] sm:$0xff pattern:$0x75316420]
        %v1172 = vld.sshfl [vmem:[#allocation1 + $0x10] sm:$0xff pattern:$0x75316420]
        %v1173 = vld.sshfl [vmem:[#allocation1 + $0x18] sm:$0xff pattern:$0x75316420]
        %v1174 = vld.sshfl [vmem:[#allocation1 + $0x20] sm:$0xff pattern:$0x75316420]
        %v1180 = vpack.c.bf16 %v1171, %v1170
        %v1181 = vpack.c.bf16 %v1173, %v1172
        %v1182 = vpack.c.bf16 %v1174, %v1174
        %v1183 = vperm.slane %v854, 3
        %v1184 = vperm.slane %v858, 3
        %v1185 = vperm.slane %v862, 3
        %v1186 = vperm.slane %v866, 3
        %v1187 = vunpack.c.l.bf16 %v1183
        %v1188 = vunpack.c.l.bf16 %v1184
        %v1189 = vunpack.c.l.bf16 %v1185
        %v1190 = vunpack.c.l.bf16 %v1186
        %v1195 = vrot.slane %v1188, 4
        %v1196 = vrot.slane %v1190, 4
        %v1197 = vsel %vm372, %v1187, %v1195
        %v1198 = vsel %vm372, %v1189, %v1196
        %1199 = vrot.lane.b32.xlu0 %v1197, 80
        %v1200 = vpop.permute.xlu0 %1199
        %1201 = vrot.lane.b32.xlu0 %v1198, 80
        %v1202 = vpop.permute.xlu0 %1201
        %v1203 = vrot.slane %v1200, 4
        %v1204 = vrot.slane %v1202, 4
        %vm1205 = vcmask 654336
        %v1206 = vsel %vm1205, %v1203, %v1200
        %v1207 = vsel %vm372, %v1203, %v1204
        %v1208 = vsel %vm1205, %v1207, %v1202
        %v1212 = vmul.f32 %v360, %v1206
        %v1213 = vmul.f32 %v361, %v1208
        %v1214 = vmul.f32 %v410, %v1204
        %1218 = vst [vmem:[#allocation1] ss:$2 sm:$0xff] %v1212
        %s1219 = scalar_lea.vmem [#allocation1], 16
        %1220 = vst [vmem:[%s1219] ss:$2 sm:$0xff] %v1213
        %s1221 = scalar_lea.vmem [#allocation1], 32
        %1222 = vst [vmem:[%s1221] ss:$2 sm:$0xff] %v1214
        %v1223 = vld.sshfl [vmem:[#allocation1] sm:$0xff pattern:$0x75316420]
        %v1224 = vld.sshfl [vmem:[#allocation1 + $0x8] sm:$0xff pattern:$0x75316420]
        %v1225 = vld.sshfl [vmem:[#allocation1 + $0x10] sm:$0xff pattern:$0x75316420]
        %v1226 = vld.sshfl [vmem:[#allocation1 + $0x18] sm:$0xff pattern:$0x75316420]
        %v1227 = vld.sshfl [vmem:[#allocation1 + $0x20] sm:$0xff pattern:$0x75316420]
        %v1233 = vpack.c.bf16 %v1224, %v1223
        %v1234 = vpack.c.bf16 %v1226, %v1225
        %v1235 = vpack.c.bf16 %v1227, %v1227
        %v1238 = vunpack.c.l.b16 %v330
        %v1239 = vunpack.c.h.b16 %v330
        %v1240 = vunpack.c.l.b16 %v331
        %v1241 = vunpack.c.h.b16 %v331
        %v1242 = vpack.c.b16 %v1238, %v1238
        %v1243 = vpack.c.b16 %v1239, %v1239
        %v1244 = vpack.c.b16 %v1240, %v1240
        %v1245 = vpack.c.b16 %v1241, %v1241
        %v1247 = vpack.i.b16 %v1242, %v1242
        %v1249 = vperm.slane %v1247, 0
        %v1251 = vpack.i.b16 %v1243, %v1243
        %v1253 = vperm.slane %v1251, 0
        %v1255 = vpack.i.b16 %v1244, %v1244
        %v1257 = vperm.slane %v1255, 0
        %v1259 = vpack.i.b16 %v1245, %v1245
        %v1261 = vperm.slane %v1259, 0
        %v1262 = vunpack.c.l.bf16 %v1249
        %v1263 = vunpack.c.l.bf16 %v1253
        %v1264 = vunpack.c.l.bf16 %v1257
        %v1265 = vunpack.c.l.bf16 %v1261
        %v1270 = vrot.slane %v1263, 4
        %v1271 = vrot.slane %v1265, 4
        %v1272 = vsel %vm372, %v1262, %v1270
        %v1273 = vsel %vm372, %v1264, %v1271
        %1274 = vrot.lane.b32.xlu0 %v1272, 81
        %v1275 = vpop.permute.xlu0 %1274
        %1276 = vrot.lane.b32.xlu0 %v1273, 81
        %v1277 = vpop.permute.xlu0 %1276
        %v1278 = vrot.slane %v1275, 4
        %v1279 = vrot.slane %v1277, 4
        %vm1280 = vcmask 662528
        %v1281 = vsel %vm1280, %v1278, %v1275
        %v1282 = vsel %vm372, %v1278, %v1279
        %v1283 = vsel %vm1280, %v1282, %v1277
        %v1287 = vmul.f32 %v360, %v1281
        %v1288 = vmul.f32 %v361, %v1283
        %v1289 = vmul.f32 %v410, %v1279
        %1293 = vst [vmem:[#allocation1] ss:$2 sm:$0xff] %v1287
        %s1294 = scalar_lea.vmem [#allocation1], 16
        %1295 = vst [vmem:[%s1294] ss:$2 sm:$0xff] %v1288
        %s1296 = scalar_lea.vmem [#allocation1], 32
        %1297 = vst [vmem:[%s1296] ss:$2 sm:$0xff] %v1289
        %v1298 = vld.sshfl [vmem:[#allocation1] sm:$0xff pattern:$0x75316420]
        %v1299 = vld.sshfl [vmem:[#allocation1 + $0x8] sm:$0xff pattern:$0x75316420]
        %v1300 = vld.sshfl [vmem:[#allocation1 + $0x10] sm:$0xff pattern:$0x75316420]
        %v1301 = vld.sshfl [vmem:[#allocation1 + $0x18] sm:$0xff pattern:$0x75316420]
        %v1302 = vld.sshfl [vmem:[#allocation1 + $0x20] sm:$0xff pattern:$0x75316420]
        %v1308 = vpack.c.bf16 %v1299, %v1298
        %v1309 = vpack.c.bf16 %v1301, %v1300
        %v1310 = vpack.c.bf16 %v1302, %v1302
        %v1311 = vshrl.u32 %v1242, 16
        %v1312 = vpack.i.b16 %v1311, %v1311
        %v1314 = vperm.slane %v1312, 0
        %v1315 = vshrl.u32 %v1243, 16
        %v1316 = vpack.i.b16 %v1315, %v1315
        %v1318 = vperm.slane %v1316, 0
        %v1319 = vshrl.u32 %v1244, 16
        %v1320 = vpack.i.b16 %v1319, %v1319
        %v1322 = vperm.slane %v1320, 0
        %v1323 = vshrl.u32 %v1245, 16
        %v1324 = vpack.i.b16 %v1323, %v1323
        %v1326 = vperm.slane %v1324, 0
        %v1327 = vunpack.c.l.bf16 %v1314
        %v1328 = vunpack.c.l.bf16 %v1318
        %v1329 = vunpack.c.l.bf16 %v1322
        %v1330 = vunpack.c.l.bf16 %v1326
        %v1335 = vrot.slane %v1328, 4
        %v1336 = vrot.slane %v1330, 4
        %v1337 = vsel %vm372, %v1327, %v1335
        %v1338 = vsel %vm372, %v1329, %v1336
        %1339 = vrot.lane.b32.xlu0 %v1337, 82
        %v1340 = vpop.permute.xlu0 %1339
        %1341 = vrot.lane.b32.xlu0 %v1338, 82
        %v1342 = vpop.permute.xlu0 %1341
        %v1343 = vrot.slane %v1340, 4
        %v1344 = vrot.slane %v1342, 4
        %vm1345 = vcmask 670720
        %v1346 = vsel %vm1345, %v1343, %v1340
        %v1347 = vsel %vm372, %v1343, %v1344
        %v1348 = vsel %vm1345, %v1347, %v1342
        %v1352 = vmul.f32 %v360, %v1346
        %v1353 = vmul.f32 %v361, %v1348
        %v1354 = vmul.f32 %v410, %v1344
        %1358 = vst [vmem:[#allocation1] ss:$2 sm:$0xff] %v1352
        %s1359 = scalar_lea.vmem [#allocation1], 16
        %1360 = vst [vmem:[%s1359] ss:$2 sm:$0xff] %v1353
        %s1361 = scalar_lea.vmem [#allocation1], 32
        %1362 = vst [vmem:[%s1361] ss:$2 sm:$0xff] %v1354
        %v1363 = vld.sshfl [vmem:[#allocation1] sm:$0xff pattern:$0x75316420]
        %v1364 = vld.sshfl [vmem:[#allocation1 + $0x8] sm:$0xff pattern:$0x75316420]
        %v1365 = vld.sshfl [vmem:[#allocation1 + $0x10] sm:$0xff pattern:$0x75316420]
        %v1366 = vld.sshfl [vmem:[#allocation1 + $0x18] sm:$0xff pattern:$0x75316420]
        %v1367 = vld.sshfl [vmem:[#allocation1 + $0x20] sm:$0xff pattern:$0x75316420]
        %v1373 = vpack.c.bf16 %v1364, %v1363
        %v1374 = vpack.c.bf16 %v1366, %v1365
        %v1375 = vpack.c.bf16 %v1367, %v1367
        %v1376 = vperm.slane %v1247, 1
        %v1377 = vperm.slane %v1251, 1
        %v1378 = vperm.slane %v1255, 1
        %v1379 = vperm.slane %v1259, 1
        %v1382 = vrot.slane %v324, 2
        %v1383 = vrot.slane %v325, 2
        %vm1384 = vcmask 1045504
        %v1385 = vsel %vm1384, %v1382, %v1383
        %v1387 = vunpack.c.l.bf16 %v1385
        %v1388 = vunpack.c.h.bf16 %v1385
        %v1389 = vunpack.c.l.bf16 %v1376
        %v1390 = vunpack.c.l.bf16 %v1377
        %v1391 = vunpack.c.l.bf16 %v1378
        %v1392 = vunpack.c.l.bf16 %v1379
        %v1397 = vrot.slane %v1390, 4
        %v1398 = vrot.slane %v1392, 4
        %v1399 = vsel %vm372, %v1389, %v1397
        %v1400 = vsel %vm372, %v1391, %v1398
        %v1403 = vmul.f32 %v1387, %v1399
        %v1404 = vmul.f32 %v1388, %v1400
        %1407 = vst [vmem:[#allocation1] ss:$2 sm:$0xff] %v1403
        %s1408 = scalar_lea.vmem [#allocation1], 16
        %1409 = vst [vmem:[%s1408] ss:$2 sm:$0xff] %v1404
        %v1410 = vld.sshfl [vmem:[#allocation1] sm:$0xff pattern:$0x75316420]
        %v1411 = vld.sshfl [vmem:[#allocation1 + $0x8] sm:$0xff pattern:$0x75316420]
        %v1412 = vld.sshfl [vmem:[#allocation1 + $0x10] sm:$0xff pattern:$0x75316420]
        %v1413 = vld.sshfl [vmem:[#allocation1 + $0x18] sm:$0xff pattern:$0x75316420]
        %v1418 = vpack.c.bf16 %v1411, %v1410
        %v1419 = vpack.c.bf16 %v1413, %v1412
        %v1420 = vperm.slane %v1312, 1
        %v1421 = vperm.slane %v1316, 1
        %v1422 = vperm.slane %v1320, 1
        %v1423 = vperm.slane %v1324, 1
        %1424 = vrot.lane.b32.xlu0 %v324, 127
        %v1425 = vpop.permute.xlu0 %1424
        %1426 = vrot.lane.b32.xlu0 %v325, 127
        %v1427 = vpop.permute.xlu0 %1426
        %v1428 = vrot.slane %v1425, 2
        %v1429 = vrot.slane %v1427, 2
        %v1430 = vrot.slane %v1425, 4
        %v1431 = vrot.slane %v1427, 4
        %v1432 = vsel %vm1384, %v1428, %v1429
        %vm1433 = vcmask 1043456
        %v1434 = vsel %vm1433, %v1430, %v1431
        %vm1435 = vcmask 1039360
        %v1436 = vsel %vm1435, %v1432, %v1434
        %v1438 = vunpack.c.l.bf16 %v1436
        %v1439 = vunpack.c.h.bf16 %v1436
        %v1440 = vunpack.c.l.bf16 %v1420
        %v1441 = vunpack.c.l.bf16 %v1421
        %v1442 = vunpack.c.l.bf16 %v1422
        %v1443 = vunpack.c.l.bf16 %v1423
        %v1448 = vrot.slane %v1441, 4
        %v1449 = vrot.slane %v1443, 4
        %v1450 = vsel %vm372, %v1440, %v1448
        %v1451 = vsel %vm372, %v1442, %v1449
        %v1454 = vmul.f32 %v1438, %v1450
        %v1455 = vmul.f32 %v1439, %v1451
        %1458 = vst [vmem:[#allocation1] ss:$2 sm:$0xff] %v1454
        %s1459 = scalar_lea.vmem [#allocation1], 16
        %1460 = vst [vmem:[%s1459] ss:$2 sm:$0xff] %v1455
        %v1461 = vld.sshfl [vmem:[#allocation1] sm:$0xff pattern:$0x75316420]
        %v1462 = vld.sshfl [vmem:[#allocation1 + $0x8] sm:$0xff pattern:$0x75316420]
        %v1463 = vld.sshfl [vmem:[#allocation1 + $0x10] sm:$0xff pattern:$0x75316420]
        %v1464 = vld.sshfl [vmem:[#allocation1 + $0x18] sm:$0xff pattern:$0x75316420]
        %v1469 = vpack.c.bf16 %v1462, %v1461
        %v1470 = vpack.c.bf16 %v1464, %v1463
        %v1471 = vperm.slane %v1247, 2
        %v1472 = vperm.slane %v1251, 2
        %v1473 = vperm.slane %v1255, 2
        %v1474 = vperm.slane %v1259, 2
        %1475 = vrot.lane.b32.xlu0 %v324, 126
        %v1476 = vpop.permute.xlu0 %1475
        %1477 = vrot.lane.b32.xlu0 %v325, 126
        %v1478 = vpop.permute.xlu0 %1477
        %v1479 = vrot.slane %v1476, 2
        %v1480 = vrot.slane %v1478, 2
        %v1481 = vrot.slane %v1476, 4
        %v1482 = vrot.slane %v1478, 4
        %v1483 = vsel %vm1384, %v1479, %v1480
        %v1484 = vsel %vm1433, %v1481, %v1482
        %vm1485 = vcmask 1031168
        %v1486 = vsel %vm1485, %v1483, %v1484
        %v1488 = vunpack.c.l.bf16 %v1486
        %v1489 = vunpack.c.h.bf16 %v1486
        %v1490 = vunpack.c.l.bf16 %v1471
        %v1491 = vunpack.c.l.bf16 %v1472
        %v1492 = vunpack.c.l.bf16 %v1473
        %v1493 = vunpack.c.l.bf16 %v1474
        %v1498 = vrot.slane %v1491, 4
        %v1499 = vrot.slane %v1493, 4
        %v1500 = vsel %vm372, %v1490, %v1498
        %v1501 = vsel %vm372, %v1492, %v1499
        %v1504 = vmul.f32 %v1488, %v1500
        %v1505 = vmul.f32 %v1489, %v1501
        %1508 = vst [vmem:[#allocation1] ss:$2 sm:$0xff] %v1504
        %s1509 = scalar_lea.vmem [#allocation1], 16
        %1510 = vst [vmem:[%s1509] ss:$2 sm:$0xff] %v1505
        %v1511 = vld.sshfl [vmem:[#allocation1] sm:$0xff pattern:$0x75316420]
        %v1512 = vld.sshfl [vmem:[#allocation1 + $0x8] sm:$0xff pattern:$0x75316420]
        %v1513 = vld.sshfl [vmem:[#allocation1 + $0x10] sm:$0xff pattern:$0x75316420]
        %v1514 = vld.sshfl [vmem:[#allocation1 + $0x18] sm:$0xff pattern:$0x75316420]
        %v1519 = vpack.c.bf16 %v1512, %v1511
        %v1520 = vpack.c.bf16 %v1514, %v1513
        %v1521 = vperm.slane %v1312, 2
        %v1522 = vperm.slane %v1316, 2
        %v1523 = vperm.slane %v1320, 2
        %v1524 = vperm.slane %v1324, 2
        %1525 = vrot.lane.b32.xlu0 %v324, 120
        %v1526 = vpop.permute.xlu0 %1525
        %1527 = vrot.lane.b32.xlu0 %v325, 120
        %v1528 = vpop.permute.xlu0 %1527
        %v1529 = vrot.slane %v1526, 2
        %v1530 = vrot.slane %v1528, 2
        %v1531 = vrot.slane %v1526, 4
        %v1532 = vrot.slane %v1528, 4
        %v1533 = vsel %vm1384, %v1529, %v1530
        %v1534 = vsel %vm1433, %v1531, %v1532
        %vm1535 = vcmask 982016
        %v1536 = vsel %vm1535, %v1533, %v1534
        %v1538 = vunpack.c.l.bf16 %v1536
        %v1539 = vunpack.c.h.bf16 %v1536
        %v1540 = vunpack.c.l.bf16 %v1521
        %v1541 = vunpack.c.l.bf16 %v1522
        %v1542 = vunpack.c.l.bf16 %v1523
        %v1543 = vunpack.c.l.bf16 %v1524
        %v1548 = vrot.slane %v1541, 4
        %v1549 = vrot.slane %v1543, 4
        %v1550 = vsel %vm372, %v1540, %v1548
        %v1551 = vsel %vm372, %v1542, %v1549
        %v1554 = vmul.f32 %v1538, %v1550
        %v1555 = vmul.f32 %v1539, %v1551
        %1558 = vst [vmem:[#allocation1] ss:$2 sm:$0xff] %v1554
        %s1559 = scalar_lea.vmem [#allocation1], 16
        %1560 = vst [vmem:[%s1559] ss:$2 sm:$0xff] %v1555
        %v1561 = vld.sshfl [vmem:[#allocation1] sm:$0xff pattern:$0x75316420]
        %v1562 = vld.sshfl [vmem:[#allocation1 + $0x8] sm:$0xff pattern:$0x75316420]
        %v1563 = vld.sshfl [vmem:[#allocation1 + $0x10] sm:$0xff pattern:$0x75316420]
        %v1564 = vld.sshfl [vmem:[#allocation1 + $0x18] sm:$0xff pattern:$0x75316420]
        %v1569 = vpack.c.bf16 %v1562, %v1561
        %v1570 = vpack.c.bf16 %v1564, %v1563
        %v1571 = vperm.slane %v1247, 3
        %v1572 = vperm.slane %v1251, 3
        %v1573 = vperm.slane %v1255, 3
        %v1574 = vperm.slane %v1259, 3
        %1575 = vrot.lane.b32.xlu0 %v324, 119
        %v1576 = vpop.permute.xlu0 %1575
        %1577 = vrot.lane.b32.xlu0 %v325, 119
        %v1578 = vpop.permute.xlu0 %1577
        %v1579 = vrot.slane %v1576, 2
        %v1580 = vrot.slane %v1578, 2
        %v1581 = vrot.slane %v1576, 4
        %v1582 = vrot.slane %v1578, 4
        %v1583 = vsel %vm1384, %v1579, %v1580
        %v1584 = vsel %vm1433, %v1581, %v1582
        %vm1585 = vcmask 973824
        %v1586 = vsel %vm1585, %v1583, %v1584
        %v1588 = vunpack.c.l.bf16 %v1586
        %v1589 = vunpack.c.h.bf16 %v1586
        %v1590 = vunpack.c.l.bf16 %v1571
        %v1591 = vunpack.c.l.bf16 %v1572
        %v1592 = vunpack.c.l.bf16 %v1573
        %v1593 = vunpack.c.l.bf16 %v1574
        %v1598 = vrot.slane %v1591, 4
        %v1599 = vrot.slane %v1593, 4
        %v1600 = vsel %vm372, %v1590, %v1598
        %v1601 = vsel %vm372, %v1592, %v1599
        %v1604 = vmul.f32 %v1588, %v1600
        %v1605 = vmul.f32 %v1589, %v1601
        %1608 = vst [vmem:[#allocation1] ss:$2 sm:$0xff] %v1604
        %s1609 = scalar_lea.vmem [#allocation1], 16
        %1610 = vst [vmem:[%s1609] ss:$2 sm:$0xff] %v1605
        %v1611 = vld.sshfl [vmem:[#allocation1] sm:$0xff pattern:$0x75316420]
        %v1612 = vld.sshfl [vmem:[#allocation1 + $0x8] sm:$0xff pattern:$0x75316420]
        %v1613 = vld.sshfl [vmem:[#allocation1 + $0x10] sm:$0xff pattern:$0x75316420]
        %v1614 = vld.sshfl [vmem:[#allocation1 + $0x18] sm:$0xff pattern:$0x75316420]
        %v1619 = vpack.c.bf16 %v1612, %v1611
        %v1620 = vpack.c.bf16 %v1614, %v1613
        %v1621 = vperm.slane %v1312, 3
        %v1622 = vperm.slane %v1316, 3
        %v1623 = vperm.slane %v1320, 3
        %v1624 = vperm.slane %v1324, 3
        %1625 = vrot.lane.b32.xlu0 %v324, 118
        %v1626 = vpop.permute.xlu0 %1625
        %1627 = vrot.lane.b32.xlu0 %v325, 118
        %v1628 = vpop.permute.xlu0 %1627
        %v1629 = vrot.slane %v1626, 2
        %v1630 = vrot.slane %v1628, 2
        %v1631 = vrot.slane %v1626, 4
        %v1632 = vrot.slane %v1628, 4
        %v1633 = vsel %vm1384, %v1629, %v1630
        %v1634 = vsel %vm1433, %v1631, %v1632
        %vm1635 = vcmask 965632
        %v1636 = vsel %vm1635, %v1633, %v1634
        %v1638 = vunpack.c.l.bf16 %v1636
        %v1639 = vunpack.c.h.bf16 %v1636
        %v1640 = vunpack.c.l.bf16 %v1621
        %v1641 = vunpack.c.l.bf16 %v1622
        %v1642 = vunpack.c.l.bf16 %v1623
        %v1643 = vunpack.c.l.bf16 %v1624
        %v1648 = vrot.slane %v1641, 4
        %v1649 = vrot.slane %v1643, 4
        %v1650 = vsel %vm372, %v1640, %v1648
        %v1651 = vsel %vm372, %v1642, %v1649
        %v1654 = vmul.f32 %v1638, %v1650
        %v1655 = vmul.f32 %v1639, %v1651
        %1658 = vst [vmem:[#allocation1] ss:$2 sm:$0xff] %v1654
        %s1659 = scalar_lea.vmem [#allocation1], 16
        %1660 = vst [vmem:[%s1659] ss:$2 sm:$0xff] %v1655
        %v1661 = vld.sshfl [vmem:[#allocation1] sm:$0xff pattern:$0x75316420]
        %v1662 = vld.sshfl [vmem:[#allocation1 + $0x8] sm:$0xff pattern:$0x75316420]
        %v1663 = vld.sshfl [vmem:[#allocation1 + $0x10] sm:$0xff pattern:$0x75316420]
        %v1664 = vld.sshfl [vmem:[#allocation1 + $0x18] sm:$0xff pattern:$0x75316420]
        %v1669 = vpack.c.bf16 %v1662, %v1661
        %v1670 = vpack.c.bf16 %v1664, %v1663
        %v1673 = vunpack.c.l.b16 %v332
        %v1674 = vunpack.c.h.b16 %v332
        %v1675 = vunpack.c.l.b16 %v333
        %v1676 = vunpack.c.h.b16 %v333
        %v1677 = vpack.c.b16 %v1673, %v1673
        %v1678 = vpack.c.b16 %v1674, %v1674
        %v1679 = vpack.c.b16 %v1675, %v1675
        %v1680 = vpack.c.b16 %v1676, %v1676
        %v1682 = vpack.i.b16 %v1677, %v1677
        %v1684 = vperm.slane %v1682, 0
        %v1686 = vpack.i.b16 %v1678, %v1678
        %v1688 = vperm.slane %v1686, 0
        %v1690 = vpack.i.b16 %v1679, %v1679
        %v1692 = vperm.slane %v1690, 0
        %v1694 = vpack.i.b16 %v1680, %v1680
        %v1696 = vperm.slane %v1694, 0
        %1697 = vrot.lane.b32.xlu0 %v324, 112
        %v1698 = vpop.permute.xlu0 %1697
        %1699 = vrot.lane.b32.xlu0 %v325, 112
        %v1700 = vpop.permute.xlu0 %1699
        %v1701 = vrot.slane %v1698, 2
        %v1702 = vrot.slane %v1700, 2
        %v1703 = vrot.slane %v1698, 4
        %v1704 = vrot.slane %v1700, 4
        %v1705 = vsel %vm1384, %v1701, %v1702
        %v1706 = vsel %vm1433, %v1703, %v1704
        %vm1707 = vcmask 916480
        %v1708 = vsel %vm1707, %v1705, %v1706
        %v1710 = vunpack.c.l.bf16 %v1708
        %v1711 = vunpack.c.h.bf16 %v1708
        %v1712 = vunpack.c.l.bf16 %v1684
        %v1713 = vunpack.c.l.bf16 %v1688
        %v1714 = vunpack.c.l.bf16 %v1692
        %v1715 = vunpack.c.l.bf16 %v1696
        %v1720 = vrot.slane %v1713, 4
        %v1721 = vrot.slane %v1715, 4
        %v1722 = vsel %vm372, %v1712, %v1720
        %v1723 = vsel %vm372, %v1714, %v1721
        %v1726 = vmul.f32 %v1710, %v1722
        %v1727 = vmul.f32 %v1711, %v1723
        %1730 = vst [vmem:[#allocation1] ss:$2 sm:$0xff] %v1726
        %s1731 = scalar_lea.vmem [#allocation1], 16
        %1732 = vst [vmem:[%s1731] ss:$2 sm:$0xff] %v1727
        %v1733 = vld.sshfl [vmem:[#allocation1] sm:$0xff pattern:$0x75316420]
        %v1734 = vld.sshfl [vmem:[#allocation1 + $0x8] sm:$0xff pattern:$0x75316420]
        %v1735 = vld.sshfl [vmem:[#allocation1 + $0x10] sm:$0xff pattern:$0x75316420]
        %v1736 = vld.sshfl [vmem:[#allocation1 + $0x18] sm:$0xff pattern:$0x75316420]
        %v1741 = vpack.c.bf16 %v1734, %v1733
        %v1742 = vpack.c.bf16 %v1736, %v1735
        %v1743 = vshrl.u32 %v1677, 16
        %v1744 = vpack.i.b16 %v1743, %v1743
        %v1746 = vperm.slane %v1744, 0
        %v1747 = vshrl.u32 %v1678, 16
        %v1748 = vpack.i.b16 %v1747, %v1747
        %v1750 = vperm.slane %v1748, 0
        %v1751 = vshrl.u32 %v1679, 16
        %v1752 = vpack.i.b16 %v1751, %v1751
        %v1754 = vperm.slane %v1752, 0
        %v1755 = vshrl.u32 %v1680, 16
        %v1756 = vpack.i.b16 %v1755, %v1755
        %v1758 = vperm.slane %v1756, 0
        %1759 = vrot.lane.b32.xlu0 %v324, 111
        %v1760 = vpop.permute.xlu0 %1759
        %1761 = vrot.lane.b32.xlu0 %v325, 111
        %v1762 = vpop.permute.xlu0 %1761
        %v1763 = vrot.slane %v1760, 2
        %v1764 = vrot.slane %v1762, 2
        %v1765 = vrot.slane %v1760, 4
        %v1766 = vrot.slane %v1762, 4
        %v1767 = vsel %vm1384, %v1763, %v1764
        %v1768 = vsel %vm1433, %v1765, %v1766
        %vm1769 = vcmask 908288
        %v1770 = vsel %vm1769, %v1767, %v1768
        %v1772 = vunpack.c.l.bf16 %v1770
        %v1773 = vunpack.c.h.bf16 %v1770
        %v1774 = vunpack.c.l.bf16 %v1746
        %v1775 = vunpack.c.l.bf16 %v1750
        %v1776 = vunpack.c.l.bf16 %v1754
        %v1777 = vunpack.c.l.bf16 %v1758
        %v1782 = vrot.slane %v1775, 4
        %v1783 = vrot.slane %v1777, 4
        %v1784 = vsel %vm372, %v1774, %v1782
        %v1785 = vsel %vm372, %v1776, %v1783
        %v1788 = vmul.f32 %v1772, %v1784
        %v1789 = vmul.f32 %v1773, %v1785
        %1792 = vst [vmem:[#allocation1] ss:$2 sm:$0xff] %v1788
        %s1793 = scalar_lea.vmem [#allocation1], 16
        %1794 = vst [vmem:[%s1793] ss:$2 sm:$0xff] %v1789
        %v1795 = vld.sshfl [vmem:[#allocation1] sm:$0xff pattern:$0x75316420]
        %v1796 = vld.sshfl [vmem:[#allocation1 + $0x8] sm:$0xff pattern:$0x75316420]
        %v1797 = vld.sshfl [vmem:[#allocation1 + $0x10] sm:$0xff pattern:$0x75316420]
        %v1798 = vld.sshfl [vmem:[#allocation1 + $0x18] sm:$0xff pattern:$0x75316420]
        %v1803 = vpack.c.bf16 %v1796, %v1795
        %v1804 = vpack.c.bf16 %v1798, %v1797
        %v1805 = vperm.slane %v1682, 1
        %v1806 = vperm.slane %v1686, 1
        %v1807 = vperm.slane %v1690, 1
        %v1808 = vperm.slane %v1694, 1
        %1809 = vrot.lane.b32.xlu0 %v324, 110
        %v1810 = vpop.permute.xlu0 %1809
        %1811 = vrot.lane.b32.xlu0 %v325, 110
        %v1812 = vpop.permute.xlu0 %1811
        %v1813 = vrot.slane %v1810, 2
        %v1814 = vrot.slane %v1812, 2
        %v1815 = vrot.slane %v1810, 4
        %v1816 = vrot.slane %v1812, 4
        %v1817 = vsel %vm1384, %v1813, %v1814
        %v1818 = vsel %vm1433, %v1815, %v1816
        %vm1819 = vcmask 900096
        %v1820 = vsel %vm1819, %v1817, %v1818
        %v1822 = vunpack.c.l.bf16 %v1820
        %v1823 = vunpack.c.h.bf16 %v1820
        %v1824 = vunpack.c.l.bf16 %v1805
        %v1825 = vunpack.c.l.bf16 %v1806
        %v1826 = vunpack.c.l.bf16 %v1807
        %v1827 = vunpack.c.l.bf16 %v1808
        %v1832 = vrot.slane %v1825, 4
        %v1833 = vrot.slane %v1827, 4
        %v1834 = vsel %vm372, %v1824, %v1832
        %v1835 = vsel %vm372, %v1826, %v1833
        %v1838 = vmul.f32 %v1822, %v1834
        %v1839 = vmul.f32 %v1823, %v1835
        %1842 = vst [vmem:[#allocation1] ss:$2 sm:$0xff] %v1838
        %s1843 = scalar_lea.vmem [#allocation1], 16
        %1844 = vst [vmem:[%s1843] ss:$2 sm:$0xff] %v1839
        %v1845 = vld.sshfl [vmem:[#allocation1] sm:$0xff pattern:$0x75316420]
        %v1846 = vld.sshfl [vmem:[#allocation1 + $0x8] sm:$0xff pattern:$0x75316420]
        %v1847 = vld.sshfl [vmem:[#allocation1 + $0x10] sm:$0xff pattern:$0x75316420]
        %v1848 = vld.sshfl [vmem:[#allocation1 + $0x18] sm:$0xff pattern:$0x75316420]
        %v1853 = vpack.c.bf16 %v1846, %v1845
        %v1854 = vpack.c.bf16 %v1848, %v1847
        %v1857 = vunpack.c.l.b16 %v392
        %v1858 = vunpack.c.h.b16 %v392
        %v1859 = vunpack.c.l.b16 %v393
        %v1860 = vunpack.c.h.b16 %v393
        %v1861 = vpack.c.b16 %v1857, %v1857
        %v1862 = vpack.c.b16 %v1858, %v1858
        %v1863 = vpack.c.b16 %v1859, %v1859
        %v1864 = vpack.c.b16 %v1860, %v1860
        %v1868 = vunpack.c.l.b16 %v457
        %v1869 = vunpack.c.h.b16 %v457
        %v1870 = vunpack.c.l.b16 %v458
        %v1871 = vunpack.c.h.b16 %v458
        %v1872 = vunpack.c.l.b16 %v459
        %v1873 = vpack.c.b16 %v1868, %v1868
        %v1874 = vpack.c.b16 %v1869, %v1869
        %v1875 = vpack.c.b16 %v1870, %v1870
        %v1876 = vpack.c.b16 %v1871, %v1871
        %v1877 = vpack.c.b16 %v1872, %v1872
        %v1878 = vrot.slane %v1873, 6
        %v1879 = vrot.slane %v1874, 6
        %v1880 = vrot.slane %v1875, 6
        %v1881 = vrot.slane %v1876, 6
        %v1882 = vrot.slane %v1877, 6
        %1883 = vrot.lane.b32.xlu0 %v1878, 127
        %v1884 = vpop.permute.xlu0 %1883
        %1885 = vrot.lane.b32.xlu0 %v1879, 127
        %v1886 = vpop.permute.xlu0 %1885
        %1887 = vrot.lane.b32.xlu0 %v1880, 127
        %v1888 = vpop.permute.xlu0 %1887
        %1889 = vrot.lane.b32.xlu0 %v1881, 127
        %v1890 = vpop.permute.xlu0 %1889
        %1891 = vrot.lane.b32.xlu0 %v1882, 127
        %v1892 = vpop.permute.xlu0 %1891
        %v1893 = vsel %vm1435, %v1884, %v1886
        %v1894 = vsel %vm1435, %v1886, %v1888
        %v1895 = vsel %vm1435, %v1888, %v1890
        %v1896 = vsel %vm1435, %v1890, %v1892
        %v1900 = vunpack.c.l.b16 %v510
        %v1901 = vunpack.c.h.b16 %v510
        %v1902 = vunpack.c.l.b16 %v511
        %v1903 = vunpack.c.h.b16 %v511
        %v1904 = vunpack.c.l.b16 %v512
        %v1905 = vpack.c.b16 %v1900, %v1900
        %v1906 = vpack.c.b16 %v1901, %v1901
        %v1907 = vpack.c.b16 %v1902, %v1902
        %v1908 = vpack.c.b16 %v1903, %v1903
        %v1909 = vpack.c.b16 %v1904, %v1904
        %1910 = vrot.lane.b32.xlu0 %v1905, 126
        %v1911 = vpop.permute.xlu0 %1910
        %1912 = vrot.lane.b32.xlu0 %v1906, 126
        %v1913 = vpop.permute.xlu0 %1912
        %1914 = vrot.lane.b32.xlu0 %v1907, 126
        %v1915 = vpop.permute.xlu0 %1914
        %1916 = vrot.lane.b32.xlu0 %v1908, 126
        %v1917 = vpop.permute.xlu0 %1916
        %1918 = vrot.lane.b32.xlu0 %v1909, 126
        %v1919 = vpop.permute.xlu0 %1918
        %v1920 = vsel %vm1485, %v1911, %v1913
        %v1921 = vsel %vm1485, %v1913, %v1915
        %v1922 = vsel %vm1485, %v1915, %v1917
        %v1923 = vsel %vm1485, %v1917, %v1919
        %v1927 = vunpack.c.l.b16 %v563
        %v1928 = vunpack.c.h.b16 %v563
        %v1929 = vunpack.c.l.b16 %v564
        %v1930 = vunpack.c.h.b16 %v564
        %v1931 = vunpack.c.l.b16 %v565
        %v1932 = vpack.c.b16 %v1927, %v1927
        %v1933 = vpack.c.b16 %v1928, %v1928
        %v1934 = vpack.c.b16 %v1929, %v1929
        %v1935 = vpack.c.b16 %v1930, %v1930
        %v1936 = vpack.c.b16 %v1931, %v1931
        %v1937 = vrot.slane %v1932, 2
        %v1938 = vrot.slane %v1933, 2
        %v1939 = vrot.slane %v1934, 2
        %v1940 = vrot.slane %v1935, 2
        %v1941 = vrot.slane %v1936, 2
        %1942 = vrot.lane.b32.xlu0 %v1937, 120
        %v1943 = vpop.permute.xlu0 %1942
        %1944 = vrot.lane.b32.xlu0 %v1938, 120
        %v1945 = vpop.permute.xlu0 %1944
        %1946 = vrot.lane.b32.xlu0 %v1939, 120
        %v1947 = vpop.permute.xlu0 %1946
        %1948 = vrot.lane.b32.xlu0 %v1940, 120
        %v1949 = vpop.permute.xlu0 %1948
        %1950 = vrot.lane.b32.xlu0 %v1941, 120
        %v1951 = vpop.permute.xlu0 %1950
        %v1952 = vsel %vm1535, %v1943, %v1945
        %v1953 = vsel %vm1535, %v1945, %v1947
        %v1954 = vsel %vm1535, %v1947, %v1949
        %v1955 = vsel %vm1535, %v1949, %v1951
        %v1959 = vunpack.c.l.b16 %v616
        %v1960 = vunpack.c.h.b16 %v616
        %v1961 = vunpack.c.l.b16 %v617
        %v1962 = vunpack.c.h.b16 %v617
        %v1963 = vunpack.c.l.b16 %v618
        %v1964 = vpack.c.b16 %v1959, %v1959
        %v1965 = vpack.c.b16 %v1960, %v1960
        %v1966 = vpack.c.b16 %v1961, %v1961
        %v1967 = vpack.c.b16 %v1962, %v1962
        %v1968 = vpack.c.b16 %v1963, %v1963
        %1969 = vrot.lane.b32.xlu0 %v1964, 119
        %v1970 = vpop.permute.xlu0 %1969
        %1971 = vrot.lane.b32.xlu0 %v1965, 119
        %v1972 = vpop.permute.xlu0 %1971
        %1973 = vrot.lane.b32.xlu0 %v1966, 119
        %v1974 = vpop.permute.xlu0 %1973
        %1975 = vrot.lane.b32.xlu0 %v1967, 119
        %v1976 = vpop.permute.xlu0 %1975
        %1977 = vrot.lane.b32.xlu0 %v1968, 119
        %v1978 = vpop.permute.xlu0 %1977
        %v1979 = vsel %vm1585, %v1970, %v1972
        %v1980 = vsel %vm1585, %v1972, %v1974
        %v1981 = vsel %vm1585, %v1974, %v1976
        %v1982 = vsel %vm1585, %v1976, %v1978
        %v1986 = vunpack.c.l.b16 %v669
        %v1987 = vunpack.c.h.b16 %v669
        %v1988 = vunpack.c.l.b16 %v670
        %v1989 = vunpack.c.h.b16 %v670
        %v1990 = vunpack.c.l.b16 %v671
        %v1991 = vpack.c.b16 %v1986, %v1986
        %v1992 = vpack.c.b16 %v1987, %v1987
        %v1993 = vpack.c.b16 %v1988, %v1988
        %v1994 = vpack.c.b16 %v1989, %v1989
        %v1995 = vpack.c.b16 %v1990, %v1990
        %v1996 = vrot.slane %v1991, 6
        %v1997 = vrot.slane %v1992, 6
        %v1998 = vrot.slane %v1993, 6
        %v1999 = vrot.slane %v1994, 6
        %v2000 = vrot.slane %v1995, 6
        %2001 = vrot.lane.b32.xlu0 %v1996, 118
        %v2002 = vpop.permute.xlu0 %2001
        %2003 = vrot.lane.b32.xlu0 %v1997, 118
        %v2004 = vpop.permute.xlu0 %2003
        %2005 = vrot.lane.b32.xlu0 %v1998, 118
        %v2006 = vpop.permute.xlu0 %2005
        %2007 = vrot.lane.b32.xlu0 %v1999, 118
        %v2008 = vpop.permute.xlu0 %2007
        %2009 = vrot.lane.b32.xlu0 %v2000, 118
        %v2010 = vpop.permute.xlu0 %2009
        %v2011 = vsel %vm1635, %v2002, %v2004
        %v2012 = vsel %vm1635, %v2004, %v2006
        %v2013 = vsel %vm1635, %v2006, %v2008
        %v2014 = vsel %vm1635, %v2008, %v2010
        %v2018 = vunpack.c.l.b16 %v722
        %v2019 = vunpack.c.h.b16 %v722
        %v2020 = vunpack.c.l.b16 %v723
        %v2021 = vunpack.c.h.b16 %v723
        %v2022 = vunpack.c.l.b16 %v724
        %v2023 = vpack.c.b16 %v2018, %v2018
        %v2024 = vpack.c.b16 %v2019, %v2019
        %v2025 = vpack.c.b16 %v2020, %v2020
        %v2026 = vpack.c.b16 %v2021, %v2021
        %v2027 = vpack.c.b16 %v2022, %v2022
        %2028 = vrot.lane.b32.xlu0 %v2023, 112
        %v2029 = vpop.permute.xlu0 %2028
        %2030 = vrot.lane.b32.xlu0 %v2024, 112
        %v2031 = vpop.permute.xlu0 %2030
        %2032 = vrot.lane.b32.xlu0 %v2025, 112
        %v2033 = vpop.permute.xlu0 %2032
        %2034 = vrot.lane.b32.xlu0 %v2026, 112
        %v2035 = vpop.permute.xlu0 %2034
        %2036 = vrot.lane.b32.xlu0 %v2027, 112
        %v2037 = vpop.permute.xlu0 %2036
        %v2038 = vsel %vm1707, %v2029, %v2031
        %v2039 = vsel %vm1707, %v2031, %v2033
        %v2040 = vsel %vm1707, %v2033, %v2035
        %v2041 = vsel %vm1707, %v2035, %v2037
        %v2045 = vunpack.c.l.b16 %v775
        %v2046 = vunpack.c.h.b16 %v775
        %v2047 = vunpack.c.l.b16 %v776
        %v2048 = vunpack.c.h.b16 %v776
        %v2049 = vunpack.c.l.b16 %v777
        %v2050 = vpack.c.b16 %v2045, %v2045
        %v2051 = vpack.c.b16 %v2046, %v2046
        %v2052 = vpack.c.b16 %v2047, %v2047
        %v2053 = vpack.c.b16 %v2048, %v2048
        %v2054 = vpack.c.b16 %v2049, %v2049
        %v2055 = vrot.slane %v2050, 2
        %v2056 = vrot.slane %v2051, 2
        %v2057 = vrot.slane %v2052, 2
        %v2058 = vrot.slane %v2053, 2
        %v2059 = vrot.slane %v2054, 2
        %2060 = vrot.lane.b32.xlu0 %v2055, 111
        %v2061 = vpop.permute.xlu0 %2060
        %2062 = vrot.lane.b32.xlu0 %v2056, 111
        %v2063 = vpop.permute.xlu0 %2062
        %2064 = vrot.lane.b32.xlu0 %v2057, 111
        %v2065 = vpop.permute.xlu0 %2064
        %2066 = vrot.lane.b32.xlu0 %v2058, 111
        %v2067 = vpop.permute.xlu0 %2066
        %2068 = vrot.lane.b32.xlu0 %v2059, 111
        %v2069 = vpop.permute.xlu0 %2068
        %v2070 = vsel %vm1769, %v2061, %v2063
        %v2071 = vsel %vm1769, %v2063, %v2065
        %v2072 = vsel %vm1769, %v2065, %v2067
        %v2073 = vsel %vm1769, %v2067, %v2069
        %v2077 = vunpack.c.l.b16 %v850
        %v2078 = vunpack.c.h.b16 %v850
        %v2079 = vunpack.c.l.b16 %v851
        %v2080 = vunpack.c.h.b16 %v851
        %v2081 = vunpack.c.l.b16 %v852
        %v2082 = vpack.c.b16 %v2077, %v2077
        %v2083 = vpack.c.b16 %v2078, %v2078
        %v2084 = vpack.c.b16 %v2079, %v2079
        %v2085 = vpack.c.b16 %v2080, %v2080
        %v2086 = vpack.c.b16 %v2081, %v2081
        %2087 = vrot.lane.b32.xlu0 %v2082, 110
        %v2088 = vpop.permute.xlu0 %2087
        %2089 = vrot.lane.b32.xlu0 %v2083, 110
        %v2090 = vpop.permute.xlu0 %2089
        %2091 = vrot.lane.b32.xlu0 %v2084, 110
        %v2092 = vpop.permute.xlu0 %2091
        %2093 = vrot.lane.b32.xlu0 %v2085, 110
        %v2094 = vpop.permute.xlu0 %2093
        %2095 = vrot.lane.b32.xlu0 %v2086, 110
        %v2096 = vpop.permute.xlu0 %2095
        %v2097 = vsel %vm1819, %v2088, %v2090
        %v2098 = vsel %vm1819, %v2090, %v2092
        %v2099 = vsel %vm1819, %v2092, %v2094
        %v2100 = vsel %vm1819, %v2094, %v2096
        %v2104 = vunpack.c.l.b16 %v915
        %v2105 = vunpack.c.h.b16 %v915
        %v2106 = vunpack.c.l.b16 %v916
        %v2107 = vunpack.c.h.b16 %v916
        %v2108 = vunpack.c.l.b16 %v917
        %v2109 = vpack.c.b16 %v2104, %v2104
        %v2110 = vpack.c.b16 %v2105, %v2105
        %v2111 = vpack.c.b16 %v2106, %v2106
        %v2112 = vpack.c.b16 %v2107, %v2107
        %v2113 = vpack.c.b16 %v2108, %v2108
        %v2114 = vrot.slane %v2109, 6
        %v2115 = vrot.slane %v2110, 6
        %v2116 = vrot.slane %v2111, 6
        %v2117 = vrot.slane %v2112, 6
        %v2118 = vrot.slane %v2113, 6
        %2119 = vrot.lane.b32.xlu0 %v2114, 64
        %v2120 = vpop.permute.xlu0 %2119
        %2121 = vrot.lane.b32.xlu0 %v2115, 64
        %v2122 = vpop.permute.xlu0 %2121
        %2123 = vrot.lane.b32.xlu0 %v2116, 64
        %v2124 = vpop.permute.xlu0 %2123
        %2125 = vrot.lane.b32.xlu0 %v2117, 64
        %v2126 = vpop.permute.xlu0 %2125
        %2127 = vrot.lane.b32.xlu0 %v2118, 64
        %v2128 = vpop.permute.xlu0 %2127
        %vm2129 = vcmask 523264
        %v2130 = vsel %vm2129, %v2120, %v2122
        %v2131 = vsel %vm2129, %v2122, %v2124
        %v2132 = vsel %vm2129, %v2124, %v2126
        %v2133 = vsel %vm2129, %v2126, %v2128
        %v2137 = vunpack.c.l.b16 %v968
        %v2138 = vunpack.c.h.b16 %v968
        %v2139 = vunpack.c.l.b16 %v969
        %v2140 = vunpack.c.h.b16 %v969
        %v2141 = vunpack.c.l.b16 %v970
        %v2142 = vpack.c.b16 %v2137, %v2137
        %v2143 = vpack.c.b16 %v2138, %v2138
        %v2144 = vpack.c.b16 %v2139, %v2139
        %v2145 = vpack.c.b16 %v2140, %v2140
        %v2146 = vpack.c.b16 %v2141, %v2141
        %2147 = vrot.lane.b32.xlu0 %v2142, 63
        %v2148 = vpop.permute.xlu0 %2147
        %2149 = vrot.lane.b32.xlu0 %v2143, 63
        %v2150 = vpop.permute.xlu0 %2149
        %2151 = vrot.lane.b32.xlu0 %v2144, 63
        %v2152 = vpop.permute.xlu0 %2151
        %2153 = vrot.lane.b32.xlu0 %v2145, 63
        %v2154 = vpop.permute.xlu0 %2153
        %2155 = vrot.lane.b32.xlu0 %v2146, 63
        %v2156 = vpop.permute.xlu0 %2155
        %vm2157 = vcmask 515072
        %v2158 = vsel %vm2157, %v2148, %v2150
        %v2159 = vsel %vm2157, %v2150, %v2152
        %v2160 = vsel %vm2157, %v2152, %v2154
        %v2161 = vsel %vm2157, %v2154, %v2156
        %v2165 = vunpack.c.l.b16 %v1021
        %v2166 = vunpack.c.h.b16 %v1021
        %v2167 = vunpack.c.l.b16 %v1022
        %v2168 = vunpack.c.h.b16 %v1022
        %v2169 = vunpack.c.l.b16 %v1023
        %v2170 = vpack.c.b16 %v2165, %v2165
        %v2171 = vpack.c.b16 %v2166, %v2166
        %v2172 = vpack.c.b16 %v2167, %v2167
        %v2173 = vpack.c.b16 %v2168, %v2168
        %v2174 = vpack.c.b16 %v2169, %v2169
        %v2175 = vrot.slane %v2170, 2
        %v2176 = vrot.slane %v2171, 2
        %v2177 = vrot.slane %v2172, 2
        %v2178 = vrot.slane %v2173, 2
        %v2179 = vrot.slane %v2174, 2
        %2180 = vrot.lane.b32.xlu0 %v2175, 62
        %v2181 = vpop.permute.xlu0 %2180
        %2182 = vrot.lane.b32.xlu0 %v2176, 62
        %v2183 = vpop.permute.xlu0 %2182
        %2184 = vrot.lane.b32.xlu0 %v2177, 62
        %v2185 = vpop.permute.xlu0 %2184
        %2186 = vrot.lane.b32.xlu0 %v2178, 62
        %v2187 = vpop.permute.xlu0 %2186
        %2188 = vrot.lane.b32.xlu0 %v2179, 62
        %v2189 = vpop.permute.xlu0 %2188
        %vm2190 = vcmask 506880
        %v2191 = vsel %vm2190, %v2181, %v2183
        %v2192 = vsel %vm2190, %v2183, %v2185
        %v2193 = vsel %vm2190, %v2185, %v2187
        %v2194 = vsel %vm2190, %v2187, %v2189
        %v2198 = vunpack.c.l.b16 %v1074
        %v2199 = vunpack.c.h.b16 %v1074
        %v2200 = vunpack.c.l.b16 %v1075
        %v2201 = vunpack.c.h.b16 %v1075
        %v2202 = vunpack.c.l.b16 %v1076
        %v2203 = vpack.c.b16 %v2198, %v2198
        %v2204 = vpack.c.b16 %v2199, %v2199
        %v2205 = vpack.c.b16 %v2200, %v2200
        %v2206 = vpack.c.b16 %v2201, %v2201
        %v2207 = vpack.c.b16 %v2202, %v2202
        %2208 = vrot.lane.b32.xlu0 %v2203, 56
        %v2209 = vpop.permute.xlu0 %2208
        %2210 = vrot.lane.b32.xlu0 %v2204, 56
        %v2211 = vpop.permute.xlu0 %2210
        %2212 = vrot.lane.b32.xlu0 %v2205, 56
        %v2213 = vpop.permute.xlu0 %2212
        %2214 = vrot.lane.b32.xlu0 %v2206, 56
        %v2215 = vpop.permute.xlu0 %2214
        %2216 = vrot.lane.b32.xlu0 %v2207, 56
        %v2217 = vpop.permute.xlu0 %2216
        %vm2218 = vcmask 457728
        %v2219 = vsel %vm2218, %v2209, %v2211
        %v2220 = vsel %vm2218, %v2211, %v2213
        %v2221 = vsel %vm2218, %v2213, %v2215
        %v2222 = vsel %vm2218, %v2215, %v2217
        %v2226 = vunpack.c.l.b16 %v1127
        %v2227 = vunpack.c.h.b16 %v1127
        %v2228 = vunpack.c.l.b16 %v1128
        %v2229 = vunpack.c.h.b16 %v1128
        %v2230 = vunpack.c.l.b16 %v1129
        %v2231 = vpack.c.b16 %v2226, %v2226
        %v2232 = vpack.c.b16 %v2227, %v2227
        %v2233 = vpack.c.b16 %v2228, %v2228
        %v2234 = vpack.c.b16 %v2229, %v2229
        %v2235 = vpack.c.b16 %v2230, %v2230
        %v2236 = vrot.slane %v2231, 6
        %v2237 = vrot.slane %v2232, 6
        %v2238 = vrot.slane %v2233, 6
        %v2239 = vrot.slane %v2234, 6
        %v2240 = vrot.slane %v2235, 6
        %2241 = vrot.lane.b32.xlu0 %v2236, 55
        %v2242 = vpop.permute.xlu0 %2241
        %2243 = vrot.lane.b32.xlu0 %v2237, 55
        %v2244 = vpop.permute.xlu0 %2243
        %2245 = vrot.lane.b32.xlu0 %v2238, 55
        %v2246 = vpop.permute.xlu0 %2245
        %2247 = vrot.lane.b32.xlu0 %v2239, 55
        %v2248 = vpop.permute.xlu0 %2247
        %2249 = vrot.lane.b32.xlu0 %v2240, 55
        %v2250 = vpop.permute.xlu0 %2249
        %vm2251 = vcmask 449536
        %v2252 = vsel %vm2251, %v2242, %v2244
        %v2253 = vsel %vm2251, %v2244, %v2246
        %v2254 = vsel %vm2251, %v2246, %v2248
        %v2255 = vsel %vm2251, %v2248, %v2250
        %v2259 = vunpack.c.l.b16 %v1180
        %v2260 = vunpack.c.h.b16 %v1180
        %v2261 = vunpack.c.l.b16 %v1181
        %v2262 = vunpack.c.h.b16 %v1181
        %v2263 = vunpack.c.l.b16 %v1182
        %v2264 = vpack.c.b16 %v2259, %v2259
        %v2265 = vpack.c.b16 %v2260, %v2260
        %v2266 = vpack.c.b16 %v2261, %v2261
        %v2267 = vpack.c.b16 %v2262, %v2262
        %v2268 = vpack.c.b16 %v2263, %v2263
        %2269 = vrot.lane.b32.xlu0 %v2264, 54
        %v2270 = vpop.permute.xlu0 %2269
        %2271 = vrot.lane.b32.xlu0 %v2265, 54
        %v2272 = vpop.permute.xlu0 %2271
        %2273 = vrot.lane.b32.xlu0 %v2266, 54
        %v2274 = vpop.permute.xlu0 %2273
        %2275 = vrot.lane.b32.xlu0 %v2267, 54
        %v2276 = vpop.permute.xlu0 %2275
        %2277 = vrot.lane.b32.xlu0 %v2268, 54
        %v2278 = vpop.permute.xlu0 %2277
        %vm2279 = vcmask 441344
        %v2280 = vsel %vm2279, %v2270, %v2272
        %v2281 = vsel %vm2279, %v2272, %v2274
        %v2282 = vsel %vm2279, %v2274, %v2276
        %v2283 = vsel %vm2279, %v2276, %v2278
        %v2287 = vunpack.c.l.b16 %v1233
        %v2288 = vunpack.c.h.b16 %v1233
        %v2289 = vunpack.c.l.b16 %v1234
        %v2290 = vunpack.c.h.b16 %v1234
        %v2291 = vunpack.c.l.b16 %v1235
        %v2292 = vpack.c.b16 %v2287, %v2287
        %v2293 = vpack.c.b16 %v2288, %v2288
        %v2294 = vpack.c.b16 %v2289, %v2289
        %v2295 = vpack.c.b16 %v2290, %v2290
        %v2296 = vpack.c.b16 %v2291, %v2291
        %v2297 = vrot.slane %v2292, 2
        %v2298 = vrot.slane %v2293, 2
        %v2299 = vrot.slane %v2294, 2
        %v2300 = vrot.slane %v2295, 2
        %v2301 = vrot.slane %v2296, 2
        %2302 = vrot.lane.b32.xlu0 %v2297, 48
        %v2303 = vpop.permute.xlu0 %2302
        %2304 = vrot.lane.b32.xlu0 %v2298, 48
        %v2305 = vpop.permute.xlu0 %2304
        %2306 = vrot.lane.b32.xlu0 %v2299, 48
        %v2307 = vpop.permute.xlu0 %2306
        %2308 = vrot.lane.b32.xlu0 %v2300, 48
        %v2309 = vpop.permute.xlu0 %2308
        %2310 = vrot.lane.b32.xlu0 %v2301, 48
        %v2311 = vpop.permute.xlu0 %2310
        %vm2312 = vcmask 392192
        %v2313 = vsel %vm2312, %v2303, %v2305
        %v2314 = vsel %vm2312, %v2305, %v2307
        %v2315 = vsel %vm2312, %v2307, %v2309
        %v2316 = vsel %vm2312, %v2309, %v2311
        %vm2317 = vcmask 1041408
        %v2320 = vsel %vm2317, %v1861, %v1893
        %v2323 = vsel %vm2317, %v1862, %v1894
        %v2326 = vsel %vm2317, %v1863, %v1895
        %v2329 = vsel %vm2317, %v1864, %v1896
        %v2331 = vsel %vm372, %v2320, %v1920
        %v2333 = vsel %vm372, %v2323, %v1921
        %v2335 = vsel %vm372, %v2326, %v1922
        %v2337 = vsel %vm372, %v2329, %v1923
        %vm2338 = vcmask 1045504
        %v2340 = vsel %vm2338, %v2331, %v1952
        %v2343 = vsel %vm2338, %v2333, %v1953
        %v2346 = vsel %vm2338, %v2335, %v1954
        %v2349 = vsel %vm2338, %v2337, %v1955
        %v2353 = vsel %vm2317, %v1979, %v2011
        %v2356 = vsel %vm2317, %v1980, %v2012
        %v2359 = vsel %vm2317, %v1981, %v2013
        %v2362 = vsel %vm2317, %v1982, %v2014
        %v2364 = vsel %vm372, %v2353, %v2038
        %v2366 = vsel %vm372, %v2356, %v2039
        %v2368 = vsel %vm372, %v2359, %v2040
        %v2370 = vsel %vm372, %v2362, %v2041
        %v2372 = vsel %vm2338, %v2364, %v2070
        %v2375 = vsel %vm2338, %v2366, %v2071
        %v2378 = vsel %vm2338, %v2368, %v2072
        %v2381 = vsel %vm2338, %v2370, %v2073
        %v2385 = vsel %vm2317, %v2097, %v2130
        %v2388 = vsel %vm2317, %v2098, %v2131
        %v2391 = vsel %vm2317, %v2099, %v2132
        %v2394 = vsel %vm2317, %v2100, %v2133
        %v2396 = vsel %vm372, %v2385, %v2158
        %v2398 = vsel %vm372, %v2388, %v2159
        %v2400 = vsel %vm372, %v2391, %v2160
        %v2402 = vsel %vm372, %v2394, %v2161
        %v2404 = vsel %vm2338, %v2396, %v2191
        %v2407 = vsel %vm2338, %v2398, %v2192
        %v2410 = vsel %vm2338, %v2400, %v2193
        %v2413 = vsel %vm2338, %v2402, %v2194
        %v2417 = vsel %vm2317, %v2219, %v2252
        %v2420 = vsel %vm2317, %v2220, %v2253
        %v2423 = vsel %vm2317, %v2221, %v2254
        %v2426 = vsel %vm2317, %v2222, %v2255
        %v2428 = vsel %vm372, %v2417, %v2280
        %v2430 = vsel %vm372, %v2420, %v2281
        %v2432 = vsel %vm372, %v2423, %v2282
        %v2434 = vsel %vm372, %v2426, %v2283
        %v2436 = vsel %vm2338, %v2428, %v2313
        %v2439 = vsel %vm2338, %v2430, %v2314
        %v2442 = vsel %vm2338, %v2432, %v2315
        %v2445 = vsel %vm2338, %v2434, %v2316
        %v2450 = vunpack.c.l.b16 %v1308
        %v2451 = vunpack.c.h.b16 %v1308
        %v2452 = vunpack.c.l.b16 %v1309
        %v2453 = vunpack.c.h.b16 %v1309
        %v2454 = vunpack.c.l.b16 %v1310
        %v2455 = vpack.c.b16 %v2450, %v2450
        %v2456 = vpack.c.b16 %v2451, %v2451
        %v2457 = vpack.c.b16 %v2452, %v2452
        %v2458 = vpack.c.b16 %v2453, %v2453
        %v2459 = vpack.c.b16 %v2454, %v2454
        %v2463 = vunpack.c.l.b16 %v1373
        %v2464 = vunpack.c.h.b16 %v1373
        %v2465 = vunpack.c.l.b16 %v1374
        %v2466 = vunpack.c.h.b16 %v1374
        %v2467 = vunpack.c.l.b16 %v1375
        %v2468 = vpack.c.b16 %v2463, %v2463
        %v2469 = vpack.c.b16 %v2464, %v2464
        %v2470 = vpack.c.b16 %v2465, %v2465
        %v2471 = vpack.c.b16 %v2466, %v2466
        %v2472 = vpack.c.b16 %v2467, %v2467
        %v2473 = vrot.slane %v2468, 6
        %v2474 = vrot.slane %v2469, 6
        %v2475 = vrot.slane %v2470, 6
        %v2476 = vrot.slane %v2471, 6
        %v2477 = vrot.slane %v2472, 6
        %2478 = vrot.lane.b32.xlu0 %v2473, 127
        %v2479 = vpop.permute.xlu0 %2478
        %2480 = vrot.lane.b32.xlu0 %v2474, 127
        %v2481 = vpop.permute.xlu0 %2480
        %2482 = vrot.lane.b32.xlu0 %v2475, 127
        %v2483 = vpop.permute.xlu0 %2482
        %2484 = vrot.lane.b32.xlu0 %v2476, 127
        %v2485 = vpop.permute.xlu0 %2484
        %2486 = vrot.lane.b32.xlu0 %v2477, 127
        %v2487 = vpop.permute.xlu0 %2486
        %v2488 = vsel %vm1435, %v2479, %v2481
        %v2489 = vsel %vm1435, %v2481, %v2483
        %v2490 = vsel %vm1435, %v2483, %v2485
        %v2491 = vsel %vm1435, %v2485, %v2487
        %v2494 = vunpack.c.l.b16 %v1418
        %v2495 = vunpack.c.h.b16 %v1418
        %v2496 = vunpack.c.l.b16 %v1419
        %v2497 = vunpack.c.h.b16 %v1419
        %v2498 = vpack.c.b16 %v2494, %v2494
        %v2499 = vpack.c.b16 %v2495, %v2495
        %v2500 = vpack.c.b16 %v2496, %v2496
        %v2501 = vpack.c.b16 %v2497, %v2497
        %2502 = vrot.lane.b32.xlu0 %v2498, 81
        %v2503 = vpop.permute.xlu0 %2502
        %2504 = vrot.lane.b32.xlu0 %v2499, 81
        %v2505 = vpop.permute.xlu0 %2504
        %2506 = vrot.lane.b32.xlu0 %v2500, 81
        %v2507 = vpop.permute.xlu0 %2506
        %2508 = vrot.lane.b32.xlu0 %v2501, 81
        %v2509 = vpop.permute.xlu0 %2508
        %vm2510 = vcmask 662528
        %v2511 = vsel %vm2510, %v2503, %v2505
        %v2512 = vsel %vm2510, %v2505, %v2507
        %v2513 = vsel %vm2510, %v2507, %v2509
        %v2516 = vunpack.c.l.b16 %v1469
        %v2517 = vunpack.c.h.b16 %v1469
        %v2518 = vunpack.c.l.b16 %v1470
        %v2519 = vunpack.c.h.b16 %v1470
        %v2520 = vpack.c.b16 %v2516, %v2516
        %v2521 = vpack.c.b16 %v2517, %v2517
        %v2522 = vpack.c.b16 %v2518, %v2518
        %v2523 = vpack.c.b16 %v2519, %v2519
        %v2524 = vrot.slane %v2520, 2
        %v2525 = vrot.slane %v2521, 2
        %v2526 = vrot.slane %v2522, 2
        %v2527 = vrot.slane %v2523, 2
        %2528 = vrot.lane.b32.xlu0 %v2524, 81
        %v2529 = vpop.permute.xlu0 %2528
        %2530 = vrot.lane.b32.xlu0 %v2525, 81
        %v2531 = vpop.permute.xlu0 %2530
        %2532 = vrot.lane.b32.xlu0 %v2526, 81
        %v2533 = vpop.permute.xlu0 %2532
        %2534 = vrot.lane.b32.xlu0 %v2527, 81
        %v2535 = vpop.permute.xlu0 %2534
        %v2536 = vsel %vm2510, %v2529, %v2531
        %v2537 = vsel %vm2510, %v2531, %v2533
        %v2538 = vsel %vm2510, %v2533, %v2535
        %v2541 = vunpack.c.l.b16 %v1519
        %v2542 = vunpack.c.h.b16 %v1519
        %v2543 = vunpack.c.l.b16 %v1520
        %v2544 = vunpack.c.h.b16 %v1520
        %v2545 = vpack.c.b16 %v2541, %v2541
        %v2546 = vpack.c.b16 %v2542, %v2542
        %v2547 = vpack.c.b16 %v2543, %v2543
        %v2548 = vpack.c.b16 %v2544, %v2544
        %2549 = vrot.lane.b32.xlu0 %v2545, 81
        %v2550 = vpop.permute.xlu0 %2549
        %2551 = vrot.lane.b32.xlu0 %v2546, 81
        %v2552 = vpop.permute.xlu0 %2551
        %2553 = vrot.lane.b32.xlu0 %v2547, 81
        %v2554 = vpop.permute.xlu0 %2553
        %2555 = vrot.lane.b32.xlu0 %v2548, 81
        %v2556 = vpop.permute.xlu0 %2555
        %v2557 = vsel %vm2510, %v2550, %v2552
        %v2558 = vsel %vm2510, %v2552, %v2554
        %v2559 = vsel %vm2510, %v2554, %v2556
        %v2562 = vunpack.c.l.b16 %v1569
        %v2563 = vunpack.c.h.b16 %v1569
        %v2564 = vunpack.c.l.b16 %v1570
        %v2565 = vunpack.c.h.b16 %v1570
        %v2566 = vpack.c.b16 %v2562, %v2562
        %v2567 = vpack.c.b16 %v2563, %v2563
        %v2568 = vpack.c.b16 %v2564, %v2564
        %v2569 = vpack.c.b16 %v2565, %v2565
        %v2570 = vrot.slane %v2566, 6
        %v2571 = vrot.slane %v2567, 6
        %v2572 = vrot.slane %v2568, 6
        %v2573 = vrot.slane %v2569, 6
        %2574 = vrot.lane.b32.xlu0 %v2570, 81
        %v2575 = vpop.permute.xlu0 %2574
        %2576 = vrot.lane.b32.xlu0 %v2571, 81
        %v2577 = vpop.permute.xlu0 %2576
        %2578 = vrot.lane.b32.xlu0 %v2572, 81
        %v2579 = vpop.permute.xlu0 %2578
        %2580 = vrot.lane.b32.xlu0 %v2573, 81
        %v2581 = vpop.permute.xlu0 %2580
        %v2582 = vsel %vm2510, %v2575, %v2577
        %v2583 = vsel %vm2510, %v2577, %v2579
        %v2584 = vsel %vm2510, %v2579, %v2581
        %v2587 = vunpack.c.l.b16 %v1619
        %v2588 = vunpack.c.h.b16 %v1619
        %v2589 = vunpack.c.l.b16 %v1620
        %v2590 = vunpack.c.h.b16 %v1620
        %v2591 = vpack.c.b16 %v2587, %v2587
        %v2592 = vpack.c.b16 %v2588, %v2588
        %v2593 = vpack.c.b16 %v2589, %v2589
        %v2594 = vpack.c.b16 %v2590, %v2590
        %2595 = vrot.lane.b32.xlu0 %v2591, 81
        %v2596 = vpop.permute.xlu0 %2595
        %2597 = vrot.lane.b32.xlu0 %v2592, 81
        %v2598 = vpop.permute.xlu0 %2597
        %2599 = vrot.lane.b32.xlu0 %v2593, 81
        %v2600 = vpop.permute.xlu0 %2599
        %2601 = vrot.lane.b32.xlu0 %v2594, 81
        %v2602 = vpop.permute.xlu0 %2601
        %v2603 = vsel %vm2510, %v2596, %v2598
        %v2604 = vsel %vm2510, %v2598, %v2600
        %v2605 = vsel %vm2510, %v2600, %v2602
        %v2608 = vunpack.c.l.b16 %v1669
        %v2609 = vunpack.c.h.b16 %v1669
        %v2610 = vunpack.c.l.b16 %v1670
        %v2611 = vunpack.c.h.b16 %v1670
        %v2612 = vpack.c.b16 %v2608, %v2608
        %v2613 = vpack.c.b16 %v2609, %v2609
        %v2614 = vpack.c.b16 %v2610, %v2610
        %v2615 = vpack.c.b16 %v2611, %v2611
        %v2616 = vrot.slane %v2612, 2
        %v2617 = vrot.slane %v2613, 2
        %v2618 = vrot.slane %v2614, 2
        %v2619 = vrot.slane %v2615, 2
        %2620 = vrot.lane.b32.xlu0 %v2616, 81
        %v2621 = vpop.permute.xlu0 %2620
        %2622 = vrot.lane.b32.xlu0 %v2617, 81
        %v2623 = vpop.permute.xlu0 %2622
        %2624 = vrot.lane.b32.xlu0 %v2618, 81
        %v2625 = vpop.permute.xlu0 %2624
        %2626 = vrot.lane.b32.xlu0 %v2619, 81
        %v2627 = vpop.permute.xlu0 %2626
        %v2628 = vsel %vm2510, %v2621, %v2623
        %v2629 = vsel %vm2510, %v2623, %v2625
        %v2630 = vsel %vm2510, %v2625, %v2627
        %v2633 = vunpack.c.l.b16 %v1741
        %v2634 = vunpack.c.h.b16 %v1741
        %v2635 = vunpack.c.l.b16 %v1742
        %v2636 = vunpack.c.h.b16 %v1742
        %v2637 = vpack.c.b16 %v2633, %v2633
        %v2638 = vpack.c.b16 %v2634, %v2634
        %v2639 = vpack.c.b16 %v2635, %v2635
        %v2640 = vpack.c.b16 %v2636, %v2636
        %2641 = vrot.lane.b32.xlu0 %v2637, 81
        %v2642 = vpop.permute.xlu0 %2641
        %2643 = vrot.lane.b32.xlu0 %v2638, 81
        %v2644 = vpop.permute.xlu0 %2643
        %2645 = vrot.lane.b32.xlu0 %v2639, 81
        %v2646 = vpop.permute.xlu0 %2645
        %2647 = vrot.lane.b32.xlu0 %v2640, 81
        %v2648 = vpop.permute.xlu0 %2647
        %v2649 = vsel %vm2510, %v2642, %v2644
        %v2650 = vsel %vm2510, %v2644, %v2646
        %v2651 = vsel %vm2510, %v2646, %v2648
        %v2654 = vunpack.c.l.b16 %v1803
        %v2655 = vunpack.c.h.b16 %v1803
        %v2656 = vunpack.c.l.b16 %v1804
        %v2657 = vunpack.c.h.b16 %v1804
        %v2658 = vpack.c.b16 %v2654, %v2654
        %v2659 = vpack.c.b16 %v2655, %v2655
        %v2660 = vpack.c.b16 %v2656, %v2656
        %v2661 = vpack.c.b16 %v2657, %v2657
        %v2662 = vrot.slane %v2658, 6
        %v2663 = vrot.slane %v2659, 6
        %v2664 = vrot.slane %v2660, 6
        %v2665 = vrot.slane %v2661, 6
        %2666 = vrot.lane.b32.xlu0 %v2662, 81
        %v2667 = vpop.permute.xlu0 %2666
        %2668 = vrot.lane.b32.xlu0 %v2663, 81
        %v2669 = vpop.permute.xlu0 %2668
        %2670 = vrot.lane.b32.xlu0 %v2664, 81
        %v2671 = vpop.permute.xlu0 %2670
        %2672 = vrot.lane.b32.xlu0 %v2665, 81
        %v2673 = vpop.permute.xlu0 %2672
        %v2674 = vsel %vm2510, %v2667, %v2669
        %v2675 = vsel %vm2510, %v2669, %v2671
        %v2676 = vsel %vm2510, %v2671, %v2673
        %v2679 = vunpack.c.l.b16 %v1853
        %v2680 = vunpack.c.h.b16 %v1853
        %v2681 = vunpack.c.l.b16 %v1854
        %v2682 = vunpack.c.h.b16 %v1854
        %v2683 = vpack.c.b16 %v2679, %v2679
        %v2684 = vpack.c.b16 %v2680, %v2680
        %v2685 = vpack.c.b16 %v2681, %v2681
        %v2686 = vpack.c.b16 %v2682, %v2682
        %2687 = vrot.lane.b32.xlu0 %v2683, 81
        %v2688 = vpop.permute.xlu0 %2687
        %2689 = vrot.lane.b32.xlu0 %v2684, 81
        %v2690 = vpop.permute.xlu0 %2689
        %2691 = vrot.lane.b32.xlu0 %v2685, 81
        %v2692 = vpop.permute.xlu0 %2691
        %2693 = vrot.lane.b32.xlu0 %v2686, 81
        %v2694 = vpop.permute.xlu0 %2693
        %v2695 = vsel %vm2510, %v2688, %v2690
        %v2696 = vsel %vm2510, %v2690, %v2692
        %v2697 = vsel %vm2510, %v2692, %v2694
        %v2700 = vsel %vm2317, %v2455, %v2488
        %v2703 = vsel %vm2317, %v2456, %v2489
        %v2706 = vsel %vm2317, %v2457, %v2490
        %v2709 = vsel %vm2317, %v2458, %v2491
        %v2712 = vsel %vm2317, %v2459, %v2487
        %v2714 = vsel %vm372, %v2700, %v2503
        %v2716 = vsel %vm372, %v2703, %v2511
        %v2718 = vsel %vm372, %v2706, %v2512
        %v2720 = vsel %vm372, %v2709, %v2513
        %v2722 = vsel %vm372, %v2712, %v2509
        %v2724 = vsel %vm2338, %v2714, %v2529
        %v2726 = vsel %vm2338, %v2716, %v2536
        %v2728 = vsel %vm2338, %v2718, %v2537
        %v2730 = vsel %vm2338, %v2720, %v2538
        %v2732 = vsel %vm2338, %v2722, %v2535
        %v2735 = vsel %vm2317, %v2550, %v2575
        %v2738 = vsel %vm2317, %v2557, %v2582
        %v2741 = vsel %vm2317, %v2558, %v2583
        %v2744 = vsel %vm2317, %v2559, %v2584
        %v2747 = vsel %vm2317, %v2556, %v2581
        %v2749 = vsel %vm372, %v2735, %v2596
        %v2751 = vsel %vm372, %v2738, %v2603
        %v2753 = vsel %vm372, %v2741, %v2604
        %v2755 = vsel %vm372, %v2744, %v2605
        %v2757 = vsel %vm372, %v2747, %v2602
        %v2759 = vsel %vm2338, %v2749, %v2621
        %v2761 = vsel %vm2338, %v2751, %v2628
        %v2763 = vsel %vm2338, %v2753, %v2629
        %v2765 = vsel %vm2338, %v2755, %v2630
        %v2767 = vsel %vm2338, %v2757, %v2627
        %v2770 = vsel %vm2317, %v2642, %v2667
        %v2773 = vsel %vm2317, %v2649, %v2674
        %v2776 = vsel %vm2317, %v2650, %v2675
        %v2779 = vsel %vm2317, %v2651, %v2676
        %v2782 = vsel %vm2317, %v2648, %v2673
        %v2784 = vsel %vm372, %v2770, %v2688
        %v2786 = vsel %vm372, %v2773, %v2695
        %v2788 = vsel %vm372, %v2776, %v2696
        %v2790 = vsel %vm372, %v2779, %v2697
        %v2792 = vsel %vm372, %v2782, %v2694
        %2808 = vrot.lane.b32.xlu0 %v2724, 47
        %v2809 = vpop.permute.xlu0 %2808
        %2810 = vrot.lane.b32.xlu0 %v2726, 47
        %v2811 = vpop.permute.xlu0 %2810
        %2812 = vrot.lane.b32.xlu0 %v2728, 47
        %v2813 = vpop.permute.xlu0 %2812
        %2814 = vrot.lane.b32.xlu0 %v2730, 47
        %v2815 = vpop.permute.xlu0 %2814
        %2816 = vrot.lane.b32.xlu0 %v2732, 47
        %v2817 = vpop.permute.xlu0 %2816
        %2818 = vrot.lane.b32.xlu0 %v2759, 47
        %v2819 = vpop.permute.xlu0 %2818
        %2820 = vrot.lane.b32.xlu0 %v2761, 47
        %v2821 = vpop.permute.xlu0 %2820
        %2822 = vrot.lane.b32.xlu0 %v2763, 47
        %v2823 = vpop.permute.xlu0 %2822
        %2824 = vrot.lane.b32.xlu0 %v2765, 47
        %v2825 = vpop.permute.xlu0 %2824
        %2826 = vrot.lane.b32.xlu0 %v2767, 47
        %v2827 = vpop.permute.xlu0 %2826
        %2828 = vrot.lane.b32.xlu0 %v2784, 47
        %v2829 = vpop.permute.xlu0 %2828
        %2830 = vrot.lane.b32.xlu0 %v2786, 47
        %v2831 = vpop.permute.xlu0 %2830
        %2832 = vrot.lane.b32.xlu0 %v2788, 47
        %v2833 = vpop.permute.xlu0 %2832
        %2834 = vrot.lane.b32.xlu0 %v2790, 47
        %v2835 = vpop.permute.xlu0 %2834
        %2836 = vrot.lane.b32.xlu0 %v2792, 47
        %v2837 = vpop.permute.xlu0 %2836
        %vm2838 = vcmask 384000
        %v2839 = vsel %vm2838, %v2809, %v2811
        %v2840 = vsel %vm2838, %v2811, %v2813
        %v2841 = vsel %vm2838, %v2813, %v2815
        %v2842 = vsel %vm2838, %v2815, %v2817
        %v2843 = vsel %vm2838, %v2819, %v2821
        %v2844 = vsel %vm2838, %v2821, %v2823
        %v2845 = vsel %vm2838, %v2823, %v2825
        %v2846 = vsel %vm2838, %v2825, %v2827
        %v2847 = vsel %vm2838, %v2829, %v2831
        %v2848 = vsel %vm2838, %v2831, %v2833
        %v2849 = vsel %vm2838, %v2833, %v2835
        %v2850 = vsel %vm2838, %v2835, %v2837
        %v2859 = vld [vmem:[%s2] sm:$0xf]
        %v2860 = vld [vmem:[%s3] sm:$0xff]
        %2862 = vset.pattern.permute.xlu0 0
        %2863 = vperm.xlu0 %2862, %v2860
        %v2864 = vpop.permute.xlu0 %2863
        %vm2866 = vcmask 883712
        %v2868 = vsel %vm2866, %v2859, 0
        %v2871 = vsel %vm2338, %v2847, 0
        %v2874 = vsel %vm2338, %v2848, 0
        %v2877 = vsel %vm2338, %v2849, 0
        %v2880 = vsel %vm2338, %v2850, 0
        %2882 = vmatpush.bf16.msra.mxu0 0
        %2883 = vmatpush.bf16.msra.mxu0 %v2871
        %2884 = vmatpush.bf16.msra.mxu0 %v2843
        %2885 = vmatpush.bf16.msra.mxu0 %v2839
        %2886 = vmatpush.bf16.msra.mxu0 %v2436
        %2887 = vmatpush.bf16.msra.mxu0 %v2404
        %2888 = vmatpush.bf16.msra.mxu0 %v2372
        %2889 = vmatpush.bf16.msra.mxu0 %v2340
        %2890 = vmatmul.bf16.gmra.mxu0 %v2868
        %v2891 = vpop.f32.mrf.mxu0
        %v2892 = vadd.f32 %v2864, %v2891
        %v2893 = vpop.f32.mrf.mxu0
        %2894 = vdwg.mxu0
        %2895 = vmatpush.bf16.msra.mxu0 0
        %2896 = vmatpush.bf16.msra.mxu0 %v2874
        %2897 = vmatpush.bf16.msra.mxu0 %v2844
        %2898 = vmatpush.bf16.msra.mxu0 %v2840
        %2899 = vmatpush.bf16.msra.mxu0 %v2439
        %2900 = vmatpush.bf16.msra.mxu0 %v2407
        %2901 = vmatpush.bf16.msra.mxu0 %v2375
        %2902 = vmatpush.bf16.msra.mxu0 %v2343
        %2903 = vmatmul.bf16.gmra.mxu0 %v2868
        %v2904 = vpop.f32.mrf.mxu0
        %v2905 = vadd.f32 %v2864, %v2904
        %v2906 = vpop.f32.mrf.mxu0
        %2907 = vdwg.mxu0
        %2908 = vmatpush.bf16.msra.mxu0 0
        %2909 = vmatpush.bf16.msra.mxu0 %v2877
        %2910 = vmatpush.bf16.msra.mxu0 %v2845
        %2911 = vmatpush.bf16.msra.mxu0 %v2841
        %2912 = vmatpush.bf16.msra.mxu0 %v2442
        %2913 = vmatpush.bf16.msra.mxu0 %v2410
        %2914 = vmatpush.bf16.msra.mxu0 %v2378
        %2915 = vmatpush.bf16.msra.mxu0 %v2346
        %2916 = vmatmul.bf16.gmra.mxu0 %v2868
        %v2917 = vpop.f32.mrf.mxu0
        %v2918 = vadd.f32 %v2864, %v2917
        %v2919 = vpop.f32.mrf.mxu0
        %2920 = vdwg.mxu0
        %2921 = vmatpush.bf16.msra.mxu0 0
        %2922 = vmatpush.bf16.msra.mxu0 %v2880
        %2923 = vmatpush.bf16.msra.mxu0 %v2846
        %2924 = vmatpush.bf16.msra.mxu0 %v2842
        %2925 = vmatpush.bf16.msra.mxu0 %v2445
        %2926 = vmatpush.bf16.msra.mxu0 %v2413
        %2927 = vmatpush.bf16.msra.mxu0 %v2381
        %2928 = vmatpush.bf16.msra.mxu0 %v2349
        %2929 = vmatmul.bf16.gmra.mxu0 %v2868
        %v2930 = vpop.f32.mrf.mxu0
        %v2931 = vadd.f32 %v2864, %v2930
        %v2932 = vpop.f32.mrf.mxu0
        %2933 = vdwg.mxu0
        %vm2934 = vcmp.gt.f32.partialorder %v2892, 0.0
        %vm2935 = vcmp.gt.f32.partialorder %v2905, 0.0
        %vm2936 = vcmp.gt.f32.partialorder %v2918, 0.0
        %vm2937 = vcmp.gt.f32.partialorder %v2931, 0.0
        %v2938 = vld [vmem:[%s4] sm:$0xff]
        %2940 = vset.pattern.permute.xlu0 0
        %2941 = vperm.xlu0 %2940, %v2938
        %v2942 = vpop.permute.xlu0 %2941
        %v2944 = vmul.f32 %v2942, %v2892
        %v2945 = vmul.f32 %v2942, %v2905
        %v2946 = vmul.f32 %v2942, %v2918
        %v2947 = vmul.f32 %v2942, %v2931
        %v2948 = vsel %vm2934, %v2892, %v2944
        %v2949 = vsel %vm2935, %v2905, %v2945
        %v2950 = vsel %vm2936, %v2918, %v2946
        %v2951 = vsel %vm2937, %v2931, %v2947
        %v2952 = vpack.c.bf16 %v2949, %v2948
        %v2953 = vpack.c.bf16 %v2951, %v2950
        %v2956 = vunpack.c.l.b16 %v2952
        %v2957 = vunpack.c.h.b16 %v2952
        %v2958 = vunpack.c.l.b16 %v2953
        %v2959 = vunpack.c.h.b16 %v2953
        %v2960 = vpack.c.b16 %v2956, %v2956
        %v2961 = vpack.c.b16 %v2957, %v2957
        %v2962 = vpack.c.b16 %v2958, %v2958
        %v2963 = vpack.c.b16 %v2959, %v2959
        %2964 = vrot.lane.b32.xlu0 %v2960, 73
        %v2965 = vpop.permute.xlu0 %2964
        %2966 = vrot.lane.b32.xlu0 %v2961, 73
        %v2967 = vpop.permute.xlu0 %2966
        %2968 = vrot.lane.b32.xlu0 %v2962, 73
        %v2969 = vpop.permute.xlu0 %2968
        %2970 = vrot.lane.b32.xlu0 %v2963, 73
        %v2971 = vpop.permute.xlu0 %2970
        %vm2972 = vcmask 596992
        %v2973 = vsel %vm2972, %v2965, %v2967
        %v2974 = vsel %vm2972, %v2967, %v2969
        %v2975 = vsel %vm2972, %v2969, %v2971
        %v2981 = vsel %vm1099, 0, %v2965
        %v2984 = vsel %vm1099, %v2971, 0
        %v2986 = vunpack.c.l.bf16 %v2981
        %v2987 = vunpack.c.l.bf16 %v2973
        %v2988 = vunpack.c.l.bf16 %v2974
        %v2989 = vunpack.c.l.bf16 %v2975
        %v2990 = vmul.f32 %v2986, %v362
        %v2991 = vmul.f32 %v2987, %v363
        %v2992 = vmul.f32 %v2988, %v364
        %v2993 = vmul.f32 %v2989, %v365
        %v2994 = vpack.c.bf16 %v2991, %v2990
        %v2995 = vpack.c.bf16 %v2993, %v2992
        %v2996 = vunpack.c.l.bf16 %v2984
        %2997 = vrot.lane.b32.xlu0 %v411, 1
        %v2998 = vpop.permute.xlu0 %2997
        %2999 = vrot.lane.b32.xlu0 %v412, 1
        %v3000 = vpop.permute.xlu0 %2999
        %3001 = vrot.lane.b32.xlu0 %v413, 1
        %v3002 = vpop.permute.xlu0 %3001
        %3003 = vrot.lane.b32.xlu0 %v414, 1
        %v3004 = vpop.permute.xlu0 %3003
        %v3005 = vsel %vm429, %v2998, %v3000
        %v3006 = vsel %vm429, %v3000, %v3002
        %v3007 = vsel %vm429, %v3002, %v3004
        %v3013 = vmul.f32 %v2986, %v2998
        %v3014 = vmul.f32 %v2987, %v3005
        %v3015 = vmul.f32 %v2988, %v3006
        %v3016 = vmul.f32 %v2989, %v3007
        %v3017 = vmul.f32 %v2996, %v3004
        %v3018 = vpack.c.bf16 %v3014, %v3013
        %v3019 = vpack.c.bf16 %v3016, %v3015
        %v3020 = vpack.c.bf16 %v3017, %v3017
        %3021 = vrot.lane.b32.xlu0 %v517, 8
        %v3022 = vpop.permute.xlu0 %3021
        %3023 = vrot.lane.b32.xlu0 %v518, 8
        %v3024 = vpop.permute.xlu0 %3023
        %3025 = vrot.lane.b32.xlu0 %v519, 8
        %v3026 = vpop.permute.xlu0 %3025
        %3027 = vrot.lane.b32.xlu0 %v520, 8
        %v3028 = vpop.permute.xlu0 %3027
        %v3029 = vsel %vm535, %v3022, %v3024
        %v3030 = vsel %vm535, %v3024, %v3026
        %v3031 = vsel %vm535, %v3026, %v3028
        %v3037 = vmul.f32 %v2986, %v3022
        %v3038 = vmul.f32 %v2987, %v3029
        %v3039 = vmul.f32 %v2988, %v3030
        %v3040 = vmul.f32 %v2989, %v3031
        %v3041 = vmul.f32 %v2996, %v3028
        %v3042 = vpack.c.bf16 %v3038, %v3037
        %v3043 = vpack.c.bf16 %v3040, %v3039
        %v3044 = vpack.c.bf16 %v3041, %v3041
        %3045 = vrot.lane.b32.xlu0 %v570, 9
        %v3046 = vpop.permute.xlu0 %3045
        %3047 = vrot.lane.b32.xlu0 %v571, 9
        %v3048 = vpop.permute.xlu0 %3047
        %3049 = vrot.lane.b32.xlu0 %v572, 9
        %v3050 = vpop.permute.xlu0 %3049
        %3051 = vrot.lane.b32.xlu0 %v573, 9
        %v3052 = vpop.permute.xlu0 %3051
        %v3053 = vsel %vm588, %v3046, %v3048
        %v3054 = vsel %vm588, %v3048, %v3050
        %v3055 = vsel %vm588, %v3050, %v3052
        %v3061 = vmul.f32 %v2986, %v3046
        %v3062 = vmul.f32 %v2987, %v3053
        %v3063 = vmul.f32 %v2988, %v3054
        %v3064 = vmul.f32 %v2989, %v3055
        %v3065 = vmul.f32 %v2996, %v3052
        %v3066 = vpack.c.bf16 %v3062, %v3061
        %v3067 = vpack.c.bf16 %v3064, %v3063
        %v3068 = vpack.c.bf16 %v3065, %v3065
        %3069 = vrot.lane.b32.xlu0 %v869, 64
        %v3070 = vpop.permute.xlu0 %3069
        %3071 = vrot.lane.b32.xlu0 %v870, 64
        %v3072 = vpop.permute.xlu0 %3071
        %3073 = vrot.lane.b32.xlu0 %v871, 64
        %v3074 = vpop.permute.xlu0 %3073
        %3075 = vrot.lane.b32.xlu0 %v872, 64
        %v3076 = vpop.permute.xlu0 %3075
        %v3077 = vsel %vm887, %v3070, %v3072
        %v3078 = vsel %vm887, %v3072, %v3074
        %v3079 = vsel %vm887, %v3074, %v3076
        %v3085 = vmul.f32 %v2986, %v3070
        %v3086 = vmul.f32 %v2987, %v3077
        %v3087 = vmul.f32 %v2988, %v3078
        %v3088 = vmul.f32 %v2989, %v3079
        %v3089 = vmul.f32 %v2996, %v3076
        %v3090 = vpack.c.bf16 %v3086, %v3085
        %v3091 = vpack.c.bf16 %v3088, %v3087
        %v3092 = vpack.c.bf16 %v3089, %v3089
        %3093 = vrot.lane.b32.xlu0 %v922, 65
        %v3094 = vpop.permute.xlu0 %3093
        %3095 = vrot.lane.b32.xlu0 %v923, 65
        %v3096 = vpop.permute.xlu0 %3095
        %3097 = vrot.lane.b32.xlu0 %v924, 65
        %v3098 = vpop.permute.xlu0 %3097
        %3099 = vrot.lane.b32.xlu0 %v925, 65
        %v3100 = vpop.permute.xlu0 %3099
        %v3101 = vsel %vm940, %v3094, %v3096
        %v3102 = vsel %vm940, %v3096, %v3098
        %v3103 = vsel %vm940, %v3098, %v3100
        %v3109 = vmul.f32 %v2986, %v3094
        %v3110 = vmul.f32 %v2987, %v3101
        %v3111 = vmul.f32 %v2988, %v3102
        %v3112 = vmul.f32 %v2989, %v3103
        %v3113 = vmul.f32 %v2996, %v3100
        %v3114 = vpack.c.bf16 %v3110, %v3109
        %v3115 = vpack.c.bf16 %v3112, %v3111
        %v3116 = vpack.c.bf16 %v3113, %v3113
        %3117 = vrot.lane.b32.xlu0 %v1028, 72
        %v3118 = vpop.permute.xlu0 %3117
        %3119 = vrot.lane.b32.xlu0 %v1029, 72
        %v3120 = vpop.permute.xlu0 %3119
        %3121 = vrot.lane.b32.xlu0 %v1030, 72
        %v3122 = vpop.permute.xlu0 %3121
        %3123 = vrot.lane.b32.xlu0 %v1031, 72
        %v3124 = vpop.permute.xlu0 %3123
        %v3125 = vsel %vm1046, %v3118, %v3120
        %v3126 = vsel %vm1046, %v3120, %v3122
        %v3127 = vsel %vm1046, %v3122, %v3124
        %v3133 = vmul.f32 %v2986, %v3118
        %v3134 = vmul.f32 %v2987, %v3125
        %v3135 = vmul.f32 %v2988, %v3126
        %v3136 = vmul.f32 %v2989, %v3127
        %v3137 = vmul.f32 %v2996, %v3124
        %v3138 = vpack.c.bf16 %v3134, %v3133
        %v3139 = vpack.c.bf16 %v3136, %v3135
        %v3140 = vpack.c.bf16 %v3137, %v3137
        %3141 = vrot.lane.b32.xlu0 %v1081, 73
        %v3142 = vpop.permute.xlu0 %3141
        %3143 = vrot.lane.b32.xlu0 %v1082, 73
        %v3144 = vpop.permute.xlu0 %3143
        %3145 = vrot.lane.b32.xlu0 %v1083, 73
        %v3146 = vpop.permute.xlu0 %3145
        %3147 = vrot.lane.b32.xlu0 %v1084, 73
        %v3148 = vpop.permute.xlu0 %3147
        %v3149 = vsel %vm1099, %v3142, %v3144
        %v3150 = vsel %vm1099, %v3144, %v3146
        %v3151 = vsel %vm1099, %v3146, %v3148
        %v3157 = vmul.f32 %v2986, %v3142
        %v3158 = vmul.f32 %v2987, %v3149
        %v3159 = vmul.f32 %v2988, %v3150
        %v3160 = vmul.f32 %v2989, %v3151
        %v3161 = vmul.f32 %v2996, %v3148
        %v3162 = vpack.c.bf16 %v3158, %v3157
        %v3163 = vpack.c.bf16 %v3160, %v3159
        %v3164 = vpack.c.bf16 %v3161, %v3161
        %v3167 = vunpack.c.l.b16 %v2994
        %v3168 = vunpack.c.h.b16 %v2994
        %v3169 = vunpack.c.l.b16 %v2995
        %v3170 = vunpack.c.h.b16 %v2995
        %v3171 = vpack.c.b16 %v3167, %v3167
        %v3172 = vpack.c.b16 %v3168, %v3168
        %v3173 = vpack.c.b16 %v3169, %v3169
        %v3174 = vpack.c.b16 %v3170, %v3170
        %v3178 = vunpack.c.l.b16 %v3018
        %v3179 = vunpack.c.h.b16 %v3018
        %v3180 = vunpack.c.l.b16 %v3019
        %v3181 = vunpack.c.h.b16 %v3019
        %v3182 = vunpack.c.l.b16 %v3020
        %v3183 = vpack.c.b16 %v3178, %v3178
        %v3184 = vpack.c.b16 %v3179, %v3179
        %v3185 = vpack.c.b16 %v3180, %v3180
        %v3186 = vpack.c.b16 %v3181, %v3181
        %v3187 = vpack.c.b16 %v3182, %v3182
        %3188 = vrot.lane.b32.xlu0 %v3183, 127
        %v3189 = vpop.permute.xlu0 %3188
        %3190 = vrot.lane.b32.xlu0 %v3184, 127
        %v3191 = vpop.permute.xlu0 %3190
        %3192 = vrot.lane.b32.xlu0 %v3185, 127
        %v3193 = vpop.permute.xlu0 %3192
        %3194 = vrot.lane.b32.xlu0 %v3186, 127
        %v3195 = vpop.permute.xlu0 %3194
        %3196 = vrot.lane.b32.xlu0 %v3187, 127
        %v3197 = vpop.permute.xlu0 %3196
        %v3198 = vsel %vm1435, %v3189, %v3191
        %v3199 = vsel %vm1435, %v3191, %v3193
        %v3200 = vsel %vm1435, %v3193, %v3195
        %v3201 = vsel %vm1435, %v3195, %v3197
        %v3205 = vunpack.c.l.b16 %v3042
        %v3206 = vunpack.c.h.b16 %v3042
        %v3207 = vunpack.c.l.b16 %v3043
        %v3208 = vunpack.c.h.b16 %v3043
        %v3209 = vunpack.c.l.b16 %v3044
        %v3210 = vpack.c.b16 %v3205, %v3205
        %v3211 = vpack.c.b16 %v3206, %v3206
        %v3212 = vpack.c.b16 %v3207, %v3207
        %v3213 = vpack.c.b16 %v3208, %v3208
        %v3214 = vpack.c.b16 %v3209, %v3209
        %3215 = vrot.lane.b32.xlu0 %v3210, 120
        %v3216 = vpop.permute.xlu0 %3215
        %3217 = vrot.lane.b32.xlu0 %v3211, 120
        %v3218 = vpop.permute.xlu0 %3217
        %3219 = vrot.lane.b32.xlu0 %v3212, 120
        %v3220 = vpop.permute.xlu0 %3219
        %3221 = vrot.lane.b32.xlu0 %v3213, 120
        %v3222 = vpop.permute.xlu0 %3221
        %3223 = vrot.lane.b32.xlu0 %v3214, 120
        %v3224 = vpop.permute.xlu0 %3223
        %v3225 = vsel %vm1535, %v3216, %v3218
        %v3226 = vsel %vm1535, %v3218, %v3220
        %v3227 = vsel %vm1535, %v3220, %v3222
        %v3228 = vsel %vm1535, %v3222, %v3224
        %v3232 = vunpack.c.l.b16 %v3066
        %v3233 = vunpack.c.h.b16 %v3066
        %v3234 = vunpack.c.l.b16 %v3067
        %v3235 = vunpack.c.h.b16 %v3067
        %v3236 = vunpack.c.l.b16 %v3068
        %v3237 = vpack.c.b16 %v3232, %v3232
        %v3238 = vpack.c.b16 %v3233, %v3233
        %v3239 = vpack.c.b16 %v3234, %v3234
        %v3240 = vpack.c.b16 %v3235, %v3235
        %v3241 = vpack.c.b16 %v3236, %v3236
        %3242 = vrot.lane.b32.xlu0 %v3237, 119
        %v3243 = vpop.permute.xlu0 %3242
        %3244 = vrot.lane.b32.xlu0 %v3238, 119
        %v3245 = vpop.permute.xlu0 %3244
        %3246 = vrot.lane.b32.xlu0 %v3239, 119
        %v3247 = vpop.permute.xlu0 %3246
        %3248 = vrot.lane.b32.xlu0 %v3240, 119
        %v3249 = vpop.permute.xlu0 %3248
        %3250 = vrot.lane.b32.xlu0 %v3241, 119
        %v3251 = vpop.permute.xlu0 %3250
        %v3252 = vsel %vm1585, %v3243, %v3245
        %v3253 = vsel %vm1585, %v3245, %v3247
        %v3254 = vsel %vm1585, %v3247, %v3249
        %v3255 = vsel %vm1585, %v3249, %v3251
        %v3259 = vunpack.c.l.b16 %v3090
        %v3260 = vunpack.c.h.b16 %v3090
        %v3261 = vunpack.c.l.b16 %v3091
        %v3262 = vunpack.c.h.b16 %v3091
        %v3263 = vunpack.c.l.b16 %v3092
        %v3264 = vpack.c.b16 %v3259, %v3259
        %v3265 = vpack.c.b16 %v3260, %v3260
        %v3266 = vpack.c.b16 %v3261, %v3261
        %v3267 = vpack.c.b16 %v3262, %v3262
        %v3268 = vpack.c.b16 %v3263, %v3263
        %3269 = vrot.lane.b32.xlu0 %v3264, 64
        %v3270 = vpop.permute.xlu0 %3269
        %3271 = vrot.lane.b32.xlu0 %v3265, 64
        %v3272 = vpop.permute.xlu0 %3271
        %3273 = vrot.lane.b32.xlu0 %v3266, 64
        %v3274 = vpop.permute.xlu0 %3273
        %3275 = vrot.lane.b32.xlu0 %v3267, 64
        %v3276 = vpop.permute.xlu0 %3275
        %3277 = vrot.lane.b32.xlu0 %v3268, 64
        %v3278 = vpop.permute.xlu0 %3277
        %v3279 = vsel %vm2129, %v3270, %v3272
        %v3280 = vsel %vm2129, %v3272, %v3274
        %v3281 = vsel %vm2129, %v3274, %v3276
        %v3282 = vsel %vm2129, %v3276, %v3278
        %v3286 = vunpack.c.l.b16 %v3114
        %v3287 = vunpack.c.h.b16 %v3114
        %v3288 = vunpack.c.l.b16 %v3115
        %v3289 = vunpack.c.h.b16 %v3115
        %v3290 = vunpack.c.l.b16 %v3116
        %v3291 = vpack.c.b16 %v3286, %v3286
        %v3292 = vpack.c.b16 %v3287, %v3287
        %v3293 = vpack.c.b16 %v3288, %v3288
        %v3294 = vpack.c.b16 %v3289, %v3289
        %v3295 = vpack.c.b16 %v3290, %v3290
        %3296 = vrot.lane.b32.xlu0 %v3291, 63
        %v3297 = vpop.permute.xlu0 %3296
        %3298 = vrot.lane.b32.xlu0 %v3292, 63
        %v3299 = vpop.permute.xlu0 %3298
        %3300 = vrot.lane.b32.xlu0 %v3293, 63
        %v3301 = vpop.permute.xlu0 %3300
        %3302 = vrot.lane.b32.xlu0 %v3294, 63
        %v3303 = vpop.permute.xlu0 %3302
        %3304 = vrot.lane.b32.xlu0 %v3295, 63
        %v3305 = vpop.permute.xlu0 %3304
        %v3306 = vsel %vm2157, %v3297, %v3299
        %v3307 = vsel %vm2157, %v3299, %v3301
        %v3308 = vsel %vm2157, %v3301, %v3303
        %v3309 = vsel %vm2157, %v3303, %v3305
        %v3313 = vunpack.c.l.b16 %v3138
        %v3314 = vunpack.c.h.b16 %v3138
        %v3315 = vunpack.c.l.b16 %v3139
        %v3316 = vunpack.c.h.b16 %v3139
        %v3317 = vunpack.c.l.b16 %v3140
        %v3318 = vpack.c.b16 %v3313, %v3313
        %v3319 = vpack.c.b16 %v3314, %v3314
        %v3320 = vpack.c.b16 %v3315, %v3315
        %v3321 = vpack.c.b16 %v3316, %v3316
        %v3322 = vpack.c.b16 %v3317, %v3317
        %3323 = vrot.lane.b32.xlu0 %v3318, 56
        %v3324 = vpop.permute.xlu0 %3323
        %3325 = vrot.lane.b32.xlu0 %v3319, 56
        %v3326 = vpop.permute.xlu0 %3325
        %3327 = vrot.lane.b32.xlu0 %v3320, 56
        %v3328 = vpop.permute.xlu0 %3327
        %3329 = vrot.lane.b32.xlu0 %v3321, 56
        %v3330 = vpop.permute.xlu0 %3329
        %3331 = vrot.lane.b32.xlu0 %v3322, 56
        %v3332 = vpop.permute.xlu0 %3331
        %v3333 = vsel %vm2218, %v3324, %v3326
        %v3334 = vsel %vm2218, %v3326, %v3328
        %v3335 = vsel %vm2218, %v3328, %v3330
        %v3336 = vsel %vm2218, %v3330, %v3332
        %v3340 = vunpack.c.l.b16 %v3162
        %v3341 = vunpack.c.h.b16 %v3162
        %v3342 = vunpack.c.l.b16 %v3163
        %v3343 = vunpack.c.h.b16 %v3163
        %v3344 = vunpack.c.l.b16 %v3164
        %v3345 = vpack.c.b16 %v3340, %v3340
        %v3346 = vpack.c.b16 %v3341, %v3341
        %v3347 = vpack.c.b16 %v3342, %v3342
        %v3348 = vpack.c.b16 %v3343, %v3343
        %v3349 = vpack.c.b16 %v3344, %v3344
        %3350 = vrot.lane.b32.xlu0 %v3345, 55
        %v3351 = vpop.permute.xlu0 %3350
        %3352 = vrot.lane.b32.xlu0 %v3346, 55
        %v3353 = vpop.permute.xlu0 %3352
        %3354 = vrot.lane.b32.xlu0 %v3347, 55
        %v3355 = vpop.permute.xlu0 %3354
        %3356 = vrot.lane.b32.xlu0 %v3348, 55
        %v3357 = vpop.permute.xlu0 %3356
        %3358 = vrot.lane.b32.xlu0 %v3349, 55
        %v3359 = vpop.permute.xlu0 %3358
        %v3360 = vsel %vm2251, %v3351, %v3353
        %v3361 = vsel %vm2251, %v3353, %v3355
        %v3362 = vsel %vm2251, %v3355, %v3357
        %v3363 = vsel %vm2251, %v3357, %v3359
        %v3366 = vsel %vm372, %v3171, %v3198
        %v3370 = vsel %vm372, %v3172, %v3199
        %v3374 = vsel %vm372, %v3173, %v3200
        %v3378 = vsel %vm372, %v3174, %v3201
        %v3382 = vsel %vm372, %v3225, %v3252
        %v3386 = vsel %vm372, %v3226, %v3253
        %v3390 = vsel %vm372, %v3227, %v3254
        %v3394 = vsel %vm372, %v3228, %v3255
        %v3398 = vsel %vm372, %v3279, %v3306
        %v3402 = vsel %vm372, %v3280, %v3307
        %v3406 = vsel %vm372, %v3281, %v3308
        %v3410 = vsel %vm372, %v3282, %v3309
        %v3414 = vsel %vm372, %v3333, %v3360
        %v3418 = vsel %vm372, %v3334, %v3361
        %v3422 = vsel %vm372, %v3335, %v3362
        %v3426 = vsel %vm372, %v3336, %v3363
        %v3428 = vld [vmem:[%s5] sm:$0x3]
        %v3429 = vld [vmem:[%s6] sm:$0xf]
        %3431 = vset.pattern.permute.xlu0 0
        %3432 = vperm.xlu0 %3431, %v3429
        %v3433 = vpop.permute.xlu0 %3432
        %v3436 = vsel %vm887, %v3428, 0
        %3438 = vmatpush.bf16.msra.mxu0 0
        %3439 = vmatpush.bf16.msra.mxu0 0
        %3440 = vmatpush.bf16.msra.mxu0 0
        %3441 = vmatpush.bf16.msra.mxu0 0
        %3442 = vmatpush.bf16.msra.mxu0 %v3414
        %3443 = vmatpush.bf16.msra.mxu0 %v3398
        %3444 = vmatpush.bf16.msra.mxu0 %v3382
        %3445 = vmatpush.bf16.msra.mxu0 %v3366
        %3446 = vmatmul.bf16.gmra.mxu0 %v3436
        %v3447 = vpop.f32.mrf.mxu0
        %v3448 = vadd.f32 %v3433, %v3447
        %v3449 = vpop.f32.mrf.mxu0
        %3450 = vdwg.mxu0
        %3451 = vmatpush.bf16.msra.mxu0 0
        %3452 = vmatpush.bf16.msra.mxu0 0
        %3453 = vmatpush.bf16.msra.mxu0 0
        %3454 = vmatpush.bf16.msra.mxu0 0
        %3455 = vmatpush.bf16.msra.mxu0 %v3418
        %3456 = vmatpush.bf16.msra.mxu0 %v3402
        %3457 = vmatpush.bf16.msra.mxu0 %v3386
        %3458 = vmatpush.bf16.msra.mxu0 %v3370
        %3459 = vmatmul.bf16.gmra.mxu0 %v3436
        %v3460 = vpop.f32.mrf.mxu0
        %v3461 = vadd.f32 %v3433, %v3460
        %v3462 = vpop.f32.mrf.mxu0
        %3463 = vdwg.mxu0
        %3464 = vmatpush.bf16.msra.mxu0 0
        %3465 = vmatpush.bf16.msra.mxu0 0
        %3466 = vmatpush.bf16.msra.mxu0 0
        %3467 = vmatpush.bf16.msra.mxu0 0
        %3468 = vmatpush.bf16.msra.mxu0 %v3422
        %3469 = vmatpush.bf16.msra.mxu0 %v3406
        %3470 = vmatpush.bf16.msra.mxu0 %v3390
        %3471 = vmatpush.bf16.msra.mxu0 %v3374
        %3472 = vmatmul.bf16.gmra.mxu0 %v3436
        %v3473 = vpop.f32.mrf.mxu0
        %v3474 = vadd.f32 %v3433, %v3473
        %v3475 = vpop.f32.mrf.mxu0
        %3476 = vdwg.mxu0
        %3477 = vmatpush.bf16.msra.mxu0 0
        %3478 = vmatpush.bf16.msra.mxu0 0
        %3479 = vmatpush.bf16.msra.mxu0 0
        %3480 = vmatpush.bf16.msra.mxu0 0
        %3481 = vmatpush.bf16.msra.mxu0 %v3426
        %3482 = vmatpush.bf16.msra.mxu0 %v3410
        %3483 = vmatpush.bf16.msra.mxu0 %v3394
        %3484 = vmatpush.bf16.msra.mxu0 %v3378
        %3485 = vmatmul.bf16.gmra.mxu0 %v3436
        %v3486 = vpop.f32.mrf.mxu0
        %v3487 = vadd.f32 %v3433, %v3486
        %v3488 = vpop.f32.mrf.mxu0
        %3489 = vdwg.mxu0
        %vm3490 = vcmp.gt.f32.partialorder %v3448, 0.0
        %vm3491 = vcmp.gt.f32.partialorder %v3461, 0.0
        %vm3492 = vcmp.gt.f32.partialorder %v3474, 0.0
        %vm3493 = vcmp.gt.f32.partialorder %v3487, 0.0
        %v3494 = vld [vmem:[%s7] sm:$0xf]
        %3496 = vset.pattern.permute.xlu0 0
        %3497 = vperm.xlu0 %3496, %v3494
        %v3498 = vpop.permute.xlu0 %3497
        %v3500 = vmul.f32 %v3498, %v3448
        %v3501 = vmul.f32 %v3498, %v3461
        %v3502 = vmul.f32 %v3498, %v3474
        %v3503 = vmul.f32 %v3498, %v3487
        %v3504 = vsel %vm3490, %v3448, %v3500
        %v3505 = vsel %vm3491, %v3461, %v3501
        %v3506 = vsel %vm3492, %v3474, %v3502
        %v3507 = vsel %vm3493, %v3487, %v3503
        %3508 = vrot.lane.b32.xlu0 %v464, 2
        %v3509 = vpop.permute.xlu0 %3508
        %3510 = vrot.lane.b32.xlu0 %v465, 2
        %v3511 = vpop.permute.xlu0 %3510
        %3512 = vrot.lane.b32.xlu0 %v466, 2
        %v3513 = vpop.permute.xlu0 %3512
        %3514 = vrot.lane.b32.xlu0 %v467, 2
        %v3515 = vpop.permute.xlu0 %3514
        %v3516 = vsel %vm482, %v3509, %v3511
        %v3517 = vsel %vm482, %v3511, %v3513
        %v3518 = vsel %vm482, %v3513, %v3515
        %v3524 = vmul.f32 %v2986, %v3509
        %v3525 = vmul.f32 %v2987, %v3516
        %v3526 = vmul.f32 %v2988, %v3517
        %v3527 = vmul.f32 %v2989, %v3518
        %v3528 = vmul.f32 %v2996, %v3515
        %v3529 = vpack.c.bf16 %v3525, %v3524
        %v3530 = vpack.c.bf16 %v3527, %v3526
        %v3531 = vpack.c.bf16 %v3528, %v3528
        %3532 = vrot.lane.b32.xlu0 %v623, 10
        %v3533 = vpop.permute.xlu0 %3532
        %3534 = vrot.lane.b32.xlu0 %v624, 10
        %v3535 = vpop.permute.xlu0 %3534
        %3536 = vrot.lane.b32.xlu0 %v625, 10
        %v3537 = vpop.permute.xlu0 %3536
        %3538 = vrot.lane.b32.xlu0 %v626, 10
        %v3539 = vpop.permute.xlu0 %3538
        %v3540 = vsel %vm641, %v3533, %v3535
        %v3541 = vsel %vm641, %v3535, %v3537
        %v3542 = vsel %vm641, %v3537, %v3539
        %v3548 = vmul.f32 %v2986, %v3533
        %v3549 = vmul.f32 %v2987, %v3540
        %v3550 = vmul.f32 %v2988, %v3541
        %v3551 = vmul.f32 %v2989, %v3542
        %v3552 = vmul.f32 %v2996, %v3539
        %v3553 = vpack.c.bf16 %v3549, %v3548
        %v3554 = vpack.c.bf16 %v3551, %v3550
        %v3555 = vpack.c.bf16 %v3552, %v3552
        %3556 = vrot.lane.b32.xlu0 %v975, 66
        %v3557 = vpop.permute.xlu0 %3556
        %3558 = vrot.lane.b32.xlu0 %v976, 66
        %v3559 = vpop.permute.xlu0 %3558
        %3560 = vrot.lane.b32.xlu0 %v977, 66
        %v3561 = vpop.permute.xlu0 %3560
        %3562 = vrot.lane.b32.xlu0 %v978, 66
        %v3563 = vpop.permute.xlu0 %3562
        %v3564 = vsel %vm993, %v3557, %v3559
        %v3565 = vsel %vm993, %v3559, %v3561
        %v3566 = vsel %vm993, %v3561, %v3563
        %v3572 = vmul.f32 %v2986, %v3557
        %v3573 = vmul.f32 %v2987, %v3564
        %v3574 = vmul.f32 %v2988, %v3565
        %v3575 = vmul.f32 %v2989, %v3566
        %v3576 = vmul.f32 %v2996, %v3563
        %v3577 = vpack.c.bf16 %v3573, %v3572
        %v3578 = vpack.c.bf16 %v3575, %v3574
        %v3579 = vpack.c.bf16 %v3576, %v3576
        %3580 = vrot.lane.b32.xlu0 %v1134, 74
        %v3581 = vpop.permute.xlu0 %3580
        %3582 = vrot.lane.b32.xlu0 %v1135, 74
        %v3583 = vpop.permute.xlu0 %3582
        %3584 = vrot.lane.b32.xlu0 %v1136, 74
        %v3585 = vpop.permute.xlu0 %3584
        %3586 = vrot.lane.b32.xlu0 %v1137, 74
        %v3587 = vpop.permute.xlu0 %3586
        %v3588 = vsel %vm1152, %v3581, %v3583
        %v3589 = vsel %vm1152, %v3583, %v3585
        %v3590 = vsel %vm1152, %v3585, %v3587
        %v3596 = vmul.f32 %v2986, %v3581
        %v3597 = vmul.f32 %v2987, %v3588
        %v3598 = vmul.f32 %v2988, %v3589
        %v3599 = vmul.f32 %v2989, %v3590
        %v3600 = vmul.f32 %v2996, %v3587
        %v3601 = vpack.c.bf16 %v3597, %v3596
        %v3602 = vpack.c.bf16 %v3599, %v3598
        %v3603 = vpack.c.bf16 %v3600, %v3600
        %v3607 = vunpack.c.l.b16 %v3529
        %v3608 = vunpack.c.h.b16 %v3529
        %v3609 = vunpack.c.l.b16 %v3530
        %v3610 = vunpack.c.h.b16 %v3530
        %v3611 = vunpack.c.l.b16 %v3531
        %v3612 = vpack.c.b16 %v3607, %v3607
        %v3613 = vpack.c.b16 %v3608, %v3608
        %v3614 = vpack.c.b16 %v3609, %v3609
        %v3615 = vpack.c.b16 %v3610, %v3610
        %v3616 = vpack.c.b16 %v3611, %v3611
        %3617 = vrot.lane.b32.xlu0 %v3612, 127
        %v3618 = vpop.permute.xlu0 %3617
        %3619 = vrot.lane.b32.xlu0 %v3613, 127
        %v3620 = vpop.permute.xlu0 %3619
        %3621 = vrot.lane.b32.xlu0 %v3614, 127
        %v3622 = vpop.permute.xlu0 %3621
        %3623 = vrot.lane.b32.xlu0 %v3615, 127
        %v3624 = vpop.permute.xlu0 %3623
        %3625 = vrot.lane.b32.xlu0 %v3616, 127
        %v3626 = vpop.permute.xlu0 %3625
        %v3627 = vsel %vm1435, %v3618, %v3620
        %v3628 = vsel %vm1435, %v3620, %v3622
        %v3629 = vsel %vm1435, %v3622, %v3624
        %v3630 = vsel %vm1435, %v3624, %v3626
        %3631 = vrot.lane.b32.xlu0 %v3237, 120
        %v3632 = vpop.permute.xlu0 %3631
        %3633 = vrot.lane.b32.xlu0 %v3238, 120
        %v3634 = vpop.permute.xlu0 %3633
        %3635 = vrot.lane.b32.xlu0 %v3239, 120
        %v3636 = vpop.permute.xlu0 %3635
        %3637 = vrot.lane.b32.xlu0 %v3240, 120
        %v3638 = vpop.permute.xlu0 %3637
        %3639 = vrot.lane.b32.xlu0 %v3241, 120
        %v3640 = vpop.permute.xlu0 %3639
        %v3641 = vsel %vm1535, %v3632, %v3634
        %v3642 = vsel %vm1535, %v3634, %v3636
        %v3643 = vsel %vm1535, %v3636, %v3638
        %v3644 = vsel %vm1535, %v3638, %v3640
        %v3648 = vunpack.c.l.b16 %v3553
        %v3649 = vunpack.c.h.b16 %v3553
        %v3650 = vunpack.c.l.b16 %v3554
        %v3651 = vunpack.c.h.b16 %v3554
        %v3652 = vunpack.c.l.b16 %v3555
        %v3653 = vpack.c.b16 %v3648, %v3648
        %v3654 = vpack.c.b16 %v3649, %v3649
        %v3655 = vpack.c.b16 %v3650, %v3650
        %v3656 = vpack.c.b16 %v3651, %v3651
        %v3657 = vpack.c.b16 %v3652, %v3652
        %3658 = vrot.lane.b32.xlu0 %v3653, 119
        %v3659 = vpop.permute.xlu0 %3658
        %3660 = vrot.lane.b32.xlu0 %v3654, 119
        %v3661 = vpop.permute.xlu0 %3660
        %3662 = vrot.lane.b32.xlu0 %v3655, 119
        %v3663 = vpop.permute.xlu0 %3662
        %3664 = vrot.lane.b32.xlu0 %v3656, 119
        %v3665 = vpop.permute.xlu0 %3664
        %3666 = vrot.lane.b32.xlu0 %v3657, 119
        %v3667 = vpop.permute.xlu0 %3666
        %v3668 = vsel %vm1585, %v3659, %v3661
        %v3669 = vsel %vm1585, %v3661, %v3663
        %v3670 = vsel %vm1585, %v3663, %v3665
        %v3671 = vsel %vm1585, %v3665, %v3667
        %3672 = vrot.lane.b32.xlu0 %v3291, 64
        %v3673 = vpop.permute.xlu0 %3672
        %3674 = vrot.lane.b32.xlu0 %v3292, 64
        %v3675 = vpop.permute.xlu0 %3674
        %3676 = vrot.lane.b32.xlu0 %v3293, 64
        %v3677 = vpop.permute.xlu0 %3676
        %3678 = vrot.lane.b32.xlu0 %v3294, 64
        %v3679 = vpop.permute.xlu0 %3678
        %3680 = vrot.lane.b32.xlu0 %v3295, 64
        %v3681 = vpop.permute.xlu0 %3680
        %v3682 = vsel %vm2129, %v3673, %v3675
        %v3683 = vsel %vm2129, %v3675, %v3677
        %v3684 = vsel %vm2129, %v3677, %v3679
        %v3685 = vsel %vm2129, %v3679, %v3681
        %v3689 = vunpack.c.l.b16 %v3577
        %v3690 = vunpack.c.h.b16 %v3577
        %v3691 = vunpack.c.l.b16 %v3578
        %v3692 = vunpack.c.h.b16 %v3578
        %v3693 = vunpack.c.l.b16 %v3579
        %v3694 = vpack.c.b16 %v3689, %v3689
        %v3695 = vpack.c.b16 %v3690, %v3690
        %v3696 = vpack.c.b16 %v3691, %v3691
        %v3697 = vpack.c.b16 %v3692, %v3692
        %v3698 = vpack.c.b16 %v3693, %v3693
        %3699 = vrot.lane.b32.xlu0 %v3694, 63
        %v3700 = vpop.permute.xlu0 %3699
        %3701 = vrot.lane.b32.xlu0 %v3695, 63
        %v3702 = vpop.permute.xlu0 %3701
        %3703 = vrot.lane.b32.xlu0 %v3696, 63
        %v3704 = vpop.permute.xlu0 %3703
        %3705 = vrot.lane.b32.xlu0 %v3697, 63
        %v3706 = vpop.permute.xlu0 %3705
        %3707 = vrot.lane.b32.xlu0 %v3698, 63
        %v3708 = vpop.permute.xlu0 %3707
        %v3709 = vsel %vm2157, %v3700, %v3702
        %v3710 = vsel %vm2157, %v3702, %v3704
        %v3711 = vsel %vm2157, %v3704, %v3706
        %v3712 = vsel %vm2157, %v3706, %v3708
        %3713 = vrot.lane.b32.xlu0 %v3345, 56
        %v3714 = vpop.permute.xlu0 %3713
        %3715 = vrot.lane.b32.xlu0 %v3346, 56
        %v3716 = vpop.permute.xlu0 %3715
        %3717 = vrot.lane.b32.xlu0 %v3347, 56
        %v3718 = vpop.permute.xlu0 %3717
        %3719 = vrot.lane.b32.xlu0 %v3348, 56
        %v3720 = vpop.permute.xlu0 %3719
        %3721 = vrot.lane.b32.xlu0 %v3349, 56
        %v3722 = vpop.permute.xlu0 %3721
        %v3723 = vsel %vm2218, %v3714, %v3716
        %v3724 = vsel %vm2218, %v3716, %v3718
        %v3725 = vsel %vm2218, %v3718, %v3720
        %v3726 = vsel %vm2218, %v3720, %v3722
        %v3730 = vunpack.c.l.b16 %v3601
        %v3731 = vunpack.c.h.b16 %v3601
        %v3732 = vunpack.c.l.b16 %v3602
        %v3733 = vunpack.c.h.b16 %v3602
        %v3734 = vunpack.c.l.b16 %v3603
        %v3735 = vpack.c.b16 %v3730, %v3730
        %v3736 = vpack.c.b16 %v3731, %v3731
        %v3737 = vpack.c.b16 %v3732, %v3732
        %v3738 = vpack.c.b16 %v3733, %v3733
        %v3739 = vpack.c.b16 %v3734, %v3734
        %3740 = vrot.lane.b32.xlu0 %v3735, 55
        %v3741 = vpop.permute.xlu0 %3740
        %3742 = vrot.lane.b32.xlu0 %v3736, 55
        %v3743 = vpop.permute.xlu0 %3742
        %3744 = vrot.lane.b32.xlu0 %v3737, 55
        %v3745 = vpop.permute.xlu0 %3744
        %3746 = vrot.lane.b32.xlu0 %v3738, 55
        %v3747 = vpop.permute.xlu0 %3746
        %3748 = vrot.lane.b32.xlu0 %v3739, 55
        %v3749 = vpop.permute.xlu0 %3748
        %v3750 = vsel %vm2251, %v3741, %v3743
        %v3751 = vsel %vm2251, %v3743, %v3745
        %v3752 = vsel %vm2251, %v3745, %v3747
        %v3753 = vsel %vm2251, %v3747, %v3749
        %v3756 = vsel %vm372, %v3183, %v3627
        %v3759 = vsel %vm372, %v3184, %v3628
        %v3762 = vsel %vm372, %v3185, %v3629
        %v3765 = vsel %vm372, %v3186, %v3630
        %v3768 = vsel %vm372, %v3187, %v3626
        %v3771 = vsel %vm372, %v3641, %v3668
        %v3774 = vsel %vm372, %v3642, %v3669
        %v3777 = vsel %vm372, %v3643, %v3670
        %v3780 = vsel %vm372, %v3644, %v3671
        %v3783 = vsel %vm372, %v3640, %v3667
        %v3786 = vsel %vm372, %v3682, %v3709
        %v3789 = vsel %vm372, %v3683, %v3710
        %v3792 = vsel %vm372, %v3684, %v3711
        %v3795 = vsel %vm372, %v3685, %v3712
        %v3798 = vsel %vm372, %v3681, %v3708
        %v3801 = vsel %vm372, %v3723, %v3750
        %v3804 = vsel %vm372, %v3724, %v3751
        %v3807 = vsel %vm372, %v3725, %v3752
        %v3810 = vsel %vm372, %v3726, %v3753
        %v3813 = vsel %vm372, %v3722, %v3749
        %s3814 = scalar_lea.vmem %s5, 2
        %v3815 = vld [vmem:[%s3814] sm:$0x3]
        %3836 = vrot.lane.b32.xlu0 %v3756, 127
        %v3837 = vpop.permute.xlu0 %3836
        %3838 = vrot.lane.b32.xlu0 %v3759, 127
        %v3839 = vpop.permute.xlu0 %3838
        %3840 = vrot.lane.b32.xlu0 %v3762, 127
        %v3841 = vpop.permute.xlu0 %3840
        %3842 = vrot.lane.b32.xlu0 %v3765, 127
        %v3843 = vpop.permute.xlu0 %3842
        %3844 = vrot.lane.b32.xlu0 %v3768, 127
        %v3845 = vpop.permute.xlu0 %3844
        %3846 = vrot.lane.b32.xlu0 %v3771, 127
        %v3847 = vpop.permute.xlu0 %3846
        %3848 = vrot.lane.b32.xlu0 %v3774, 127
        %v3849 = vpop.permute.xlu0 %3848
        %3850 = vrot.lane.b32.xlu0 %v3777, 127
        %v3851 = vpop.permute.xlu0 %3850
        %3852 = vrot.lane.b32.xlu0 %v3780, 127
        %v3853 = vpop.permute.xlu0 %3852
        %3854 = vrot.lane.b32.xlu0 %v3783, 127
        %v3855 = vpop.permute.xlu0 %3854
        %3856 = vrot.lane.b32.xlu0 %v3786, 127
        %v3857 = vpop.permute.xlu0 %3856
        %3858 = vrot.lane.b32.xlu0 %v3789, 127
        %v3859 = vpop.permute.xlu0 %3858
        %3860 = vrot.lane.b32.xlu0 %v3792, 127
        %v3861 = vpop.permute.xlu0 %3860
        %3862 = vrot.lane.b32.xlu0 %v3795, 127
        %v3863 = vpop.permute.xlu0 %3862
        %3864 = vrot.lane.b32.xlu0 %v3798, 127
        %v3865 = vpop.permute.xlu0 %3864
        %3866 = vrot.lane.b32.xlu0 %v3801, 127
        %v3867 = vpop.permute.xlu0 %3866
        %3868 = vrot.lane.b32.xlu0 %v3804, 127
        %v3869 = vpop.permute.xlu0 %3868
        %3870 = vrot.lane.b32.xlu0 %v3807, 127
        %v3871 = vpop.permute.xlu0 %3870
        %3872 = vrot.lane.b32.xlu0 %v3810, 127
        %v3873 = vpop.permute.xlu0 %3872
        %3874 = vrot.lane.b32.xlu0 %v3813, 127
        %v3875 = vpop.permute.xlu0 %3874
        %v3876 = vsel %vm1435, %v3837, %v3839
        %v3877 = vsel %vm1435, %v3839, %v3841
        %v3878 = vsel %vm1435, %v3841, %v3843
        %v3879 = vsel %vm1435, %v3843, %v3845
        %v3880 = vsel %vm1435, %v3847, %v3849
        %v3881 = vsel %vm1435, %v3849, %v3851
        %v3882 = vsel %vm1435, %v3851, %v3853
        %v3883 = vsel %vm1435, %v3853, %v3855
        %v3884 = vsel %vm1435, %v3857, %v3859
        %v3885 = vsel %vm1435, %v3859, %v3861
        %v3886 = vsel %vm1435, %v3861, %v3863
        %v3887 = vsel %vm1435, %v3863, %v3865
        %v3888 = vsel %vm1435, %v3867, %v3869
        %v3889 = vsel %vm1435, %v3869, %v3871
        %v3890 = vsel %vm1435, %v3871, %v3873
        %v3891 = vsel %vm1435, %v3873, %v3875
        %v3909 = vsel %vm887, %v3815, 0
        %3911 = vmatpush.bf16.msra.mxu0 0
        %3912 = vmatpush.bf16.msra.mxu0 0
        %3913 = vmatpush.bf16.msra.mxu0 0
        %3914 = vmatpush.bf16.msra.mxu0 0
        %3915 = vmatpush.bf16.msra.mxu0 %v3888
        %3916 = vmatpush.bf16.msra.mxu0 %v3884
        %3917 = vmatpush.bf16.msra.mxu0 %v3880
        %3918 = vmatpush.bf16.msra.mxu0 %v3876
        %3919 = vmatmul.bf16.gmra.mxu0 %v3909
        %v3920 = vpop.f32.mrf.mxu0
        %v3921 = vadd.f32 %v3433, %v3920
        %v3922 = vpop.f32.mrf.mxu0
        %3923 = vdwg.mxu0
        %3924 = vmatpush.bf16.msra.mxu0 0
        %3925 = vmatpush.bf16.msra.mxu0 0
        %3926 = vmatpush.bf16.msra.mxu0 0
        %3927 = vmatpush.bf16.msra.mxu0 0
        %3928 = vmatpush.bf16.msra.mxu0 %v3889
        %3929 = vmatpush.bf16.msra.mxu0 %v3885
        %3930 = vmatpush.bf16.msra.mxu0 %v3881
        %3931 = vmatpush.bf16.msra.mxu0 %v3877
        %3932 = vmatmul.bf16.gmra.mxu0 %v3909
        %v3933 = vpop.f32.mrf.mxu0
        %v3934 = vadd.f32 %v3433, %v3933
        %v3935 = vpop.f32.mrf.mxu0
        %3936 = vdwg.mxu0
        %3937 = vmatpush.bf16.msra.mxu0 0
        %3938 = vmatpush.bf16.msra.mxu0 0
        %3939 = vmatpush.bf16.msra.mxu0 0
        %3940 = vmatpush.bf16.msra.mxu0 0
        %3941 = vmatpush.bf16.msra.mxu0 %v3890
        %3942 = vmatpush.bf16.msra.mxu0 %v3886
        %3943 = vmatpush.bf16.msra.mxu0 %v3882
        %3944 = vmatpush.bf16.msra.mxu0 %v3878
        %3945 = vmatmul.bf16.gmra.mxu0 %v3909
        %v3946 = vpop.f32.mrf.mxu0
        %v3947 = vadd.f32 %v3433, %v3946
        %v3948 = vpop.f32.mrf.mxu0
        %3949 = vdwg.mxu0
        %3950 = vmatpush.bf16.msra.mxu0 0
        %3951 = vmatpush.bf16.msra.mxu0 0
        %3952 = vmatpush.bf16.msra.mxu0 0
        %3953 = vmatpush.bf16.msra.mxu0 0
        %3954 = vmatpush.bf16.msra.mxu0 %v3891
        %3955 = vmatpush.bf16.msra.mxu0 %v3887
        %3956 = vmatpush.bf16.msra.mxu0 %v3883
        %3957 = vmatpush.bf16.msra.mxu0 %v3879
        %3958 = vmatmul.bf16.gmra.mxu0 %v3909
        %v3959 = vpop.f32.mrf.mxu0
        %v3960 = vadd.f32 %v3433, %v3959
        %v3961 = vpop.f32.mrf.mxu0
        %3962 = vdwg.mxu0
        %vm3963 = vcmp.gt.f32.partialorder %v3921, 0.0
        %vm3964 = vcmp.gt.f32.partialorder %v3934, 0.0
        %vm3965 = vcmp.gt.f32.partialorder %v3947, 0.0
        %vm3966 = vcmp.gt.f32.partialorder %v3960, 0.0
        %v3967 = vmul.f32 %v3498, %v3921
        %v3968 = vmul.f32 %v3498, %v3934
        %v3969 = vmul.f32 %v3498, %v3947
        %v3970 = vmul.f32 %v3498, %v3960
        %v3971 = vsel %vm3963, %v3921, %v3967
        %v3972 = vsel %vm3964, %v3934, %v3968
        %v3973 = vsel %vm3965, %v3947, %v3969
        %v3974 = vsel %vm3966, %v3960, %v3970
        %3975 = vrot.lane.b32.xlu0 %v676, 16
        %v3976 = vpop.permute.xlu0 %3975
        %3977 = vrot.lane.b32.xlu0 %v677, 16
        %v3978 = vpop.permute.xlu0 %3977
        %3979 = vrot.lane.b32.xlu0 %v678, 16
        %v3980 = vpop.permute.xlu0 %3979
        %3981 = vrot.lane.b32.xlu0 %v679, 16
        %v3982 = vpop.permute.xlu0 %3981
        %v3983 = vsel %vm694, %v3976, %v3978
        %v3984 = vsel %vm694, %v3978, %v3980
        %v3985 = vsel %vm694, %v3980, %v3982
        %v3991 = vmul.f32 %v2986, %v3976
        %v3992 = vmul.f32 %v2987, %v3983
        %v3993 = vmul.f32 %v2988, %v3984
        %v3994 = vmul.f32 %v2989, %v3985
        %v3995 = vmul.f32 %v2996, %v3982
        %v3996 = vpack.c.bf16 %v3992, %v3991
        %v3997 = vpack.c.bf16 %v3994, %v3993
        %v3998 = vpack.c.bf16 %v3995, %v3995
        %3999 = vrot.lane.b32.xlu0 %v729, 17
        %v4000 = vpop.permute.xlu0 %3999
        %4001 = vrot.lane.b32.xlu0 %v730, 17
        %v4002 = vpop.permute.xlu0 %4001
        %4003 = vrot.lane.b32.xlu0 %v731, 17
        %v4004 = vpop.permute.xlu0 %4003
        %4005 = vrot.lane.b32.xlu0 %v732, 17
        %v4006 = vpop.permute.xlu0 %4005
        %v4007 = vsel %vm747, %v4000, %v4002
        %v4008 = vsel %vm747, %v4002, %v4004
        %v4009 = vsel %vm747, %v4004, %v4006
        %v4015 = vmul.f32 %v2986, %v4000
        %v4016 = vmul.f32 %v2987, %v4007
        %v4017 = vmul.f32 %v2988, %v4008
        %v4018 = vmul.f32 %v2989, %v4009
        %v4019 = vmul.f32 %v2996, %v4006
        %v4020 = vpack.c.bf16 %v4016, %v4015
        %v4021 = vpack.c.bf16 %v4018, %v4017
        %v4022 = vpack.c.bf16 %v4019, %v4019
        %4023 = vrot.lane.b32.xlu0 %v1187, 80
        %v4024 = vpop.permute.xlu0 %4023
        %4025 = vrot.lane.b32.xlu0 %v1188, 80
        %v4026 = vpop.permute.xlu0 %4025
        %4027 = vrot.lane.b32.xlu0 %v1189, 80
        %v4028 = vpop.permute.xlu0 %4027
        %4029 = vrot.lane.b32.xlu0 %v1190, 80
        %v4030 = vpop.permute.xlu0 %4029
        %v4031 = vsel %vm1205, %v4024, %v4026
        %v4032 = vsel %vm1205, %v4026, %v4028
        %v4033 = vsel %vm1205, %v4028, %v4030
        %v4039 = vmul.f32 %v2986, %v4024
        %v4040 = vmul.f32 %v2987, %v4031
        %v4041 = vmul.f32 %v2988, %v4032
        %v4042 = vmul.f32 %v2989, %v4033
        %v4043 = vmul.f32 %v2996, %v4030
        %v4044 = vpack.c.bf16 %v4040, %v4039
        %v4045 = vpack.c.bf16 %v4042, %v4041
        %v4046 = vpack.c.bf16 %v4043, %v4043
        %4047 = vrot.lane.b32.xlu0 %v1262, 81
        %v4048 = vpop.permute.xlu0 %4047
        %4049 = vrot.lane.b32.xlu0 %v1263, 81
        %v4050 = vpop.permute.xlu0 %4049
        %4051 = vrot.lane.b32.xlu0 %v1264, 81
        %v4052 = vpop.permute.xlu0 %4051
        %4053 = vrot.lane.b32.xlu0 %v1265, 81
        %v4054 = vpop.permute.xlu0 %4053
        %v4055 = vsel %vm1280, %v4048, %v4050
        %v4056 = vsel %vm1280, %v4050, %v4052
        %v4057 = vsel %vm1280, %v4052, %v4054
        %v4063 = vmul.f32 %v2986, %v4048
        %v4064 = vmul.f32 %v2987, %v4055
        %v4065 = vmul.f32 %v2988, %v4056
        %v4066 = vmul.f32 %v2989, %v4057
        %v4067 = vmul.f32 %v2996, %v4054
        %v4068 = vpack.c.bf16 %v4064, %v4063
        %v4069 = vpack.c.bf16 %v4066, %v4065
        %v4070 = vpack.c.bf16 %v4067, %v4067
        %4071 = vrot.lane.b32.xlu0 %v3237, 127
        %v4072 = vpop.permute.xlu0 %4071
        %4073 = vrot.lane.b32.xlu0 %v3238, 127
        %v4074 = vpop.permute.xlu0 %4073
        %4075 = vrot.lane.b32.xlu0 %v3239, 127
        %v4076 = vpop.permute.xlu0 %4075
        %4077 = vrot.lane.b32.xlu0 %v3240, 127
        %v4078 = vpop.permute.xlu0 %4077
        %4079 = vrot.lane.b32.xlu0 %v3241, 127
        %v4080 = vpop.permute.xlu0 %4079
        %v4081 = vsel %vm1435, %v4072, %v4074
        %v4082 = vsel %vm1435, %v4074, %v4076
        %v4083 = vsel %vm1435, %v4076, %v4078
        %v4084 = vsel %vm1435, %v4078, %v4080
        %v4088 = vunpack.c.l.b16 %v3996
        %v4089 = vunpack.c.h.b16 %v3996
        %v4090 = vunpack.c.l.b16 %v3997
        %v4091 = vunpack.c.h.b16 %v3997
        %v4092 = vunpack.c.l.b16 %v3998
        %v4093 = vpack.c.b16 %v4088, %v4088
        %v4094 = vpack.c.b16 %v4089, %v4089
        %v4095 = vpack.c.b16 %v4090, %v4090
        %v4096 = vpack.c.b16 %v4091, %v4091
        %v4097 = vpack.c.b16 %v4092, %v4092
        %4098 = vrot.lane.b32.xlu0 %v4093, 120
        %v4099 = vpop.permute.xlu0 %4098
        %4100 = vrot.lane.b32.xlu0 %v4094, 120
        %v4101 = vpop.permute.xlu0 %4100
        %4102 = vrot.lane.b32.xlu0 %v4095, 120
        %v4103 = vpop.permute.xlu0 %4102
        %4104 = vrot.lane.b32.xlu0 %v4096, 120
        %v4105 = vpop.permute.xlu0 %4104
        %4106 = vrot.lane.b32.xlu0 %v4097, 120
        %v4107 = vpop.permute.xlu0 %4106
        %v4108 = vsel %vm1535, %v4099, %v4101
        %v4109 = vsel %vm1535, %v4101, %v4103
        %v4110 = vsel %vm1535, %v4103, %v4105
        %v4111 = vsel %vm1535, %v4105, %v4107
        %v4115 = vunpack.c.l.b16 %v4020
        %v4116 = vunpack.c.h.b16 %v4020
        %v4117 = vunpack.c.l.b16 %v4021
        %v4118 = vunpack.c.h.b16 %v4021
        %v4119 = vunpack.c.l.b16 %v4022
        %v4120 = vpack.c.b16 %v4115, %v4115
        %v4121 = vpack.c.b16 %v4116, %v4116
        %v4122 = vpack.c.b16 %v4117, %v4117
        %v4123 = vpack.c.b16 %v4118, %v4118
        %v4124 = vpack.c.b16 %v4119, %v4119
        %4125 = vrot.lane.b32.xlu0 %v4120, 119
        %v4126 = vpop.permute.xlu0 %4125
        %4127 = vrot.lane.b32.xlu0 %v4121, 119
        %v4128 = vpop.permute.xlu0 %4127
        %4129 = vrot.lane.b32.xlu0 %v4122, 119
        %v4130 = vpop.permute.xlu0 %4129
        %4131 = vrot.lane.b32.xlu0 %v4123, 119
        %v4132 = vpop.permute.xlu0 %4131
        %4133 = vrot.lane.b32.xlu0 %v4124, 119
        %v4134 = vpop.permute.xlu0 %4133
        %v4135 = vsel %vm1585, %v4126, %v4128
        %v4136 = vsel %vm1585, %v4128, %v4130
        %v4137 = vsel %vm1585, %v4130, %v4132
        %v4138 = vsel %vm1585, %v4132, %v4134
        %4139 = vrot.lane.b32.xlu0 %v3318, 64
        %v4140 = vpop.permute.xlu0 %4139
        %4141 = vrot.lane.b32.xlu0 %v3319, 64
        %v4142 = vpop.permute.xlu0 %4141
        %4143 = vrot.lane.b32.xlu0 %v3320, 64
        %v4144 = vpop.permute.xlu0 %4143
        %4145 = vrot.lane.b32.xlu0 %v3321, 64
        %v4146 = vpop.permute.xlu0 %4145
        %4147 = vrot.lane.b32.xlu0 %v3322, 64
        %v4148 = vpop.permute.xlu0 %4147
        %v4149 = vsel %vm2129, %v4140, %v4142
        %v4150 = vsel %vm2129, %v4142, %v4144
        %v4151 = vsel %vm2129, %v4144, %v4146
        %v4152 = vsel %vm2129, %v4146, %v4148
        %4153 = vrot.lane.b32.xlu0 %v3345, 63
        %v4154 = vpop.permute.xlu0 %4153
        %4155 = vrot.lane.b32.xlu0 %v3346, 63
        %v4156 = vpop.permute.xlu0 %4155
        %4157 = vrot.lane.b32.xlu0 %v3347, 63
        %v4158 = vpop.permute.xlu0 %4157
        %4159 = vrot.lane.b32.xlu0 %v3348, 63
        %v4160 = vpop.permute.xlu0 %4159
        %4161 = vrot.lane.b32.xlu0 %v3349, 63
        %v4162 = vpop.permute.xlu0 %4161
        %v4163 = vsel %vm2157, %v4154, %v4156
        %v4164 = vsel %vm2157, %v4156, %v4158
        %v4165 = vsel %vm2157, %v4158, %v4160
        %v4166 = vsel %vm2157, %v4160, %v4162
        %v4170 = vunpack.c.l.b16 %v4044
        %v4171 = vunpack.c.h.b16 %v4044
        %v4172 = vunpack.c.l.b16 %v4045
        %v4173 = vunpack.c.h.b16 %v4045
        %v4174 = vunpack.c.l.b16 %v4046
        %v4175 = vpack.c.b16 %v4170, %v4170
        %v4176 = vpack.c.b16 %v4171, %v4171
        %v4177 = vpack.c.b16 %v4172, %v4172
        %v4178 = vpack.c.b16 %v4173, %v4173
        %v4179 = vpack.c.b16 %v4174, %v4174
        %4180 = vrot.lane.b32.xlu0 %v4175, 56
        %v4181 = vpop.permute.xlu0 %4180
        %4182 = vrot.lane.b32.xlu0 %v4176, 56
        %v4183 = vpop.permute.xlu0 %4182
        %4184 = vrot.lane.b32.xlu0 %v4177, 56
        %v4185 = vpop.permute.xlu0 %4184
        %4186 = vrot.lane.b32.xlu0 %v4178, 56
        %v4187 = vpop.permute.xlu0 %4186
        %4188 = vrot.lane.b32.xlu0 %v4179, 56
        %v4189 = vpop.permute.xlu0 %4188
        %v4190 = vsel %vm2218, %v4181, %v4183
        %v4191 = vsel %vm2218, %v4183, %v4185
        %v4192 = vsel %vm2218, %v4185, %v4187
        %v4193 = vsel %vm2218, %v4187, %v4189
        %v4197 = vunpack.c.l.b16 %v4068
        %v4198 = vunpack.c.h.b16 %v4068
        %v4199 = vunpack.c.l.b16 %v4069
        %v4200 = vunpack.c.h.b16 %v4069
        %v4201 = vunpack.c.l.b16 %v4070
        %v4202 = vpack.c.b16 %v4197, %v4197
        %v4203 = vpack.c.b16 %v4198, %v4198
        %v4204 = vpack.c.b16 %v4199, %v4199
        %v4205 = vpack.c.b16 %v4200, %v4200
        %v4206 = vpack.c.b16 %v4201, %v4201
        %4207 = vrot.lane.b32.xlu0 %v4202, 55
        %v4208 = vpop.permute.xlu0 %4207
        %4209 = vrot.lane.b32.xlu0 %v4203, 55
        %v4210 = vpop.permute.xlu0 %4209
        %4211 = vrot.lane.b32.xlu0 %v4204, 55
        %v4212 = vpop.permute.xlu0 %4211
        %4213 = vrot.lane.b32.xlu0 %v4205, 55
        %v4214 = vpop.permute.xlu0 %4213
        %4215 = vrot.lane.b32.xlu0 %v4206, 55
        %v4216 = vpop.permute.xlu0 %4215
        %v4217 = vsel %vm2251, %v4208, %v4210
        %v4218 = vsel %vm2251, %v4210, %v4212
        %v4219 = vsel %vm2251, %v4212, %v4214
        %v4220 = vsel %vm2251, %v4214, %v4216
        %v4223 = vsel %vm372, %v3210, %v4081
        %v4226 = vsel %vm372, %v3211, %v4082
        %v4229 = vsel %vm372, %v3212, %v4083
        %v4232 = vsel %vm372, %v3213, %v4084
        %v4235 = vsel %vm372, %v3214, %v4080
        %v4238 = vsel %vm372, %v4108, %v4135
        %v4241 = vsel %vm372, %v4109, %v4136
        %v4244 = vsel %vm372, %v4110, %v4137
        %v4247 = vsel %vm372, %v4111, %v4138
        %v4250 = vsel %vm372, %v4107, %v4134
        %v4253 = vsel %vm372, %v4149, %v4163
        %v4256 = vsel %vm372, %v4150, %v4164
        %v4259 = vsel %vm372, %v4151, %v4165
        %v4262 = vsel %vm372, %v4152, %v4166
        %v4265 = vsel %vm372, %v4148, %v4162
        %v4268 = vsel %vm372, %v4190, %v4217
        %v4271 = vsel %vm372, %v4191, %v4218
        %v4274 = vsel %vm372, %v4192, %v4219
        %v4277 = vsel %vm372, %v4193, %v4220
        %v4280 = vsel %vm372, %v4189, %v4216
        %s4281 = scalar_lea.vmem %s5, 4
        %v4282 = vld [vmem:[%s4281] sm:$0x3]
        %4303 = vrot.lane.b32.xlu0 %v4223, 120
        %v4304 = vpop.permute.xlu0 %4303
        %4305 = vrot.lane.b32.xlu0 %v4226, 120
        %v4306 = vpop.permute.xlu0 %4305
        %4307 = vrot.lane.b32.xlu0 %v4229, 120
        %v4308 = vpop.permute.xlu0 %4307
        %4309 = vrot.lane.b32.xlu0 %v4232, 120
        %v4310 = vpop.permute.xlu0 %4309
        %4311 = vrot.lane.b32.xlu0 %v4235, 120
        %v4312 = vpop.permute.xlu0 %4311
        %4313 = vrot.lane.b32.xlu0 %v4238, 120
        %v4314 = vpop.permute.xlu0 %4313
        %4315 = vrot.lane.b32.xlu0 %v4241, 120
        %v4316 = vpop.permute.xlu0 %4315
        %4317 = vrot.lane.b32.xlu0 %v4244, 120
        %v4318 = vpop.permute.xlu0 %4317
        %4319 = vrot.lane.b32.xlu0 %v4247, 120
        %v4320 = vpop.permute.xlu0 %4319
        %4321 = vrot.lane.b32.xlu0 %v4250, 120
        %v4322 = vpop.permute.xlu0 %4321
        %4323 = vrot.lane.b32.xlu0 %v4253, 120
        %v4324 = vpop.permute.xlu0 %4323
        %4325 = vrot.lane.b32.xlu0 %v4256, 120
        %v4326 = vpop.permute.xlu0 %4325
        %4327 = vrot.lane.b32.xlu0 %v4259, 120
        %v4328 = vpop.permute.xlu0 %4327
        %4329 = vrot.lane.b32.xlu0 %v4262, 120
        %v4330 = vpop.permute.xlu0 %4329
        %4331 = vrot.lane.b32.xlu0 %v4265, 120
        %v4332 = vpop.permute.xlu0 %4331
        %4333 = vrot.lane.b32.xlu0 %v4268, 120
        %v4334 = vpop.permute.xlu0 %4333
        %4335 = vrot.lane.b32.xlu0 %v4271, 120
        %v4336 = vpop.permute.xlu0 %4335
        %4337 = vrot.lane.b32.xlu0 %v4274, 120
        %v4338 = vpop.permute.xlu0 %4337
        %4339 = vrot.lane.b32.xlu0 %v4277, 120
        %v4340 = vpop.permute.xlu0 %4339
        %4341 = vrot.lane.b32.xlu0 %v4280, 120
        %v4342 = vpop.permute.xlu0 %4341
        %v4343 = vsel %vm1535, %v4304, %v4306
        %v4344 = vsel %vm1535, %v4306, %v4308
        %v4345 = vsel %vm1535, %v4308, %v4310
        %v4346 = vsel %vm1535, %v4310, %v4312
        %v4347 = vsel %vm1535, %v4314, %v4316
        %v4348 = vsel %vm1535, %v4316, %v4318
        %v4349 = vsel %vm1535, %v4318, %v4320
        %v4350 = vsel %vm1535, %v4320, %v4322
        %v4351 = vsel %vm1535, %v4324, %v4326
        %v4352 = vsel %vm1535, %v4326, %v4328
        %v4353 = vsel %vm1535, %v4328, %v4330
        %v4354 = vsel %vm1535, %v4330, %v4332
        %v4355 = vsel %vm1535, %v4334, %v4336
        %v4356 = vsel %vm1535, %v4336, %v4338
        %v4357 = vsel %vm1535, %v4338, %v4340
        %v4358 = vsel %vm1535, %v4340, %v4342
        %v4376 = vsel %vm887, %v4282, 0
        %4378 = vmatpush.bf16.msra.mxu0 0
        %4379 = vmatpush.bf16.msra.mxu0 0
        %4380 = vmatpush.bf16.msra.mxu0 0
        %4381 = vmatpush.bf16.msra.mxu0 0
        %4382 = vmatpush.bf16.msra.mxu0 %v4355
        %4383 = vmatpush.bf16.msra.mxu0 %v4351
        %4384 = vmatpush.bf16.msra.mxu0 %v4347
        %4385 = vmatpush.bf16.msra.mxu0 %v4343
        %4386 = vmatmul.bf16.gmra.mxu0 %v4376
        %v4387 = vpop.f32.mrf.mxu0
        %v4388 = vadd.f32 %v3433, %v4387
        %v4389 = vpop.f32.mrf.mxu0
        %4390 = vdwg.mxu0
        %4391 = vmatpush.bf16.msra.mxu0 0
        %4392 = vmatpush.bf16.msra.mxu0 0
        %4393 = vmatpush.bf16.msra.mxu0 0
        %4394 = vmatpush.bf16.msra.mxu0 0
        %4395 = vmatpush.bf16.msra.mxu0 %v4356
        %4396 = vmatpush.bf16.msra.mxu0 %v4352
        %4397 = vmatpush.bf16.msra.mxu0 %v4348
        %4398 = vmatpush.bf16.msra.mxu0 %v4344
        %4399 = vmatmul.bf16.gmra.mxu0 %v4376
        %v4400 = vpop.f32.mrf.mxu0
        %v4401 = vadd.f32 %v3433, %v4400
        %v4402 = vpop.f32.mrf.mxu0
        %4403 = vdwg.mxu0
        %4404 = vmatpush.bf16.msra.mxu0 0
        %4405 = vmatpush.bf16.msra.mxu0 0
        %4406 = vmatpush.bf16.msra.mxu0 0
        %4407 = vmatpush.bf16.msra.mxu0 0
        %4408 = vmatpush.bf16.msra.mxu0 %v4357
        %4409 = vmatpush.bf16.msra.mxu0 %v4353
        %4410 = vmatpush.bf16.msra.mxu0 %v4349
        %4411 = vmatpush.bf16.msra.mxu0 %v4345
        %4412 = vmatmul.bf16.gmra.mxu0 %v4376
        %v4413 = vpop.f32.mrf.mxu0
        %v4414 = vadd.f32 %v3433, %v4413
        %v4415 = vpop.f32.mrf.mxu0
        %4416 = vdwg.mxu0
        %4417 = vmatpush.bf16.msra.mxu0 0
        %4418 = vmatpush.bf16.msra.mxu0 0
        %4419 = vmatpush.bf16.msra.mxu0 0
        %4420 = vmatpush.bf16.msra.mxu0 0
        %4421 = vmatpush.bf16.msra.mxu0 %v4358
        %4422 = vmatpush.bf16.msra.mxu0 %v4354
        %4423 = vmatpush.bf16.msra.mxu0 %v4350
        %4424 = vmatpush.bf16.msra.mxu0 %v4346
        %4425 = vmatmul.bf16.gmra.mxu0 %v4376
        %v4426 = vpop.f32.mrf.mxu0
        %v4427 = vadd.f32 %v3433, %v4426
        %v4428 = vpop.f32.mrf.mxu0
        %4429 = vdwg.mxu0
        %vm4430 = vcmp.gt.f32.partialorder %v4388, 0.0
        %vm4431 = vcmp.gt.f32.partialorder %v4401, 0.0
        %vm4432 = vcmp.gt.f32.partialorder %v4414, 0.0
        %vm4433 = vcmp.gt.f32.partialorder %v4427, 0.0
        %v4434 = vmul.f32 %v3498, %v4388
        %v4435 = vmul.f32 %v3498, %v4401
        %v4436 = vmul.f32 %v3498, %v4414
        %v4437 = vmul.f32 %v3498, %v4427
        %v4438 = vsel %vm4430, %v4388, %v4434
        %v4439 = vsel %vm4431, %v4401, %v4435
        %v4440 = vsel %vm4432, %v4414, %v4436
        %v4441 = vsel %vm4433, %v4427, %v4437
        %4442 = vrot.lane.b32.xlu0 %v804, 18
        %v4443 = vpop.permute.xlu0 %4442
        %4444 = vrot.lane.b32.xlu0 %v805, 18
        %v4445 = vpop.permute.xlu0 %4444
        %4446 = vrot.lane.b32.xlu0 %v806, 18
        %v4447 = vpop.permute.xlu0 %4446
        %4448 = vrot.lane.b32.xlu0 %v807, 18
        %v4449 = vpop.permute.xlu0 %4448
        %v4450 = vsel %vm822, %v4443, %v4445
        %v4451 = vsel %vm822, %v4445, %v4447
        %v4452 = vsel %vm822, %v4447, %v4449
        %v4458 = vmul.f32 %v2986, %v4443
        %v4459 = vmul.f32 %v2987, %v4450
        %v4460 = vmul.f32 %v2988, %v4451
        %v4461 = vmul.f32 %v2989, %v4452
        %v4462 = vmul.f32 %v2996, %v4449
        %v4463 = vpack.c.bf16 %v4459, %v4458
        %v4464 = vpack.c.bf16 %v4461, %v4460
        %v4465 = vpack.c.bf16 %v4462, %v4462
        %4466 = vrot.lane.b32.xlu0 %v1327, 82
        %v4467 = vpop.permute.xlu0 %4466
        %4468 = vrot.lane.b32.xlu0 %v1328, 82
        %v4469 = vpop.permute.xlu0 %4468
        %4470 = vrot.lane.b32.xlu0 %v1329, 82
        %v4471 = vpop.permute.xlu0 %4470
        %4472 = vrot.lane.b32.xlu0 %v1330, 82
        %v4473 = vpop.permute.xlu0 %4472
        %v4474 = vsel %vm1345, %v4467, %v4469
        %v4475 = vsel %vm1345, %v4469, %v4471
        %v4476 = vsel %vm1345, %v4471, %v4473
        %v4482 = vmul.f32 %v2986, %v4467
        %v4483 = vmul.f32 %v2987, %v4474
        %v4484 = vmul.f32 %v2988, %v4475
        %v4485 = vmul.f32 %v2989, %v4476
        %v4486 = vmul.f32 %v2996, %v4473
        %v4487 = vpack.c.bf16 %v4483, %v4482
        %v4488 = vpack.c.bf16 %v4485, %v4484
        %v4489 = vpack.c.bf16 %v4486, %v4486
        %4490 = vrot.lane.b32.xlu0 %v3653, 127
        %v4491 = vpop.permute.xlu0 %4490
        %4492 = vrot.lane.b32.xlu0 %v3654, 127
        %v4493 = vpop.permute.xlu0 %4492
        %4494 = vrot.lane.b32.xlu0 %v3655, 127
        %v4495 = vpop.permute.xlu0 %4494
        %4496 = vrot.lane.b32.xlu0 %v3656, 127
        %v4497 = vpop.permute.xlu0 %4496
        %4498 = vrot.lane.b32.xlu0 %v3657, 127
        %v4499 = vpop.permute.xlu0 %4498
        %v4500 = vsel %vm1435, %v4491, %v4493
        %v4501 = vsel %vm1435, %v4493, %v4495
        %v4502 = vsel %vm1435, %v4495, %v4497
        %v4503 = vsel %vm1435, %v4497, %v4499
        %4504 = vrot.lane.b32.xlu0 %v4120, 120
        %v4505 = vpop.permute.xlu0 %4504
        %4506 = vrot.lane.b32.xlu0 %v4121, 120
        %v4507 = vpop.permute.xlu0 %4506
        %4508 = vrot.lane.b32.xlu0 %v4122, 120
        %v4509 = vpop.permute.xlu0 %4508
        %4510 = vrot.lane.b32.xlu0 %v4123, 120
        %v4511 = vpop.permute.xlu0 %4510
        %4512 = vrot.lane.b32.xlu0 %v4124, 120
        %v4513 = vpop.permute.xlu0 %4512
        %v4514 = vsel %vm1535, %v4505, %v4507
        %v4515 = vsel %vm1535, %v4507, %v4509
        %v4516 = vsel %vm1535, %v4509, %v4511
        %v4517 = vsel %vm1535, %v4511, %v4513
        %v4521 = vunpack.c.l.b16 %v4463
        %v4522 = vunpack.c.h.b16 %v4463
        %v4523 = vunpack.c.l.b16 %v4464
        %v4524 = vunpack.c.h.b16 %v4464
        %v4525 = vunpack.c.l.b16 %v4465
        %v4526 = vpack.c.b16 %v4521, %v4521
        %v4527 = vpack.c.b16 %v4522, %v4522
        %v4528 = vpack.c.b16 %v4523, %v4523
        %v4529 = vpack.c.b16 %v4524, %v4524
        %v4530 = vpack.c.b16 %v4525, %v4525
        %4531 = vrot.lane.b32.xlu0 %v4526, 119
        %v4532 = vpop.permute.xlu0 %4531
        %4533 = vrot.lane.b32.xlu0 %v4527, 119
        %v4534 = vpop.permute.xlu0 %4533
        %4535 = vrot.lane.b32.xlu0 %v4528, 119
        %v4536 = vpop.permute.xlu0 %4535
        %4537 = vrot.lane.b32.xlu0 %v4529, 119
        %v4538 = vpop.permute.xlu0 %4537
        %4539 = vrot.lane.b32.xlu0 %v4530, 119
        %v4540 = vpop.permute.xlu0 %4539
        %v4541 = vsel %vm1585, %v4532, %v4534
        %v4542 = vsel %vm1585, %v4534, %v4536
        %v4543 = vsel %vm1585, %v4536, %v4538
        %v4544 = vsel %vm1585, %v4538, %v4540
        %4545 = vrot.lane.b32.xlu0 %v3345, 64
        %v4546 = vpop.permute.xlu0 %4545
        %4547 = vrot.lane.b32.xlu0 %v3346, 64
        %v4548 = vpop.permute.xlu0 %4547
        %4549 = vrot.lane.b32.xlu0 %v3347, 64
        %v4550 = vpop.permute.xlu0 %4549
        %4551 = vrot.lane.b32.xlu0 %v3348, 64
        %v4552 = vpop.permute.xlu0 %4551
        %4553 = vrot.lane.b32.xlu0 %v3349, 64
        %v4554 = vpop.permute.xlu0 %4553
        %v4555 = vsel %vm2129, %v4546, %v4548
        %v4556 = vsel %vm2129, %v4548, %v4550
        %v4557 = vsel %vm2129, %v4550, %v4552
        %v4558 = vsel %vm2129, %v4552, %v4554
        %4559 = vrot.lane.b32.xlu0 %v3735, 63
        %v4560 = vpop.permute.xlu0 %4559
        %4561 = vrot.lane.b32.xlu0 %v3736, 63
        %v4562 = vpop.permute.xlu0 %4561
        %4563 = vrot.lane.b32.xlu0 %v3737, 63
        %v4564 = vpop.permute.xlu0 %4563
        %4565 = vrot.lane.b32.xlu0 %v3738, 63
        %v4566 = vpop.permute.xlu0 %4565
        %4567 = vrot.lane.b32.xlu0 %v3739, 63
        %v4568 = vpop.permute.xlu0 %4567
        %v4569 = vsel %vm2157, %v4560, %v4562
        %v4570 = vsel %vm2157, %v4562, %v4564
        %v4571 = vsel %vm2157, %v4564, %v4566
        %v4572 = vsel %vm2157, %v4566, %v4568
        %4573 = vrot.lane.b32.xlu0 %v4202, 56
        %v4574 = vpop.permute.xlu0 %4573
        %4575 = vrot.lane.b32.xlu0 %v4203, 56
        %v4576 = vpop.permute.xlu0 %4575
        %4577 = vrot.lane.b32.xlu0 %v4204, 56
        %v4578 = vpop.permute.xlu0 %4577
        %4579 = vrot.lane.b32.xlu0 %v4205, 56
        %v4580 = vpop.permute.xlu0 %4579
        %4581 = vrot.lane.b32.xlu0 %v4206, 56
        %v4582 = vpop.permute.xlu0 %4581
        %v4583 = vsel %vm2218, %v4574, %v4576
        %v4584 = vsel %vm2218, %v4576, %v4578
        %v4585 = vsel %vm2218, %v4578, %v4580
        %v4586 = vsel %vm2218, %v4580, %v4582
        %v4590 = vunpack.c.l.b16 %v4487
        %v4591 = vunpack.c.h.b16 %v4487
        %v4592 = vunpack.c.l.b16 %v4488
        %v4593 = vunpack.c.h.b16 %v4488
        %v4594 = vunpack.c.l.b16 %v4489
        %v4595 = vpack.c.b16 %v4590, %v4590
        %v4596 = vpack.c.b16 %v4591, %v4591
        %v4597 = vpack.c.b16 %v4592, %v4592
        %v4598 = vpack.c.b16 %v4593, %v4593
        %v4599 = vpack.c.b16 %v4594, %v4594
        %4600 = vrot.lane.b32.xlu0 %v4595, 55
        %v4601 = vpop.permute.xlu0 %4600
        %4602 = vrot.lane.b32.xlu0 %v4596, 55
        %v4603 = vpop.permute.xlu0 %4602
        %4604 = vrot.lane.b32.xlu0 %v4597, 55
        %v4605 = vpop.permute.xlu0 %4604
        %4606 = vrot.lane.b32.xlu0 %v4598, 55
        %v4607 = vpop.permute.xlu0 %4606
        %4608 = vrot.lane.b32.xlu0 %v4599, 55
        %v4609 = vpop.permute.xlu0 %4608
        %v4610 = vsel %vm2251, %v4601, %v4603
        %v4611 = vsel %vm2251, %v4603, %v4605
        %v4612 = vsel %vm2251, %v4605, %v4607
        %v4613 = vsel %vm2251, %v4607, %v4609
        %v4616 = vsel %vm372, %v3237, %v4500
        %v4619 = vsel %vm372, %v3238, %v4501
        %v4622 = vsel %vm372, %v3239, %v4502
        %v4625 = vsel %vm372, %v3240, %v4503
        %v4628 = vsel %vm372, %v3241, %v4499
        %v4631 = vsel %vm372, %v4514, %v4541
        %v4634 = vsel %vm372, %v4515, %v4542
        %v4637 = vsel %vm372, %v4516, %v4543
        %v4640 = vsel %vm372, %v4517, %v4544
        %v4643 = vsel %vm372, %v4513, %v4540
        %v4646 = vsel %vm372, %v4555, %v4569
        %v4649 = vsel %vm372, %v4556, %v4570
        %v4652 = vsel %vm372, %v4557, %v4571
        %v4655 = vsel %vm372, %v4558, %v4572
        %v4658 = vsel %vm372, %v4554, %v4568
        %v4661 = vsel %vm372, %v4583, %v4610
        %v4664 = vsel %vm372, %v4584, %v4611
        %v4667 = vsel %vm372, %v4585, %v4612
        %v4670 = vsel %vm372, %v4586, %v4613
        %v4673 = vsel %vm372, %v4582, %v4609
        %s4674 = scalar_lea.vmem %s5, 6
        %v4675 = vld [vmem:[%s4674] sm:$0x3]
        %4696 = vrot.lane.b32.xlu0 %v4616, 119
        %v4697 = vpop.permute.xlu0 %4696
        %4698 = vrot.lane.b32.xlu0 %v4619, 119
        %v4699 = vpop.permute.xlu0 %4698
        %4700 = vrot.lane.b32.xlu0 %v4622, 119
        %v4701 = vpop.permute.xlu0 %4700
        %4702 = vrot.lane.b32.xlu0 %v4625, 119
        %v4703 = vpop.permute.xlu0 %4702
        %4704 = vrot.lane.b32.xlu0 %v4628, 119
        %v4705 = vpop.permute.xlu0 %4704
        %4706 = vrot.lane.b32.xlu0 %v4631, 119
        %v4707 = vpop.permute.xlu0 %4706
        %4708 = vrot.lane.b32.xlu0 %v4634, 119
        %v4709 = vpop.permute.xlu0 %4708
        %4710 = vrot.lane.b32.xlu0 %v4637, 119
        %v4711 = vpop.permute.xlu0 %4710
        %4712 = vrot.lane.b32.xlu0 %v4640, 119
        %v4713 = vpop.permute.xlu0 %4712
        %4714 = vrot.lane.b32.xlu0 %v4643, 119
        %v4715 = vpop.permute.xlu0 %4714
        %4716 = vrot.lane.b32.xlu0 %v4646, 119
        %v4717 = vpop.permute.xlu0 %4716
        %4718 = vrot.lane.b32.xlu0 %v4649, 119
        %v4719 = vpop.permute.xlu0 %4718
        %4720 = vrot.lane.b32.xlu0 %v4652, 119
        %v4721 = vpop.permute.xlu0 %4720
        %4722 = vrot.lane.b32.xlu0 %v4655, 119
        %v4723 = vpop.permute.xlu0 %4722
        %4724 = vrot.lane.b32.xlu0 %v4658, 119
        %v4725 = vpop.permute.xlu0 %4724
        %4726 = vrot.lane.b32.xlu0 %v4661, 119
        %v4727 = vpop.permute.xlu0 %4726
        %4728 = vrot.lane.b32.xlu0 %v4664, 119
        %v4729 = vpop.permute.xlu0 %4728
        %4730 = vrot.lane.b32.xlu0 %v4667, 119
        %v4731 = vpop.permute.xlu0 %4730
        %4732 = vrot.lane.b32.xlu0 %v4670, 119
        %v4733 = vpop.permute.xlu0 %4732
        %4734 = vrot.lane.b32.xlu0 %v4673, 119
        %v4735 = vpop.permute.xlu0 %4734
        %v4736 = vsel %vm1585, %v4697, %v4699
        %v4737 = vsel %vm1585, %v4699, %v4701
        %v4738 = vsel %vm1585, %v4701, %v4703
        %v4739 = vsel %vm1585, %v4703, %v4705
        %v4740 = vsel %vm1585, %v4707, %v4709
        %v4741 = vsel %vm1585, %v4709, %v4711
        %v4742 = vsel %vm1585, %v4711, %v4713
        %v4743 = vsel %vm1585, %v4713, %v4715
        %v4744 = vsel %vm1585, %v4717, %v4719
        %v4745 = vsel %vm1585, %v4719, %v4721
        %v4746 = vsel %vm1585, %v4721, %v4723
        %v4747 = vsel %vm1585, %v4723, %v4725
        %v4748 = vsel %vm1585, %v4727, %v4729
        %v4749 = vsel %vm1585, %v4729, %v4731
        %v4750 = vsel %vm1585, %v4731, %v4733
        %v4751 = vsel %vm1585, %v4733, %v4735
        %v4769 = vsel %vm887, %v4675, 0
        %4771 = vmatpush.bf16.msra.mxu0 0
        %4772 = vmatpush.bf16.msra.mxu0 0
        %4773 = vmatpush.bf16.msra.mxu0 0
        %4774 = vmatpush.bf16.msra.mxu0 0
        %4775 = vmatpush.bf16.msra.mxu0 %v4748
        %4776 = vmatpush.bf16.msra.mxu0 %v4744
        %4777 = vmatpush.bf16.msra.mxu0 %v4740
        %4778 = vmatpush.bf16.msra.mxu0 %v4736
        %4779 = vmatmul.bf16.gmra.mxu0 %v4769
        %v4780 = vpop.f32.mrf.mxu0
        %v4781 = vadd.f32 %v3433, %v4780
        %v4782 = vpop.f32.mrf.mxu0
        %4783 = vdwg.mxu0
        %4784 = vmatpush.bf16.msra.mxu0 0
        %4785 = vmatpush.bf16.msra.mxu0 0
        %4786 = vmatpush.bf16.msra.mxu0 0
        %4787 = vmatpush.bf16.msra.mxu0 0
        %4788 = vmatpush.bf16.msra.mxu0 %v4749
        %4789 = vmatpush.bf16.msra.mxu0 %v4745
        %4790 = vmatpush.bf16.msra.mxu0 %v4741
        %4791 = vmatpush.bf16.msra.mxu0 %v4737
        %4792 = vmatmul.bf16.gmra.mxu0 %v4769
        %v4793 = vpop.f32.mrf.mxu0
        %v4794 = vadd.f32 %v3433, %v4793
        %v4795 = vpop.f32.mrf.mxu0
        %4796 = vdwg.mxu0
        %4797 = vmatpush.bf16.msra.mxu0 0
        %4798 = vmatpush.bf16.msra.mxu0 0
        %4799 = vmatpush.bf16.msra.mxu0 0
        %4800 = vmatpush.bf16.msra.mxu0 0
        %4801 = vmatpush.bf16.msra.mxu0 %v4750
        %4802 = vmatpush.bf16.msra.mxu0 %v4746
        %4803 = vmatpush.bf16.msra.mxu0 %v4742
        %4804 = vmatpush.bf16.msra.mxu0 %v4738
        %4805 = vmatmul.bf16.gmra.mxu0 %v4769
        %v4806 = vpop.f32.mrf.mxu0
        %v4807 = vadd.f32 %v3433, %v4806
        %v4808 = vpop.f32.mrf.mxu0
        %4809 = vdwg.mxu0
        %4810 = vmatpush.bf16.msra.mxu0 0
        %4811 = vmatpush.bf16.msra.mxu0 0
        %4812 = vmatpush.bf16.msra.mxu0 0
        %4813 = vmatpush.bf16.msra.mxu0 0
        %4814 = vmatpush.bf16.msra.mxu0 %v4751
        %4815 = vmatpush.bf16.msra.mxu0 %v4747
        %4816 = vmatpush.bf16.msra.mxu0 %v4743
        %4817 = vmatpush.bf16.msra.mxu0 %v4739
        %4818 = vmatmul.bf16.gmra.mxu0 %v4769
        %v4819 = vpop.f32.mrf.mxu0
        %v4820 = vadd.f32 %v3433, %v4819
        %v4821 = vpop.f32.mrf.mxu0
        %4822 = vdwg.mxu0
        %vm4823 = vcmp.gt.f32.partialorder %v4781, 0.0
        %vm4824 = vcmp.gt.f32.partialorder %v4794, 0.0
        %vm4825 = vcmp.gt.f32.partialorder %v4807, 0.0
        %vm4826 = vcmp.gt.f32.partialorder %v4820, 0.0
        %v4827 = vmul.f32 %v3498, %v4781
        %v4828 = vmul.f32 %v3498, %v4794
        %v4829 = vmul.f32 %v3498, %v4807
        %v4830 = vmul.f32 %v3498, %v4820
        %v4831 = vsel %vm4823, %v4781, %v4827
        %v4832 = vsel %vm4824, %v4794, %v4828
        %v4833 = vsel %vm4825, %v4807, %v4829
        %v4834 = vsel %vm4826, %v4820, %v4830
        %v4835 = vmul.f32 %v2987, %v1389
        %v4836 = vmul.f32 %v2988, %v1390
        %v4837 = vmul.f32 %v2989, %v1391
        %v4838 = vmul.f32 %v2996, %v1392
        %v4839 = vpack.c.bf16 %v4836, %v4835
        %v4840 = vpack.c.bf16 %v4838, %v4837
        %v4841 = vunpack.c.l.bf16 0
        %4842 = vrot.lane.b32.xlu0 %v1440, 1
        %v4843 = vpop.permute.xlu0 %4842
        %4844 = vrot.lane.b32.xlu0 %v1441, 1
        %v4845 = vpop.permute.xlu0 %4844
        %4846 = vrot.lane.b32.xlu0 %v1442, 1
        %v4847 = vpop.permute.xlu0 %4846
        %4848 = vrot.lane.b32.xlu0 %v1443, 1
        %v4849 = vpop.permute.xlu0 %4848
        %v4850 = vsel %vm429, %v4843, %v4845
        %v4851 = vsel %vm429, %v4845, %v4847
        %v4852 = vsel %vm429, %v4847, %v4849
        %v4858 = vmul.f32 %v2987, %v4843
        %v4859 = vmul.f32 %v2988, %v4850
        %v4860 = vmul.f32 %v2989, %v4851
        %v4861 = vmul.f32 %v2996, %v4852
        %v4862 = vmul.f32 %v4841, %v4849
        %v4863 = vpack.c.bf16 %v4859, %v4858
        %v4864 = vpack.c.bf16 %v4861, %v4860
        %v4865 = vpack.c.bf16 %v4862, %v4862
        %4866 = vrot.lane.b32.xlu0 %v1540, 8
        %v4867 = vpop.permute.xlu0 %4866
        %4868 = vrot.lane.b32.xlu0 %v1541, 8
        %v4869 = vpop.permute.xlu0 %4868
        %4870 = vrot.lane.b32.xlu0 %v1542, 8
        %v4871 = vpop.permute.xlu0 %4870
        %4872 = vrot.lane.b32.xlu0 %v1543, 8
        %v4873 = vpop.permute.xlu0 %4872
        %v4874 = vsel %vm535, %v4867, %v4869
        %v4875 = vsel %vm535, %v4869, %v4871
        %v4876 = vsel %vm535, %v4871, %v4873
        %v4882 = vmul.f32 %v2987, %v4867
        %v4883 = vmul.f32 %v2988, %v4874
        %v4884 = vmul.f32 %v2989, %v4875
        %v4885 = vmul.f32 %v2996, %v4876
        %v4886 = vmul.f32 %v4841, %v4873
        %v4887 = vpack.c.bf16 %v4883, %v4882
        %v4888 = vpack.c.bf16 %v4885, %v4884
        %v4889 = vpack.c.bf16 %v4886, %v4886
        %4890 = vrot.lane.b32.xlu0 %v1590, 9
        %v4891 = vpop.permute.xlu0 %4890
        %4892 = vrot.lane.b32.xlu0 %v1591, 9
        %v4893 = vpop.permute.xlu0 %4892
        %4894 = vrot.lane.b32.xlu0 %v1592, 9
        %v4895 = vpop.permute.xlu0 %4894
        %4896 = vrot.lane.b32.xlu0 %v1593, 9
        %v4897 = vpop.permute.xlu0 %4896
        %v4898 = vsel %vm588, %v4891, %v4893
        %v4899 = vsel %vm588, %v4893, %v4895
        %v4900 = vsel %vm588, %v4895, %v4897
        %v4906 = vmul.f32 %v2987, %v4891
        %v4907 = vmul.f32 %v2988, %v4898
        %v4908 = vmul.f32 %v2989, %v4899
        %v4909 = vmul.f32 %v2996, %v4900
        %v4910 = vmul.f32 %v4841, %v4897
        %v4911 = vpack.c.bf16 %v4907, %v4906
        %v4912 = vpack.c.bf16 %v4909, %v4908
        %v4913 = vpack.c.bf16 %v4910, %v4910
        %4914 = vrot.lane.b32.xlu0 %v3291, 127
        %v4915 = vpop.permute.xlu0 %4914
        %4916 = vrot.lane.b32.xlu0 %v3292, 127
        %v4917 = vpop.permute.xlu0 %4916
        %4918 = vrot.lane.b32.xlu0 %v3293, 127
        %v4919 = vpop.permute.xlu0 %4918
        %4920 = vrot.lane.b32.xlu0 %v3294, 127
        %v4921 = vpop.permute.xlu0 %4920
        %4922 = vrot.lane.b32.xlu0 %v3295, 127
        %v4923 = vpop.permute.xlu0 %4922
        %v4924 = vsel %vm1435, %v4915, %v4917
        %v4925 = vsel %vm1435, %v4917, %v4919
        %v4926 = vsel %vm1435, %v4919, %v4921
        %v4927 = vsel %vm1435, %v4921, %v4923
        %4928 = vrot.lane.b32.xlu0 %v3318, 120
        %v4929 = vpop.permute.xlu0 %4928
        %4930 = vrot.lane.b32.xlu0 %v3319, 120
        %v4931 = vpop.permute.xlu0 %4930
        %4932 = vrot.lane.b32.xlu0 %v3320, 120
        %v4933 = vpop.permute.xlu0 %4932
        %4934 = vrot.lane.b32.xlu0 %v3321, 120
        %v4935 = vpop.permute.xlu0 %4934
        %4936 = vrot.lane.b32.xlu0 %v3322, 120
        %v4937 = vpop.permute.xlu0 %4936
        %v4938 = vsel %vm1535, %v4929, %v4931
        %v4939 = vsel %vm1535, %v4931, %v4933
        %v4940 = vsel %vm1535, %v4933, %v4935
        %v4941 = vsel %vm1535, %v4935, %v4937
        %4942 = vrot.lane.b32.xlu0 %v3345, 119
        %v4943 = vpop.permute.xlu0 %4942
        %4944 = vrot.lane.b32.xlu0 %v3346, 119
        %v4945 = vpop.permute.xlu0 %4944
        %4946 = vrot.lane.b32.xlu0 %v3347, 119
        %v4947 = vpop.permute.xlu0 %4946
        %4948 = vrot.lane.b32.xlu0 %v3348, 119
        %v4949 = vpop.permute.xlu0 %4948
        %4950 = vrot.lane.b32.xlu0 %v3349, 119
        %v4951 = vpop.permute.xlu0 %4950
        %v4952 = vsel %vm1585, %v4943, %v4945
        %v4953 = vsel %vm1585, %v4945, %v4947
        %v4954 = vsel %vm1585, %v4947, %v4949
        %v4955 = vsel %vm1585, %v4949, %v4951
        %v4958 = vunpack.c.l.b16 %v4839
        %v4959 = vunpack.c.h.b16 %v4839
        %v4960 = vunpack.c.l.b16 %v4840
        %v4961 = vunpack.c.h.b16 %v4840
        %v4962 = vpack.c.b16 %v4958, %v4958
        %v4963 = vpack.c.b16 %v4959, %v4959
        %v4964 = vpack.c.b16 %v4960, %v4960
        %v4965 = vpack.c.b16 %v4961, %v4961
        %4966 = vrot.lane.b32.xlu0 %v4962, 64
        %v4967 = vpop.permute.xlu0 %4966
        %4968 = vrot.lane.b32.xlu0 %v4963, 64
        %v4969 = vpop.permute.xlu0 %4968
        %4970 = vrot.lane.b32.xlu0 %v4964, 64
        %v4971 = vpop.permute.xlu0 %4970
        %4972 = vrot.lane.b32.xlu0 %v4965, 64
        %v4973 = vpop.permute.xlu0 %4972
        %v4974 = vsel %vm2129, %v4967, %v4969
        %v4975 = vsel %vm2129, %v4969, %v4971
        %v4976 = vsel %vm2129, %v4971, %v4973
        %v4980 = vunpack.c.l.b16 %v4863
        %v4981 = vunpack.c.h.b16 %v4863
        %v4982 = vunpack.c.l.b16 %v4864
        %v4983 = vunpack.c.h.b16 %v4864
        %v4984 = vunpack.c.l.b16 %v4865
        %v4985 = vpack.c.b16 %v4980, %v4980
        %v4986 = vpack.c.b16 %v4981, %v4981
        %v4987 = vpack.c.b16 %v4982, %v4982
        %v4988 = vpack.c.b16 %v4983, %v4983
        %v4989 = vpack.c.b16 %v4984, %v4984
        %4990 = vrot.lane.b32.xlu0 %v4985, 63
        %v4991 = vpop.permute.xlu0 %4990
        %4992 = vrot.lane.b32.xlu0 %v4986, 63
        %v4993 = vpop.permute.xlu0 %4992
        %4994 = vrot.lane.b32.xlu0 %v4987, 63
        %v4995 = vpop.permute.xlu0 %4994
        %4996 = vrot.lane.b32.xlu0 %v4988, 63
        %v4997 = vpop.permute.xlu0 %4996
        %4998 = vrot.lane.b32.xlu0 %v4989, 63
        %v4999 = vpop.permute.xlu0 %4998
        %v5000 = vsel %vm2157, %v4991, %v4993
        %v5001 = vsel %vm2157, %v4993, %v4995
        %v5002 = vsel %vm2157, %v4995, %v4997
        %v5003 = vsel %vm2157, %v4997, %v4999
        %v5007 = vunpack.c.l.b16 %v4887
        %v5008 = vunpack.c.h.b16 %v4887
        %v5009 = vunpack.c.l.b16 %v4888
        %v5010 = vunpack.c.h.b16 %v4888
        %v5011 = vunpack.c.l.b16 %v4889
        %v5012 = vpack.c.b16 %v5007, %v5007
        %v5013 = vpack.c.b16 %v5008, %v5008
        %v5014 = vpack.c.b16 %v5009, %v5009
        %v5015 = vpack.c.b16 %v5010, %v5010
        %v5016 = vpack.c.b16 %v5011, %v5011
        %5017 = vrot.lane.b32.xlu0 %v5012, 56
        %v5018 = vpop.permute.xlu0 %5017
        %5019 = vrot.lane.b32.xlu0 %v5013, 56
        %v5020 = vpop.permute.xlu0 %5019
        %5021 = vrot.lane.b32.xlu0 %v5014, 56
        %v5022 = vpop.permute.xlu0 %5021
        %5023 = vrot.lane.b32.xlu0 %v5015, 56
        %v5024 = vpop.permute.xlu0 %5023
        %5025 = vrot.lane.b32.xlu0 %v5016, 56
        %v5026 = vpop.permute.xlu0 %5025
        %v5027 = vsel %vm2218, %v5018, %v5020
        %v5028 = vsel %vm2218, %v5020, %v5022
        %v5029 = vsel %vm2218, %v5022, %v5024
        %v5030 = vsel %vm2218, %v5024, %v5026
        %v5034 = vunpack.c.l.b16 %v4911
        %v5035 = vunpack.c.h.b16 %v4911
        %v5036 = vunpack.c.l.b16 %v4912
        %v5037 = vunpack.c.h.b16 %v4912
        %v5038 = vunpack.c.l.b16 %v4913
        %v5039 = vpack.c.b16 %v5034, %v5034
        %v5040 = vpack.c.b16 %v5035, %v5035
        %v5041 = vpack.c.b16 %v5036, %v5036
        %v5042 = vpack.c.b16 %v5037, %v5037
        %v5043 = vpack.c.b16 %v5038, %v5038
        %5044 = vrot.lane.b32.xlu0 %v5039, 55
        %v5045 = vpop.permute.xlu0 %5044
        %5046 = vrot.lane.b32.xlu0 %v5040, 55
        %v5047 = vpop.permute.xlu0 %5046
        %5048 = vrot.lane.b32.xlu0 %v5041, 55
        %v5049 = vpop.permute.xlu0 %5048
        %5050 = vrot.lane.b32.xlu0 %v5042, 55
        %v5051 = vpop.permute.xlu0 %5050
        %5052 = vrot.lane.b32.xlu0 %v5043, 55
        %v5053 = vpop.permute.xlu0 %5052
        %v5054 = vsel %vm2251, %v5045, %v5047
        %v5055 = vsel %vm2251, %v5047, %v5049
        %v5056 = vsel %vm2251, %v5049, %v5051
        %v5057 = vsel %vm2251, %v5051, %v5053
        %v5060 = vsel %vm372, %v3264, %v4924
        %v5063 = vsel %vm372, %v3265, %v4925
        %v5066 = vsel %vm372, %v3266, %v4926
        %v5069 = vsel %vm372, %v3267, %v4927
        %v5072 = vsel %vm372, %v3268, %v4923
        %v5075 = vsel %vm372, %v4938, %v4952
        %v5078 = vsel %vm372, %v4939, %v4953
        %v5081 = vsel %vm372, %v4940, %v4954
        %v5084 = vsel %vm372, %v4941, %v4955
        %v5087 = vsel %vm372, %v4937, %v4951
        %v5090 = vsel %vm372, %v4967, %v4991
        %v5093 = vsel %vm372, %v4974, %v5000
        %v5096 = vsel %vm372, %v4975, %v5001
        %v5099 = vsel %vm372, %v4976, %v5002
        %v5102 = vsel %vm372, %v4973, %v5003
        %v5105 = vsel %vm372, %v5018, %v5045
        %v5108 = vsel %vm372, %v5027, %v5054
        %v5111 = vsel %vm372, %v5028, %v5055
        %v5114 = vsel %vm372, %v5029, %v5056
        %v5117 = vsel %vm372, %v5030, %v5057
        %s5118 = scalar_lea.vmem %s5, 8
        %v5119 = vld [vmem:[%s5118] sm:$0x3]
        %5140 = vrot.lane.b32.xlu0 %v5060, 64
        %v5141 = vpop.permute.xlu0 %5140
        %5142 = vrot.lane.b32.xlu0 %v5063, 64
        %v5143 = vpop.permute.xlu0 %5142
        %5144 = vrot.lane.b32.xlu0 %v5066, 64
        %v5145 = vpop.permute.xlu0 %5144
        %5146 = vrot.lane.b32.xlu0 %v5069, 64
        %v5147 = vpop.permute.xlu0 %5146
        %5148 = vrot.lane.b32.xlu0 %v5072, 64
        %v5149 = vpop.permute.xlu0 %5148
        %5150 = vrot.lane.b32.xlu0 %v5075, 64
        %v5151 = vpop.permute.xlu0 %5150
        %5152 = vrot.lane.b32.xlu0 %v5078, 64
        %v5153 = vpop.permute.xlu0 %5152
        %5154 = vrot.lane.b32.xlu0 %v5081, 64
        %v5155 = vpop.permute.xlu0 %5154
        %5156 = vrot.lane.b32.xlu0 %v5084, 64
        %v5157 = vpop.permute.xlu0 %5156
        %5158 = vrot.lane.b32.xlu0 %v5087, 64
        %v5159 = vpop.permute.xlu0 %5158
        %5160 = vrot.lane.b32.xlu0 %v5090, 64
        %v5161 = vpop.permute.xlu0 %5160
        %5162 = vrot.lane.b32.xlu0 %v5093, 64
        %v5163 = vpop.permute.xlu0 %5162
        %5164 = vrot.lane.b32.xlu0 %v5096, 64
        %v5165 = vpop.permute.xlu0 %5164
        %5166 = vrot.lane.b32.xlu0 %v5099, 64
        %v5167 = vpop.permute.xlu0 %5166
        %5168 = vrot.lane.b32.xlu0 %v5102, 64
        %v5169 = vpop.permute.xlu0 %5168
        %5170 = vrot.lane.b32.xlu0 %v5105, 64
        %v5171 = vpop.permute.xlu0 %5170
        %5172 = vrot.lane.b32.xlu0 %v5108, 64
        %v5173 = vpop.permute.xlu0 %5172
        %5174 = vrot.lane.b32.xlu0 %v5111, 64
        %v5175 = vpop.permute.xlu0 %5174
        %5176 = vrot.lane.b32.xlu0 %v5114, 64
        %v5177 = vpop.permute.xlu0 %5176
        %5178 = vrot.lane.b32.xlu0 %v5117, 64
        %v5179 = vpop.permute.xlu0 %5178
        %v5180 = vsel %vm2129, %v5141, %v5143
        %v5181 = vsel %vm2129, %v5143, %v5145
        %v5182 = vsel %vm2129, %v5145, %v5147
        %v5183 = vsel %vm2129, %v5147, %v5149
        %v5184 = vsel %vm2129, %v5151, %v5153
        %v5185 = vsel %vm2129, %v5153, %v5155
        %v5186 = vsel %vm2129, %v5155, %v5157
        %v5187 = vsel %vm2129, %v5157, %v5159
        %v5188 = vsel %vm2129, %v5161, %v5163
        %v5189 = vsel %vm2129, %v5163, %v5165
        %v5190 = vsel %vm2129, %v5165, %v5167
        %v5191 = vsel %vm2129, %v5167, %v5169
        %v5192 = vsel %vm2129, %v5171, %v5173
        %v5193 = vsel %vm2129, %v5173, %v5175
        %v5194 = vsel %vm2129, %v5175, %v5177
        %v5195 = vsel %vm2129, %v5177, %v5179
        %v5213 = vsel %vm887, %v5119, 0
        %5215 = vmatpush.bf16.msra.mxu0 0
        %5216 = vmatpush.bf16.msra.mxu0 0
        %5217 = vmatpush.bf16.msra.mxu0 0
        %5218 = vmatpush.bf16.msra.mxu0 0
        %5219 = vmatpush.bf16.msra.mxu0 %v5192
        %5220 = vmatpush.bf16.msra.mxu0 %v5188
        %5221 = vmatpush.bf16.msra.mxu0 %v5184
        %5222 = vmatpush.bf16.msra.mxu0 %v5180
        %5223 = vmatmul.bf16.gmra.mxu0 %v5213
        %v5224 = vpop.f32.mrf.mxu0
        %v5225 = vadd.f32 %v3433, %v5224
        %v5226 = vpop.f32.mrf.mxu0
        %5227 = vdwg.mxu0
        %5228 = vmatpush.bf16.msra.mxu0 0
        %5229 = vmatpush.bf16.msra.mxu0 0
        %5230 = vmatpush.bf16.msra.mxu0 0
        %5231 = vmatpush.bf16.msra.mxu0 0
        %5232 = vmatpush.bf16.msra.mxu0 %v5193
        %5233 = vmatpush.bf16.msra.mxu0 %v5189
        %5234 = vmatpush.bf16.msra.mxu0 %v5185
        %5235 = vmatpush.bf16.msra.mxu0 %v5181
        %5236 = vmatmul.bf16.gmra.mxu0 %v5213
        %v5237 = vpop.f32.mrf.mxu0
        %v5238 = vadd.f32 %v3433, %v5237
        %v5239 = vpop.f32.mrf.mxu0
        %5240 = vdwg.mxu0
        %5241 = vmatpush.bf16.msra.mxu0 0
        %5242 = vmatpush.bf16.msra.mxu0 0
        %5243 = vmatpush.bf16.msra.mxu0 0
        %5244 = vmatpush.bf16.msra.mxu0 0
        %5245 = vmatpush.bf16.msra.mxu0 %v5194
        %5246 = vmatpush.bf16.msra.mxu0 %v5190
        %5247 = vmatpush.bf16.msra.mxu0 %v5186
        %5248 = vmatpush.bf16.msra.mxu0 %v5182
        %5249 = vmatmul.bf16.gmra.mxu0 %v5213
        %v5250 = vpop.f32.mrf.mxu0
        %v5251 = vadd.f32 %v3433, %v5250
        %v5252 = vpop.f32.mrf.mxu0
        %5253 = vdwg.mxu0
        %5254 = vmatpush.bf16.msra.mxu0 0
        %5255 = vmatpush.bf16.msra.mxu0 0
        %5256 = vmatpush.bf16.msra.mxu0 0
        %5257 = vmatpush.bf16.msra.mxu0 0
        %5258 = vmatpush.bf16.msra.mxu0 %v5195
        %5259 = vmatpush.bf16.msra.mxu0 %v5191
        %5260 = vmatpush.bf16.msra.mxu0 %v5187
        %5261 = vmatpush.bf16.msra.mxu0 %v5183
        %5262 = vmatmul.bf16.gmra.mxu0 %v5213
        %v5263 = vpop.f32.mrf.mxu0
        %v5264 = vadd.f32 %v3433, %v5263
        %v5265 = vpop.f32.mrf.mxu0
        %5266 = vdwg.mxu0
        %vm5267 = vcmp.gt.f32.partialorder %v5225, 0.0
        %vm5268 = vcmp.gt.f32.partialorder %v5238, 0.0
        %vm5269 = vcmp.gt.f32.partialorder %v5251, 0.0
        %vm5270 = vcmp.gt.f32.partialorder %v5264, 0.0
        %v5271 = vmul.f32 %v3498, %v5225
        %v5272 = vmul.f32 %v3498, %v5238
        %v5273 = vmul.f32 %v3498, %v5251
        %v5274 = vmul.f32 %v3498, %v5264
        %v5275 = vsel %vm5267, %v5225, %v5271
        %v5276 = vsel %vm5268, %v5238, %v5272
        %v5277 = vsel %vm5269, %v5251, %v5273
        %v5278 = vsel %vm5270, %v5264, %v5274
        %5279 = vrot.lane.b32.xlu0 %v1490, 2
        %v5280 = vpop.permute.xlu0 %5279
        %5281 = vrot.lane.b32.xlu0 %v1491, 2
        %v5282 = vpop.permute.xlu0 %5281
        %5283 = vrot.lane.b32.xlu0 %v1492, 2
        %v5284 = vpop.permute.xlu0 %5283
        %5285 = vrot.lane.b32.xlu0 %v1493, 2
        %v5286 = vpop.permute.xlu0 %5285
        %v5287 = vsel %vm482, %v5280, %v5282
        %v5288 = vsel %vm482, %v5282, %v5284
        %v5289 = vsel %vm482, %v5284, %v5286
        %v5295 = vmul.f32 %v2987, %v5280
        %v5296 = vmul.f32 %v2988, %v5287
        %v5297 = vmul.f32 %v2989, %v5288
        %v5298 = vmul.f32 %v2996, %v5289
        %v5299 = vmul.f32 %v4841, %v5286
        %v5300 = vpack.c.bf16 %v5296, %v5295
        %v5301 = vpack.c.bf16 %v5298, %v5297
        %v5302 = vpack.c.bf16 %v5299, %v5299
        %5303 = vrot.lane.b32.xlu0 %v1640, 10
        %v5304 = vpop.permute.xlu0 %5303
        %5305 = vrot.lane.b32.xlu0 %v1641, 10
        %v5306 = vpop.permute.xlu0 %5305
        %5307 = vrot.lane.b32.xlu0 %v1642, 10
        %v5308 = vpop.permute.xlu0 %5307
        %5309 = vrot.lane.b32.xlu0 %v1643, 10
        %v5310 = vpop.permute.xlu0 %5309
        %v5311 = vsel %vm641, %v5304, %v5306
        %v5312 = vsel %vm641, %v5306, %v5308
        %v5313 = vsel %vm641, %v5308, %v5310
        %v5319 = vmul.f32 %v2987, %v5304
        %v5320 = vmul.f32 %v2988, %v5311
        %v5321 = vmul.f32 %v2989, %v5312
        %v5322 = vmul.f32 %v2996, %v5313
        %v5323 = vmul.f32 %v4841, %v5310
        %v5324 = vpack.c.bf16 %v5320, %v5319
        %v5325 = vpack.c.bf16 %v5322, %v5321
        %v5326 = vpack.c.bf16 %v5323, %v5323
        %5327 = vrot.lane.b32.xlu0 %v3694, 127
        %v5328 = vpop.permute.xlu0 %5327
        %5329 = vrot.lane.b32.xlu0 %v3695, 127
        %v5330 = vpop.permute.xlu0 %5329
        %5331 = vrot.lane.b32.xlu0 %v3696, 127
        %v5332 = vpop.permute.xlu0 %5331
        %5333 = vrot.lane.b32.xlu0 %v3697, 127
        %v5334 = vpop.permute.xlu0 %5333
        %5335 = vrot.lane.b32.xlu0 %v3698, 127
        %v5336 = vpop.permute.xlu0 %5335
        %v5337 = vsel %vm1435, %v5328, %v5330
        %v5338 = vsel %vm1435, %v5330, %v5332
        %v5339 = vsel %vm1435, %v5332, %v5334
        %v5340 = vsel %vm1435, %v5334, %v5336
        %5341 = vrot.lane.b32.xlu0 %v3345, 120
        %v5342 = vpop.permute.xlu0 %5341
        %5343 = vrot.lane.b32.xlu0 %v3346, 120
        %v5344 = vpop.permute.xlu0 %5343
        %5345 = vrot.lane.b32.xlu0 %v3347, 120
        %v5346 = vpop.permute.xlu0 %5345
        %5347 = vrot.lane.b32.xlu0 %v3348, 120
        %v5348 = vpop.permute.xlu0 %5347
        %5349 = vrot.lane.b32.xlu0 %v3349, 120
        %v5350 = vpop.permute.xlu0 %5349
        %v5351 = vsel %vm1535, %v5342, %v5344
        %v5352 = vsel %vm1535, %v5344, %v5346
        %v5353 = vsel %vm1535, %v5346, %v5348
        %v5354 = vsel %vm1535, %v5348, %v5350
        %5355 = vrot.lane.b32.xlu0 %v3735, 119
        %v5356 = vpop.permute.xlu0 %5355
        %5357 = vrot.lane.b32.xlu0 %v3736, 119
        %v5358 = vpop.permute.xlu0 %5357
        %5359 = vrot.lane.b32.xlu0 %v3737, 119
        %v5360 = vpop.permute.xlu0 %5359
        %5361 = vrot.lane.b32.xlu0 %v3738, 119
        %v5362 = vpop.permute.xlu0 %5361
        %5363 = vrot.lane.b32.xlu0 %v3739, 119
        %v5364 = vpop.permute.xlu0 %5363
        %v5365 = vsel %vm1585, %v5356, %v5358
        %v5366 = vsel %vm1585, %v5358, %v5360
        %v5367 = vsel %vm1585, %v5360, %v5362
        %v5368 = vsel %vm1585, %v5362, %v5364
        %5369 = vrot.lane.b32.xlu0 %v4985, 64
        %v5370 = vpop.permute.xlu0 %5369
        %5371 = vrot.lane.b32.xlu0 %v4986, 64
        %v5372 = vpop.permute.xlu0 %5371
        %5373 = vrot.lane.b32.xlu0 %v4987, 64
        %v5374 = vpop.permute.xlu0 %5373
        %5375 = vrot.lane.b32.xlu0 %v4988, 64
        %v5376 = vpop.permute.xlu0 %5375
        %5377 = vrot.lane.b32.xlu0 %v4989, 64
        %v5378 = vpop.permute.xlu0 %5377
        %v5379 = vsel %vm2129, %v5370, %v5372
        %v5380 = vsel %vm2129, %v5372, %v5374
        %v5381 = vsel %vm2129, %v5374, %v5376
        %v5382 = vsel %vm2129, %v5376, %v5378
        %v5386 = vunpack.c.l.b16 %v5300
        %v5387 = vunpack.c.h.b16 %v5300
        %v5388 = vunpack.c.l.b16 %v5301
        %v5389 = vunpack.c.h.b16 %v5301
        %v5390 = vunpack.c.l.b16 %v5302
        %v5391 = vpack.c.b16 %v5386, %v5386
        %v5392 = vpack.c.b16 %v5387, %v5387
        %v5393 = vpack.c.b16 %v5388, %v5388
        %v5394 = vpack.c.b16 %v5389, %v5389
        %v5395 = vpack.c.b16 %v5390, %v5390
        %5396 = vrot.lane.b32.xlu0 %v5391, 63
        %v5397 = vpop.permute.xlu0 %5396
        %5398 = vrot.lane.b32.xlu0 %v5392, 63
        %v5399 = vpop.permute.xlu0 %5398
        %5400 = vrot.lane.b32.xlu0 %v5393, 63
        %v5401 = vpop.permute.xlu0 %5400
        %5402 = vrot.lane.b32.xlu0 %v5394, 63
        %v5403 = vpop.permute.xlu0 %5402
        %5404 = vrot.lane.b32.xlu0 %v5395, 63
        %v5405 = vpop.permute.xlu0 %5404
        %v5406 = vsel %vm2157, %v5397, %v5399
        %v5407 = vsel %vm2157, %v5399, %v5401
        %v5408 = vsel %vm2157, %v5401, %v5403
        %v5409 = vsel %vm2157, %v5403, %v5405
        %5410 = vrot.lane.b32.xlu0 %v5039, 56
        %v5411 = vpop.permute.xlu0 %5410
        %5412 = vrot.lane.b32.xlu0 %v5040, 56
        %v5413 = vpop.permute.xlu0 %5412
        %5414 = vrot.lane.b32.xlu0 %v5041, 56
        %v5415 = vpop.permute.xlu0 %5414
        %5416 = vrot.lane.b32.xlu0 %v5042, 56
        %v5417 = vpop.permute.xlu0 %5416
        %5418 = vrot.lane.b32.xlu0 %v5043, 56
        %v5419 = vpop.permute.xlu0 %5418
        %v5420 = vsel %vm2218, %v5411, %v5413
        %v5421 = vsel %vm2218, %v5413, %v5415
        %v5422 = vsel %vm2218, %v5415, %v5417
        %v5423 = vsel %vm2218, %v5417, %v5419
        %v5427 = vunpack.c.l.b16 %v5324
        %v5428 = vunpack.c.h.b16 %v5324
        %v5429 = vunpack.c.l.b16 %v5325
        %v5430 = vunpack.c.h.b16 %v5325
        %v5431 = vunpack.c.l.b16 %v5326
        %v5432 = vpack.c.b16 %v5427, %v5427
        %v5433 = vpack.c.b16 %v5428, %v5428
        %v5434 = vpack.c.b16 %v5429, %v5429
        %v5435 = vpack.c.b16 %v5430, %v5430
        %v5436 = vpack.c.b16 %v5431, %v5431
        %5437 = vrot.lane.b32.xlu0 %v5432, 55
        %v5438 = vpop.permute.xlu0 %5437
        %5439 = vrot.lane.b32.xlu0 %v5433, 55
        %v5440 = vpop.permute.xlu0 %5439
        %5441 = vrot.lane.b32.xlu0 %v5434, 55
        %v5442 = vpop.permute.xlu0 %5441
        %5443 = vrot.lane.b32.xlu0 %v5435, 55
        %v5444 = vpop.permute.xlu0 %5443
        %5445 = vrot.lane.b32.xlu0 %v5436, 55
        %v5446 = vpop.permute.xlu0 %5445
        %v5447 = vsel %vm2251, %v5438, %v5440
        %v5448 = vsel %vm2251, %v5440, %v5442
        %v5449 = vsel %vm2251, %v5442, %v5444
        %v5450 = vsel %vm2251, %v5444, %v5446
        %v5453 = vsel %vm372, %v3291, %v5337
        %v5456 = vsel %vm372, %v3292, %v5338
        %v5459 = vsel %vm372, %v3293, %v5339
        %v5462 = vsel %vm372, %v3294, %v5340
        %v5465 = vsel %vm372, %v3295, %v5336
        %v5468 = vsel %vm372, %v5351, %v5365
        %v5471 = vsel %vm372, %v5352, %v5366
        %v5474 = vsel %vm372, %v5353, %v5367
        %v5477 = vsel %vm372, %v5354, %v5368
        %v5480 = vsel %vm372, %v5350, %v5364
        %v5483 = vsel %vm372, %v5370, %v5397
        %v5486 = vsel %vm372, %v5379, %v5406
        %v5489 = vsel %vm372, %v5380, %v5407
        %v5492 = vsel %vm372, %v5381, %v5408
        %v5495 = vsel %vm372, %v5382, %v5409
        %v5498 = vsel %vm372, %v5411, %v5438
        %v5501 = vsel %vm372, %v5420, %v5447
        %v5504 = vsel %vm372, %v5421, %v5448
        %v5507 = vsel %vm372, %v5422, %v5449
        %v5510 = vsel %vm372, %v5423, %v5450
        %s5511 = scalar_lea.vmem %s5, 10
        %v5512 = vld [vmem:[%s5511] sm:$0x3]
        %5533 = vrot.lane.b32.xlu0 %v5453, 63
        %v5534 = vpop.permute.xlu0 %5533
        %5535 = vrot.lane.b32.xlu0 %v5456, 63
        %v5536 = vpop.permute.xlu0 %5535
        %5537 = vrot.lane.b32.xlu0 %v5459, 63
        %v5538 = vpop.permute.xlu0 %5537
        %5539 = vrot.lane.b32.xlu0 %v5462, 63
        %v5540 = vpop.permute.xlu0 %5539
        %5541 = vrot.lane.b32.xlu0 %v5465, 63
        %v5542 = vpop.permute.xlu0 %5541
        %5543 = vrot.lane.b32.xlu0 %v5468, 63
        %v5544 = vpop.permute.xlu0 %5543
        %5545 = vrot.lane.b32.xlu0 %v5471, 63
        %v5546 = vpop.permute.xlu0 %5545
        %5547 = vrot.lane.b32.xlu0 %v5474, 63
        %v5548 = vpop.permute.xlu0 %5547
        %5549 = vrot.lane.b32.xlu0 %v5477, 63
        %v5550 = vpop.permute.xlu0 %5549
        %5551 = vrot.lane.b32.xlu0 %v5480, 63
        %v5552 = vpop.permute.xlu0 %5551
        %5553 = vrot.lane.b32.xlu0 %v5483, 63
        %v5554 = vpop.permute.xlu0 %5553
        %5555 = vrot.lane.b32.xlu0 %v5486, 63
        %v5556 = vpop.permute.xlu0 %5555
        %5557 = vrot.lane.b32.xlu0 %v5489, 63
        %v5558 = vpop.permute.xlu0 %5557
        %5559 = vrot.lane.b32.xlu0 %v5492, 63
        %v5560 = vpop.permute.xlu0 %5559
        %5561 = vrot.lane.b32.xlu0 %v5495, 63
        %v5562 = vpop.permute.xlu0 %5561
        %5563 = vrot.lane.b32.xlu0 %v5498, 63
        %v5564 = vpop.permute.xlu0 %5563
        %5565 = vrot.lane.b32.xlu0 %v5501, 63
        %v5566 = vpop.permute.xlu0 %5565
        %5567 = vrot.lane.b32.xlu0 %v5504, 63
        %v5568 = vpop.permute.xlu0 %5567
        %5569 = vrot.lane.b32.xlu0 %v5507, 63
        %v5570 = vpop.permute.xlu0 %5569
        %5571 = vrot.lane.b32.xlu0 %v5510, 63
        %v5572 = vpop.permute.xlu0 %5571
        %v5573 = vsel %vm2157, %v5534, %v5536
        %v5574 = vsel %vm2157, %v5536, %v5538
        %v5575 = vsel %vm2157, %v5538, %v5540
        %v5576 = vsel %vm2157, %v5540, %v5542
        %v5577 = vsel %vm2157, %v5544, %v5546
        %v5578 = vsel %vm2157, %v5546, %v5548
        %v5579 = vsel %vm2157, %v5548, %v5550
        %v5580 = vsel %vm2157, %v5550, %v5552
        %v5581 = vsel %vm2157, %v5554, %v5556
        %v5582 = vsel %vm2157, %v5556, %v5558
        %v5583 = vsel %vm2157, %v5558, %v5560
        %v5584 = vsel %vm2157, %v5560, %v5562
        %v5585 = vsel %vm2157, %v5564, %v5566
        %v5586 = vsel %vm2157, %v5566, %v5568
        %v5587 = vsel %vm2157, %v5568, %v5570
        %v5588 = vsel %vm2157, %v5570, %v5572
        %v5606 = vsel %vm887, %v5512, 0
        %5608 = vmatpush.bf16.msra.mxu0 0
        %5609 = vmatpush.bf16.msra.mxu0 0
        %5610 = vmatpush.bf16.msra.mxu0 0
        %5611 = vmatpush.bf16.msra.mxu0 0
        %5612 = vmatpush.bf16.msra.mxu0 %v5585
        %5613 = vmatpush.bf16.msra.mxu0 %v5581
        %5614 = vmatpush.bf16.msra.mxu0 %v5577
        %5615 = vmatpush.bf16.msra.mxu0 %v5573
        %5616 = vmatmul.bf16.gmra.mxu0 %v5606
        %v5617 = vpop.f32.mrf.mxu0
        %v5618 = vadd.f32 %v3433, %v5617
        %v5619 = vpop.f32.mrf.mxu0
        %5620 = vdwg.mxu0
        %5621 = vmatpush.bf16.msra.mxu0 0
        %5622 = vmatpush.bf16.msra.mxu0 0
        %5623 = vmatpush.bf16.msra.mxu0 0
        %5624 = vmatpush.bf16.msra.mxu0 0
        %5625 = vmatpush.bf16.msra.mxu0 %v5586
        %5626 = vmatpush.bf16.msra.mxu0 %v5582
        %5627 = vmatpush.bf16.msra.mxu0 %v5578
        %5628 = vmatpush.bf16.msra.mxu0 %v5574
        %5629 = vmatmul.bf16.gmra.mxu0 %v5606
        %v5630 = vpop.f32.mrf.mxu0
        %v5631 = vadd.f32 %v3433, %v5630
        %v5632 = vpop.f32.mrf.mxu0
        %5633 = vdwg.mxu0
        %5634 = vmatpush.bf16.msra.mxu0 0
        %5635 = vmatpush.bf16.msra.mxu0 0
        %5636 = vmatpush.bf16.msra.mxu0 0
        %5637 = vmatpush.bf16.msra.mxu0 0
        %5638 = vmatpush.bf16.msra.mxu0 %v5587
        %5639 = vmatpush.bf16.msra.mxu0 %v5583
        %5640 = vmatpush.bf16.msra.mxu0 %v5579
        %5641 = vmatpush.bf16.msra.mxu0 %v5575
        %5642 = vmatmul.bf16.gmra.mxu0 %v5606
        %v5643 = vpop.f32.mrf.mxu0
        %v5644 = vadd.f32 %v3433, %v5643
        %v5645 = vpop.f32.mrf.mxu0
        %5646 = vdwg.mxu0
        %5647 = vmatpush.bf16.msra.mxu0 0
        %5648 = vmatpush.bf16.msra.mxu0 0
        %5649 = vmatpush.bf16.msra.mxu0 0
        %5650 = vmatpush.bf16.msra.mxu0 0
        %5651 = vmatpush.bf16.msra.mxu0 %v5588
        %5652 = vmatpush.bf16.msra.mxu0 %v5584
        %5653 = vmatpush.bf16.msra.mxu0 %v5580
        %5654 = vmatpush.bf16.msra.mxu0 %v5576
        %5655 = vmatmul.bf16.gmra.mxu0 %v5606
        %v5656 = vpop.f32.mrf.mxu0
        %v5657 = vadd.f32 %v3433, %v5656
        %v5658 = vpop.f32.mrf.mxu0
        %5659 = vdwg.mxu0
        %vm5660 = vcmp.gt.f32.partialorder %v5618, 0.0
        %vm5661 = vcmp.gt.f32.partialorder %v5631, 0.0
        %vm5662 = vcmp.gt.f32.partialorder %v5644, 0.0
        %vm5663 = vcmp.gt.f32.partialorder %v5657, 0.0
        %v5664 = vmul.f32 %v3498, %v5618
        %v5665 = vmul.f32 %v3498, %v5631
        %v5666 = vmul.f32 %v3498, %v5644
        %v5667 = vmul.f32 %v3498, %v5657
        %v5668 = vsel %vm5660, %v5618, %v5664
        %v5669 = vsel %vm5661, %v5631, %v5665
        %v5670 = vsel %vm5662, %v5644, %v5666
        %v5671 = vsel %vm5663, %v5657, %v5667
        %5672 = vrot.lane.b32.xlu0 %v1712, 16
        %v5673 = vpop.permute.xlu0 %5672
        %5674 = vrot.lane.b32.xlu0 %v1713, 16
        %v5675 = vpop.permute.xlu0 %5674
        %5676 = vrot.lane.b32.xlu0 %v1714, 16
        %v5677 = vpop.permute.xlu0 %5676
        %5678 = vrot.lane.b32.xlu0 %v1715, 16
        %v5679 = vpop.permute.xlu0 %5678
        %v5680 = vsel %vm694, %v5673, %v5675
        %v5681 = vsel %vm694, %v5675, %v5677
        %v5682 = vsel %vm694, %v5677, %v5679
        %v5688 = vmul.f32 %v2987, %v5673
        %v5689 = vmul.f32 %v2988, %v5680
        %v5690 = vmul.f32 %v2989, %v5681
        %v5691 = vmul.f32 %v2996, %v5682
        %v5692 = vmul.f32 %v4841, %v5679
        %v5693 = vpack.c.bf16 %v5689, %v5688
        %v5694 = vpack.c.bf16 %v5691, %v5690
        %v5695 = vpack.c.bf16 %v5692, %v5692
        %5696 = vrot.lane.b32.xlu0 %v1774, 17
        %v5697 = vpop.permute.xlu0 %5696
        %5698 = vrot.lane.b32.xlu0 %v1775, 17
        %v5699 = vpop.permute.xlu0 %5698
        %5700 = vrot.lane.b32.xlu0 %v1776, 17
        %v5701 = vpop.permute.xlu0 %5700
        %5702 = vrot.lane.b32.xlu0 %v1777, 17
        %v5703 = vpop.permute.xlu0 %5702
        %v5704 = vsel %vm747, %v5697, %v5699
        %v5705 = vsel %vm747, %v5699, %v5701
        %v5706 = vsel %vm747, %v5701, %v5703
        %v5712 = vmul.f32 %v2987, %v5697
        %v5713 = vmul.f32 %v2988, %v5704
        %v5714 = vmul.f32 %v2989, %v5705
        %v5715 = vmul.f32 %v2996, %v5706
        %v5716 = vmul.f32 %v4841, %v5703
        %v5717 = vpack.c.bf16 %v5713, %v5712
        %v5718 = vpack.c.bf16 %v5715, %v5714
        %v5719 = vpack.c.bf16 %v5716, %v5716
        %5720 = vrot.lane.b32.xlu0 %v3345, 127
        %v5721 = vpop.permute.xlu0 %5720
        %5722 = vrot.lane.b32.xlu0 %v3346, 127
        %v5723 = vpop.permute.xlu0 %5722
        %5724 = vrot.lane.b32.xlu0 %v3347, 127
        %v5725 = vpop.permute.xlu0 %5724
        %5726 = vrot.lane.b32.xlu0 %v3348, 127
        %v5727 = vpop.permute.xlu0 %5726
        %5728 = vrot.lane.b32.xlu0 %v3349, 127
        %v5729 = vpop.permute.xlu0 %5728
        %v5730 = vsel %vm1435, %v5721, %v5723
        %v5731 = vsel %vm1435, %v5723, %v5725
        %v5732 = vsel %vm1435, %v5725, %v5727
        %v5733 = vsel %vm1435, %v5727, %v5729
        %5734 = vrot.lane.b32.xlu0 %v4175, 120
        %v5735 = vpop.permute.xlu0 %5734
        %5736 = vrot.lane.b32.xlu0 %v4176, 120
        %v5737 = vpop.permute.xlu0 %5736
        %5738 = vrot.lane.b32.xlu0 %v4177, 120
        %v5739 = vpop.permute.xlu0 %5738
        %5740 = vrot.lane.b32.xlu0 %v4178, 120
        %v5741 = vpop.permute.xlu0 %5740
        %5742 = vrot.lane.b32.xlu0 %v4179, 120
        %v5743 = vpop.permute.xlu0 %5742
        %v5744 = vsel %vm1535, %v5735, %v5737
        %v5745 = vsel %vm1535, %v5737, %v5739
        %v5746 = vsel %vm1535, %v5739, %v5741
        %v5747 = vsel %vm1535, %v5741, %v5743
        %5748 = vrot.lane.b32.xlu0 %v4202, 119
        %v5749 = vpop.permute.xlu0 %5748
        %5750 = vrot.lane.b32.xlu0 %v4203, 119
        %v5751 = vpop.permute.xlu0 %5750
        %5752 = vrot.lane.b32.xlu0 %v4204, 119
        %v5753 = vpop.permute.xlu0 %5752
        %5754 = vrot.lane.b32.xlu0 %v4205, 119
        %v5755 = vpop.permute.xlu0 %5754
        %5756 = vrot.lane.b32.xlu0 %v4206, 119
        %v5757 = vpop.permute.xlu0 %5756
        %v5758 = vsel %vm1585, %v5749, %v5751
        %v5759 = vsel %vm1585, %v5751, %v5753
        %v5760 = vsel %vm1585, %v5753, %v5755
        %v5761 = vsel %vm1585, %v5755, %v5757
        %5762 = vrot.lane.b32.xlu0 %v5012, 64
        %v5763 = vpop.permute.xlu0 %5762
        %5764 = vrot.lane.b32.xlu0 %v5013, 64
        %v5765 = vpop.permute.xlu0 %5764
        %5766 = vrot.lane.b32.xlu0 %v5014, 64
        %v5767 = vpop.permute.xlu0 %5766
        %5768 = vrot.lane.b32.xlu0 %v5015, 64
        %v5769 = vpop.permute.xlu0 %5768
        %5770 = vrot.lane.b32.xlu0 %v5016, 64
        %v5771 = vpop.permute.xlu0 %5770
        %v5772 = vsel %vm2129, %v5763, %v5765
        %v5773 = vsel %vm2129, %v5765, %v5767
        %v5774 = vsel %vm2129, %v5767, %v5769
        %v5775 = vsel %vm2129, %v5769, %v5771
        %5776 = vrot.lane.b32.xlu0 %v5039, 63
        %v5777 = vpop.permute.xlu0 %5776
        %5778 = vrot.lane.b32.xlu0 %v5040, 63
        %v5779 = vpop.permute.xlu0 %5778
        %5780 = vrot.lane.b32.xlu0 %v5041, 63
        %v5781 = vpop.permute.xlu0 %5780
        %5782 = vrot.lane.b32.xlu0 %v5042, 63
        %v5783 = vpop.permute.xlu0 %5782
        %5784 = vrot.lane.b32.xlu0 %v5043, 63
        %v5785 = vpop.permute.xlu0 %5784
        %v5786 = vsel %vm2157, %v5777, %v5779
        %v5787 = vsel %vm2157, %v5779, %v5781
        %v5788 = vsel %vm2157, %v5781, %v5783
        %v5789 = vsel %vm2157, %v5783, %v5785
        %v5793 = vunpack.c.l.b16 %v5693
        %v5794 = vunpack.c.h.b16 %v5693
        %v5795 = vunpack.c.l.b16 %v5694
        %v5796 = vunpack.c.h.b16 %v5694
        %v5797 = vunpack.c.l.b16 %v5695
        %v5798 = vpack.c.b16 %v5793, %v5793
        %v5799 = vpack.c.b16 %v5794, %v5794
        %v5800 = vpack.c.b16 %v5795, %v5795
        %v5801 = vpack.c.b16 %v5796, %v5796
        %v5802 = vpack.c.b16 %v5797, %v5797
        %5803 = vrot.lane.b32.xlu0 %v5798, 56
        %v5804 = vpop.permute.xlu0 %5803
        %5805 = vrot.lane.b32.xlu0 %v5799, 56
        %v5806 = vpop.permute.xlu0 %5805
        %5807 = vrot.lane.b32.xlu0 %v5800, 56
        %v5808 = vpop.permute.xlu0 %5807
        %5809 = vrot.lane.b32.xlu0 %v5801, 56
        %v5810 = vpop.permute.xlu0 %5809
        %5811 = vrot.lane.b32.xlu0 %v5802, 56
        %v5812 = vpop.permute.xlu0 %5811
        %v5813 = vsel %vm2218, %v5804, %v5806
        %v5814 = vsel %vm2218, %v5806, %v5808
        %v5815 = vsel %vm2218, %v5808, %v5810
        %v5816 = vsel %vm2218, %v5810, %v5812
        %v5820 = vunpack.c.l.b16 %v5717
        %v5821 = vunpack.c.h.b16 %v5717
        %v5822 = vunpack.c.l.b16 %v5718
        %v5823 = vunpack.c.h.b16 %v5718
        %v5824 = vunpack.c.l.b16 %v5719
        %v5825 = vpack.c.b16 %v5820, %v5820
        %v5826 = vpack.c.b16 %v5821, %v5821
        %v5827 = vpack.c.b16 %v5822, %v5822
        %v5828 = vpack.c.b16 %v5823, %v5823
        %v5829 = vpack.c.b16 %v5824, %v5824
        %5830 = vrot.lane.b32.xlu0 %v5825, 55
        %v5831 = vpop.permute.xlu0 %5830
        %5832 = vrot.lane.b32.xlu0 %v5826, 55
        %v5833 = vpop.permute.xlu0 %5832
        %5834 = vrot.lane.b32.xlu0 %v5827, 55
        %v5835 = vpop.permute.xlu0 %5834
        %5836 = vrot.lane.b32.xlu0 %v5828, 55
        %v5837 = vpop.permute.xlu0 %5836
        %5838 = vrot.lane.b32.xlu0 %v5829, 55
        %v5839 = vpop.permute.xlu0 %5838
        %v5840 = vsel %vm2251, %v5831, %v5833
        %v5841 = vsel %vm2251, %v5833, %v5835
        %v5842 = vsel %vm2251, %v5835, %v5837
        %v5843 = vsel %vm2251, %v5837, %v5839
        %v5846 = vsel %vm372, %v3318, %v5730
        %v5849 = vsel %vm372, %v3319, %v5731
        %v5852 = vsel %vm372, %v3320, %v5732
        %v5855 = vsel %vm372, %v3321, %v5733
        %v5858 = vsel %vm372, %v3322, %v5729
        %v5861 = vsel %vm372, %v5744, %v5758
        %v5864 = vsel %vm372, %v5745, %v5759
        %v5867 = vsel %vm372, %v5746, %v5760
        %v5870 = vsel %vm372, %v5747, %v5761
        %v5873 = vsel %vm372, %v5743, %v5757
        %v5876 = vsel %vm372, %v5763, %v5777
        %v5879 = vsel %vm372, %v5772, %v5786
        %v5882 = vsel %vm372, %v5773, %v5787
        %v5885 = vsel %vm372, %v5774, %v5788
        %v5888 = vsel %vm372, %v5775, %v5789
        %v5891 = vsel %vm372, %v5804, %v5831
        %v5894 = vsel %vm372, %v5813, %v5840
        %v5897 = vsel %vm372, %v5814, %v5841
        %v5900 = vsel %vm372, %v5815, %v5842
        %v5903 = vsel %vm372, %v5816, %v5843
        %s5904 = scalar_lea.vmem %s5, 12
        %v5905 = vld [vmem:[%s5904] sm:$0x3]
        %5926 = vrot.lane.b32.xlu0 %v5846, 56
        %v5927 = vpop.permute.xlu0 %5926
        %5928 = vrot.lane.b32.xlu0 %v5849, 56
        %v5929 = vpop.permute.xlu0 %5928
        %5930 = vrot.lane.b32.xlu0 %v5852, 56
        %v5931 = vpop.permute.xlu0 %5930
        %5932 = vrot.lane.b32.xlu0 %v5855, 56
        %v5933 = vpop.permute.xlu0 %5932
        %5934 = vrot.lane.b32.xlu0 %v5858, 56
        %v5935 = vpop.permute.xlu0 %5934
        %5936 = vrot.lane.b32.xlu0 %v5861, 56
        %v5937 = vpop.permute.xlu0 %5936
        %5938 = vrot.lane.b32.xlu0 %v5864, 56
        %v5939 = vpop.permute.xlu0 %5938
        %5940 = vrot.lane.b32.xlu0 %v5867, 56
        %v5941 = vpop.permute.xlu0 %5940
        %5942 = vrot.lane.b32.xlu0 %v5870, 56
        %v5943 = vpop.permute.xlu0 %5942
        %5944 = vrot.lane.b32.xlu0 %v5873, 56
        %v5945 = vpop.permute.xlu0 %5944
        %5946 = vrot.lane.b32.xlu0 %v5876, 56
        %v5947 = vpop.permute.xlu0 %5946
        %5948 = vrot.lane.b32.xlu0 %v5879, 56
        %v5949 = vpop.permute.xlu0 %5948
        %5950 = vrot.lane.b32.xlu0 %v5882, 56
        %v5951 = vpop.permute.xlu0 %5950
        %5952 = vrot.lane.b32.xlu0 %v5885, 56
        %v5953 = vpop.permute.xlu0 %5952
        %5954 = vrot.lane.b32.xlu0 %v5888, 56
        %v5955 = vpop.permute.xlu0 %5954
        %5956 = vrot.lane.b32.xlu0 %v5891, 56
        %v5957 = vpop.permute.xlu0 %5956
        %5958 = vrot.lane.b32.xlu0 %v5894, 56
        %v5959 = vpop.permute.xlu0 %5958
        %5960 = vrot.lane.b32.xlu0 %v5897, 56
        %v5961 = vpop.permute.xlu0 %5960
        %5962 = vrot.lane.b32.xlu0 %v5900, 56
        %v5963 = vpop.permute.xlu0 %5962
        %5964 = vrot.lane.b32.xlu0 %v5903, 56
        %v5965 = vpop.permute.xlu0 %5964
        %v5966 = vsel %vm2218, %v5927, %v5929
        %v5967 = vsel %vm2218, %v5929, %v5931
        %v5968 = vsel %vm2218, %v5931, %v5933
        %v5969 = vsel %vm2218, %v5933, %v5935
        %v5970 = vsel %vm2218, %v5937, %v5939
        %v5971 = vsel %vm2218, %v5939, %v5941
        %v5972 = vsel %vm2218, %v5941, %v5943
        %v5973 = vsel %vm2218, %v5943, %v5945
        %v5974 = vsel %vm2218, %v5947, %v5949
        %v5975 = vsel %vm2218, %v5949, %v5951
        %v5976 = vsel %vm2218, %v5951, %v5953
        %v5977 = vsel %vm2218, %v5953, %v5955
        %v5978 = vsel %vm2218, %v5957, %v5959
        %v5979 = vsel %vm2218, %v5959, %v5961
        %v5980 = vsel %vm2218, %v5961, %v5963
        %v5981 = vsel %vm2218, %v5963, %v5965
        %v5999 = vsel %vm887, %v5905, 0
        %6001 = vmatpush.bf16.msra.mxu0 0
        %6002 = vmatpush.bf16.msra.mxu0 0
        %6003 = vmatpush.bf16.msra.mxu0 0
        %6004 = vmatpush.bf16.msra.mxu0 0
        %6005 = vmatpush.bf16.msra.mxu0 %v5978
        %6006 = vmatpush.bf16.msra.mxu0 %v5974
        %6007 = vmatpush.bf16.msra.mxu0 %v5970
        %6008 = vmatpush.bf16.msra.mxu0 %v5966
        %6009 = vmatmul.bf16.gmra.mxu0 %v5999
        %v6010 = vpop.f32.mrf.mxu0
        %v6011 = vadd.f32 %v3433, %v6010
        %v6012 = vpop.f32.mrf.mxu0
        %6013 = vdwg.mxu0
        %6014 = vmatpush.bf16.msra.mxu0 0
        %6015 = vmatpush.bf16.msra.mxu0 0
        %6016 = vmatpush.bf16.msra.mxu0 0
        %6017 = vmatpush.bf16.msra.mxu0 0
        %6018 = vmatpush.bf16.msra.mxu0 %v5979
        %6019 = vmatpush.bf16.msra.mxu0 %v5975
        %6020 = vmatpush.bf16.msra.mxu0 %v5971
        %6021 = vmatpush.bf16.msra.mxu0 %v5967
        %6022 = vmatmul.bf16.gmra.mxu0 %v5999
        %v6023 = vpop.f32.mrf.mxu0
        %v6024 = vadd.f32 %v3433, %v6023
        %v6025 = vpop.f32.mrf.mxu0
        %6026 = vdwg.mxu0
        %6027 = vmatpush.bf16.msra.mxu0 0
        %6028 = vmatpush.bf16.msra.mxu0 0
        %6029 = vmatpush.bf16.msra.mxu0 0
        %6030 = vmatpush.bf16.msra.mxu0 0
        %6031 = vmatpush.bf16.msra.mxu0 %v5980
        %6032 = vmatpush.bf16.msra.mxu0 %v5976
        %6033 = vmatpush.bf16.msra.mxu0 %v5972
        %6034 = vmatpush.bf16.msra.mxu0 %v5968
        %6035 = vmatmul.bf16.gmra.mxu0 %v5999
        %v6036 = vpop.f32.mrf.mxu0
        %v6037 = vadd.f32 %v3433, %v6036
        %v6038 = vpop.f32.mrf.mxu0
        %6039 = vdwg.mxu0
        %6040 = vmatpush.bf16.msra.mxu0 0
        %6041 = vmatpush.bf16.msra.mxu0 0
        %6042 = vmatpush.bf16.msra.mxu0 0
        %6043 = vmatpush.bf16.msra.mxu0 0
        %6044 = vmatpush.bf16.msra.mxu0 %v5981
        %6045 = vmatpush.bf16.msra.mxu0 %v5977
        %6046 = vmatpush.bf16.msra.mxu0 %v5973
        %6047 = vmatpush.bf16.msra.mxu0 %v5969
        %6048 = vmatmul.bf16.gmra.mxu0 %v5999
        %v6049 = vpop.f32.mrf.mxu0
        %v6050 = vadd.f32 %v3433, %v6049
        %v6051 = vpop.f32.mrf.mxu0
        %6052 = vdwg.mxu0
        %vm6053 = vcmp.gt.f32.partialorder %v6011, 0.0
        %vm6054 = vcmp.gt.f32.partialorder %v6024, 0.0
        %vm6055 = vcmp.gt.f32.partialorder %v6037, 0.0
        %vm6056 = vcmp.gt.f32.partialorder %v6050, 0.0
        %v6057 = vmul.f32 %v3498, %v6011
        %v6058 = vmul.f32 %v3498, %v6024
        %v6059 = vmul.f32 %v3498, %v6037
        %v6060 = vmul.f32 %v3498, %v6050
        %v6061 = vsel %vm6053, %v6011, %v6057
        %v6062 = vsel %vm6054, %v6024, %v6058
        %v6063 = vsel %vm6055, %v6037, %v6059
        %v6064 = vsel %vm6056, %v6050, %v6060
        %6065 = vrot.lane.b32.xlu0 %v1824, 18
        %v6066 = vpop.permute.xlu0 %6065
        %6067 = vrot.lane.b32.xlu0 %v1825, 18
        %v6068 = vpop.permute.xlu0 %6067
        %6069 = vrot.lane.b32.xlu0 %v1826, 18
        %v6070 = vpop.permute.xlu0 %6069
        %6071 = vrot.lane.b32.xlu0 %v1827, 18
        %v6072 = vpop.permute.xlu0 %6071
        %v6073 = vsel %vm822, %v6066, %v6068
        %v6074 = vsel %vm822, %v6068, %v6070
        %v6075 = vsel %vm822, %v6070, %v6072
        %v6081 = vmul.f32 %v2987, %v6066
        %v6082 = vmul.f32 %v2988, %v6073
        %v6083 = vmul.f32 %v2989, %v6074
        %v6084 = vmul.f32 %v2996, %v6075
        %v6085 = vmul.f32 %v4841, %v6072
        %v6086 = vpack.c.bf16 %v6082, %v6081
        %v6087 = vpack.c.bf16 %v6084, %v6083
        %v6088 = vpack.c.bf16 %v6085, %v6085
        %6089 = vrot.lane.b32.xlu0 %v3735, 127
        %v6090 = vpop.permute.xlu0 %6089
        %6091 = vrot.lane.b32.xlu0 %v3736, 127
        %v6092 = vpop.permute.xlu0 %6091
        %6093 = vrot.lane.b32.xlu0 %v3737, 127
        %v6094 = vpop.permute.xlu0 %6093
        %6095 = vrot.lane.b32.xlu0 %v3738, 127
        %v6096 = vpop.permute.xlu0 %6095
        %6097 = vrot.lane.b32.xlu0 %v3739, 127
        %v6098 = vpop.permute.xlu0 %6097
        %v6099 = vsel %vm1435, %v6090, %v6092
        %v6100 = vsel %vm1435, %v6092, %v6094
        %v6101 = vsel %vm1435, %v6094, %v6096
        %v6102 = vsel %vm1435, %v6096, %v6098
        %6103 = vrot.lane.b32.xlu0 %v4202, 120
        %v6104 = vpop.permute.xlu0 %6103
        %6105 = vrot.lane.b32.xlu0 %v4203, 120
        %v6106 = vpop.permute.xlu0 %6105
        %6107 = vrot.lane.b32.xlu0 %v4204, 120
        %v6108 = vpop.permute.xlu0 %6107
        %6109 = vrot.lane.b32.xlu0 %v4205, 120
        %v6110 = vpop.permute.xlu0 %6109
        %6111 = vrot.lane.b32.xlu0 %v4206, 120
        %v6112 = vpop.permute.xlu0 %6111
        %v6113 = vsel %vm1535, %v6104, %v6106
        %v6114 = vsel %vm1535, %v6106, %v6108
        %v6115 = vsel %vm1535, %v6108, %v6110
        %v6116 = vsel %vm1535, %v6110, %v6112
        %6117 = vrot.lane.b32.xlu0 %v4595, 119
        %v6118 = vpop.permute.xlu0 %6117
        %6119 = vrot.lane.b32.xlu0 %v4596, 119
        %v6120 = vpop.permute.xlu0 %6119
        %6121 = vrot.lane.b32.xlu0 %v4597, 119
        %v6122 = vpop.permute.xlu0 %6121
        %6123 = vrot.lane.b32.xlu0 %v4598, 119
        %v6124 = vpop.permute.xlu0 %6123
        %6125 = vrot.lane.b32.xlu0 %v4599, 119
        %v6126 = vpop.permute.xlu0 %6125
        %v6127 = vsel %vm1585, %v6118, %v6120
        %v6128 = vsel %vm1585, %v6120, %v6122
        %v6129 = vsel %vm1585, %v6122, %v6124
        %v6130 = vsel %vm1585, %v6124, %v6126
        %6131 = vrot.lane.b32.xlu0 %v5039, 64
        %v6132 = vpop.permute.xlu0 %6131
        %6133 = vrot.lane.b32.xlu0 %v5040, 64
        %v6134 = vpop.permute.xlu0 %6133
        %6135 = vrot.lane.b32.xlu0 %v5041, 64
        %v6136 = vpop.permute.xlu0 %6135
        %6137 = vrot.lane.b32.xlu0 %v5042, 64
        %v6138 = vpop.permute.xlu0 %6137
        %6139 = vrot.lane.b32.xlu0 %v5043, 64
        %v6140 = vpop.permute.xlu0 %6139
        %v6141 = vsel %vm2129, %v6132, %v6134
        %v6142 = vsel %vm2129, %v6134, %v6136
        %v6143 = vsel %vm2129, %v6136, %v6138
        %v6144 = vsel %vm2129, %v6138, %v6140
        %6145 = vrot.lane.b32.xlu0 %v5432, 63
        %v6146 = vpop.permute.xlu0 %6145
        %6147 = vrot.lane.b32.xlu0 %v5433, 63
        %v6148 = vpop.permute.xlu0 %6147
        %6149 = vrot.lane.b32.xlu0 %v5434, 63
        %v6150 = vpop.permute.xlu0 %6149
        %6151 = vrot.lane.b32.xlu0 %v5435, 63
        %v6152 = vpop.permute.xlu0 %6151
        %6153 = vrot.lane.b32.xlu0 %v5436, 63
        %v6154 = vpop.permute.xlu0 %6153
        %v6155 = vsel %vm2157, %v6146, %v6148
        %v6156 = vsel %vm2157, %v6148, %v6150
        %v6157 = vsel %vm2157, %v6150, %v6152
        %v6158 = vsel %vm2157, %v6152, %v6154
        %6159 = vrot.lane.b32.xlu0 %v5825, 56
        %v6160 = vpop.permute.xlu0 %6159
        %6161 = vrot.lane.b32.xlu0 %v5826, 56
        %v6162 = vpop.permute.xlu0 %6161
        %6163 = vrot.lane.b32.xlu0 %v5827, 56
        %v6164 = vpop.permute.xlu0 %6163
        %6165 = vrot.lane.b32.xlu0 %v5828, 56
        %v6166 = vpop.permute.xlu0 %6165
        %6167 = vrot.lane.b32.xlu0 %v5829, 56
        %v6168 = vpop.permute.xlu0 %6167
        %v6169 = vsel %vm2218, %v6160, %v6162
        %v6170 = vsel %vm2218, %v6162, %v6164
        %v6171 = vsel %vm2218, %v6164, %v6166
        %v6172 = vsel %vm2218, %v6166, %v6168
        %v6176 = vunpack.c.l.b16 %v6086
        %v6177 = vunpack.c.h.b16 %v6086
        %v6178 = vunpack.c.l.b16 %v6087
        %v6179 = vunpack.c.h.b16 %v6087
        %v6180 = vunpack.c.l.b16 %v6088
        %v6181 = vpack.c.b16 %v6176, %v6176
        %v6182 = vpack.c.b16 %v6177, %v6177
        %v6183 = vpack.c.b16 %v6178, %v6178
        %v6184 = vpack.c.b16 %v6179, %v6179
        %v6185 = vpack.c.b16 %v6180, %v6180
        %6186 = vrot.lane.b32.xlu0 %v6181, 55
        %v6187 = vpop.permute.xlu0 %6186
        %6188 = vrot.lane.b32.xlu0 %v6182, 55
        %v6189 = vpop.permute.xlu0 %6188
        %6190 = vrot.lane.b32.xlu0 %v6183, 55
        %v6191 = vpop.permute.xlu0 %6190
        %6192 = vrot.lane.b32.xlu0 %v6184, 55
        %v6193 = vpop.permute.xlu0 %6192
        %6194 = vrot.lane.b32.xlu0 %v6185, 55
        %v6195 = vpop.permute.xlu0 %6194
        %v6196 = vsel %vm2251, %v6187, %v6189
        %v6197 = vsel %vm2251, %v6189, %v6191
        %v6198 = vsel %vm2251, %v6191, %v6193
        %v6199 = vsel %vm2251, %v6193, %v6195
        %v6202 = vsel %vm372, %v3345, %v6099
        %v6205 = vsel %vm372, %v3346, %v6100
        %v6208 = vsel %vm372, %v3347, %v6101
        %v6211 = vsel %vm372, %v3348, %v6102
        %v6214 = vsel %vm372, %v3349, %v6098
        %v6217 = vsel %vm372, %v6113, %v6127
        %v6220 = vsel %vm372, %v6114, %v6128
        %v6223 = vsel %vm372, %v6115, %v6129
        %v6226 = vsel %vm372, %v6116, %v6130
        %v6229 = vsel %vm372, %v6112, %v6126
        %v6232 = vsel %vm372, %v6132, %v6146
        %v6235 = vsel %vm372, %v6141, %v6155
        %v6238 = vsel %vm372, %v6142, %v6156
        %v6241 = vsel %vm372, %v6143, %v6157
        %v6244 = vsel %vm372, %v6144, %v6158
        %v6247 = vsel %vm372, %v6160, %v6187
        %v6250 = vsel %vm372, %v6169, %v6196
        %v6253 = vsel %vm372, %v6170, %v6197
        %v6256 = vsel %vm372, %v6171, %v6198
        %v6259 = vsel %vm372, %v6172, %v6199
        %s6260 = scalar_lea.vmem %s5, 14
        %v6261 = vld [vmem:[%s6260] sm:$0x3]
        %6282 = vrot.lane.b32.xlu0 %v6202, 55
        %v6283 = vpop.permute.xlu0 %6282
        %6284 = vrot.lane.b32.xlu0 %v6205, 55
        %v6285 = vpop.permute.xlu0 %6284
        %6286 = vrot.lane.b32.xlu0 %v6208, 55
        %v6287 = vpop.permute.xlu0 %6286
        %6288 = vrot.lane.b32.xlu0 %v6211, 55
        %v6289 = vpop.permute.xlu0 %6288
        %6290 = vrot.lane.b32.xlu0 %v6214, 55
        %v6291 = vpop.permute.xlu0 %6290
        %6292 = vrot.lane.b32.xlu0 %v6217, 55
        %v6293 = vpop.permute.xlu0 %6292
        %6294 = vrot.lane.b32.xlu0 %v6220, 55
        %v6295 = vpop.permute.xlu0 %6294
        %6296 = vrot.lane.b32.xlu0 %v6223, 55
        %v6297 = vpop.permute.xlu0 %6296
        %6298 = vrot.lane.b32.xlu0 %v6226, 55
        %v6299 = vpop.permute.xlu0 %6298
        %6300 = vrot.lane.b32.xlu0 %v6229, 55
        %v6301 = vpop.permute.xlu0 %6300
        %6302 = vrot.lane.b32.xlu0 %v6232, 55
        %v6303 = vpop.permute.xlu0 %6302
        %6304 = vrot.lane.b32.xlu0 %v6235, 55
        %v6305 = vpop.permute.xlu0 %6304
        %6306 = vrot.lane.b32.xlu0 %v6238, 55
        %v6307 = vpop.permute.xlu0 %6306
        %6308 = vrot.lane.b32.xlu0 %v6241, 55
        %v6309 = vpop.permute.xlu0 %6308
        %6310 = vrot.lane.b32.xlu0 %v6244, 55
        %v6311 = vpop.permute.xlu0 %6310
        %6312 = vrot.lane.b32.xlu0 %v6247, 55
        %v6313 = vpop.permute.xlu0 %6312
        %6314 = vrot.lane.b32.xlu0 %v6250, 55
        %v6315 = vpop.permute.xlu0 %6314
        %6316 = vrot.lane.b32.xlu0 %v6253, 55
        %v6317 = vpop.permute.xlu0 %6316
        %6318 = vrot.lane.b32.xlu0 %v6256, 55
        %v6319 = vpop.permute.xlu0 %6318
        %6320 = vrot.lane.b32.xlu0 %v6259, 55
        %v6321 = vpop.permute.xlu0 %6320
        %v6322 = vsel %vm2251, %v6283, %v6285
        %v6323 = vsel %vm2251, %v6285, %v6287
        %v6324 = vsel %vm2251, %v6287, %v6289
        %v6325 = vsel %vm2251, %v6289, %v6291
        %v6326 = vsel %vm2251, %v6293, %v6295
        %v6327 = vsel %vm2251, %v6295, %v6297
        %v6328 = vsel %vm2251, %v6297, %v6299
        %v6329 = vsel %vm2251, %v6299, %v6301
        %v6330 = vsel %vm2251, %v6303, %v6305
        %v6331 = vsel %vm2251, %v6305, %v6307
        %v6332 = vsel %vm2251, %v6307, %v6309
        %v6333 = vsel %vm2251, %v6309, %v6311
        %v6334 = vsel %vm2251, %v6313, %v6315
        %v6335 = vsel %vm2251, %v6315, %v6317
        %v6336 = vsel %vm2251, %v6317, %v6319
        %v6337 = vsel %vm2251, %v6319, %v6321
        %v6355 = vsel %vm887, %v6261, 0
        %6357 = vmatpush.bf16.msra.mxu0 0
        %6358 = vmatpush.bf16.msra.mxu0 0
        %6359 = vmatpush.bf16.msra.mxu0 0
        %6360 = vmatpush.bf16.msra.mxu0 0
        %6361 = vmatpush.bf16.msra.mxu0 %v6334
        %6362 = vmatpush.bf16.msra.mxu0 %v6330
        %6363 = vmatpush.bf16.msra.mxu0 %v6326
        %6364 = vmatpush.bf16.msra.mxu0 %v6322
        %6365 = vmatmul.bf16.gmra.mxu0 %v6355
        %v6366 = vpop.f32.mrf.mxu0
        %v6367 = vadd.f32 %v3433, %v6366
        %v6368 = vpop.f32.mrf.mxu0
        %6369 = vdwg.mxu0
        %6370 = vmatpush.bf16.msra.mxu0 0
        %6371 = vmatpush.bf16.msra.mxu0 0
        %6372 = vmatpush.bf16.msra.mxu0 0
        %6373 = vmatpush.bf16.msra.mxu0 0
        %6374 = vmatpush.bf16.msra.mxu0 %v6335
        %6375 = vmatpush.bf16.msra.mxu0 %v6331
        %6376 = vmatpush.bf16.msra.mxu0 %v6327
        %6377 = vmatpush.bf16.msra.mxu0 %v6323
        %6378 = vmatmul.bf16.gmra.mxu0 %v6355
        %v6379 = vpop.f32.mrf.mxu0
        %v6380 = vadd.f32 %v3433, %v6379
        %v6381 = vpop.f32.mrf.mxu0
        %6382 = vdwg.mxu0
        %6383 = vmatpush.bf16.msra.mxu0 0
        %6384 = vmatpush.bf16.msra.mxu0 0
        %6385 = vmatpush.bf16.msra.mxu0 0
        %6386 = vmatpush.bf16.msra.mxu0 0
        %6387 = vmatpush.bf16.msra.mxu0 %v6336
        %6388 = vmatpush.bf16.msra.mxu0 %v6332
        %6389 = vmatpush.bf16.msra.mxu0 %v6328
        %6390 = vmatpush.bf16.msra.mxu0 %v6324
        %6391 = vmatmul.bf16.gmra.mxu0 %v6355
        %v6392 = vpop.f32.mrf.mxu0
        %v6393 = vadd.f32 %v3433, %v6392
        %v6394 = vpop.f32.mrf.mxu0
        %6395 = vdwg.mxu0
        %6396 = vmatpush.bf16.msra.mxu0 0
        %6397 = vmatpush.bf16.msra.mxu0 0
        %6398 = vmatpush.bf16.msra.mxu0 0
        %6399 = vmatpush.bf16.msra.mxu0 0
        %6400 = vmatpush.bf16.msra.mxu0 %v6337
        %6401 = vmatpush.bf16.msra.mxu0 %v6333
        %6402 = vmatpush.bf16.msra.mxu0 %v6329
        %6403 = vmatpush.bf16.msra.mxu0 %v6325
        %6404 = vmatmul.bf16.gmra.mxu0 %v6355
        %v6405 = vpop.f32.mrf.mxu0
        %v6406 = vadd.f32 %v3433, %v6405
        %v6407 = vpop.f32.mrf.mxu0
        %6408 = vdwg.mxu0
        %vm6409 = vcmp.gt.f32.partialorder %v6367, 0.0
        %vm6410 = vcmp.gt.f32.partialorder %v6380, 0.0
        %vm6411 = vcmp.gt.f32.partialorder %v6393, 0.0
        %vm6412 = vcmp.gt.f32.partialorder %v6406, 0.0
        %v6413 = vmul.f32 %v3498, %v6367
        %v6414 = vmul.f32 %v3498, %v6380
        %v6415 = vmul.f32 %v3498, %v6393
        %v6416 = vmul.f32 %v3498, %v6406
        %v6417 = vsel %vm6409, %v6367, %v6413
        %v6418 = vsel %vm6410, %v6380, %v6414
        %v6419 = vsel %vm6411, %v6393, %v6415
        %v6420 = vsel %vm6412, %v6406, %v6416
        %v6425 = vrot.slane %v3971, 4
        %v6426 = vrot.slane %v3972, 4
        %v6427 = vrot.slane %v3973, 4
        %v6428 = vrot.slane %v3974, 4
        %v6437 = vrot.slane %v4831, 4
        %v6438 = vrot.slane %v4832, 4
        %v6439 = vrot.slane %v4833, 4
        %v6440 = vrot.slane %v4834, 4
        %v6449 = vrot.slane %v5668, 4
        %v6450 = vrot.slane %v5669, 4
        %v6451 = vrot.slane %v5670, 4
        %v6452 = vrot.slane %v5671, 4
        %v6461 = vrot.slane %v6417, 4
        %v6462 = vrot.slane %v6418, 4
        %v6463 = vrot.slane %v6419, 4
        %v6464 = vrot.slane %v6420, 4
        %v6469 = vsel %vm372, %v3504, %v6425
        %v6470 = vsel %vm372, %v3505, %v6426
        %v6471 = vsel %vm372, %v3506, %v6427
        %v6472 = vsel %vm372, %v3507, %v6428
        %v6473 = vsel %vm372, %v4438, %v6437
        %v6474 = vsel %vm372, %v4439, %v6438
        %v6475 = vsel %vm372, %v4440, %v6439
        %v6476 = vsel %vm372, %v4441, %v6440
        %v6477 = vsel %vm372, %v5275, %v6449
        %v6478 = vsel %vm372, %v5276, %v6450
        %v6479 = vsel %vm372, %v5277, %v6451
        %v6480 = vsel %vm372, %v5278, %v6452
        %v6481 = vsel %vm372, %v6061, %v6461
        %v6482 = vsel %vm372, %v6062, %v6462
        %v6483 = vsel %vm372, %v6063, %v6463
        %v6484 = vsel %vm372, %v6064, %v6464
        %6485 = vst [vmem:[%s322] sm:$0xff] %v6469
        %6486 = vst [vmem:[%s322 + $0x8] sm:$0xff] %v6470
        %6487 = vst [vmem:[%s322 + $0x10] sm:$0xff] %v6471
        %6488 = vst [vmem:[%s322 + $0x18] sm:$0xff] %v6472
        %6489 = vst [vmem:[%s322 + $0x20] sm:$0xff] %v6473
        %6490 = vst [vmem:[%s322 + $0x28] sm:$0xff] %v6474
        %6491 = vst [vmem:[%s322 + $0x30] sm:$0xff] %v6475
        %6492 = vst [vmem:[%s322 + $0x38] sm:$0xff] %v6476
        %6493 = vst [vmem:[%s322 + $0x40] sm:$0xff] %v6477
        %6494 = vst [vmem:[%s322 + $0x48] sm:$0xff] %v6478
        %6495 = vst [vmem:[%s322 + $0x50] sm:$0xff] %v6479
        %6496 = vst [vmem:[%s322 + $0x58] sm:$0xff] %v6480
        %6497 = vst [vmem:[%s322 + $0x60] sm:$0xff] %v6481
        %6498 = vst [vmem:[%s322 + $0x68] sm:$0xff] %v6482
        %6499 = vst [vmem:[%s322 + $0x70] sm:$0xff] %v6483
        %6500 = vst [vmem:[%s322 + $0x78] sm:$0xff] %v6484
        %p6501 = scmp.lt.s32.totalorder %s20, 1
        %s6502 = scalar_select %p6501, %s20, 1
        %s6503 = smul.addr %s6502, 16
        %s6504 = smul.addr %s6503, 8
        %s6505 = scalar_lea.vmem %s8, %s6504
        // Predicated region
        $region57: #{decoder_block_forward.1} parent=51 // pred_check
          %p6506 = pneg %p211
        $region58: #{decoder_block_forward.1} parent=51 // pred_check_branch
          %6508 = sbr.rel (%p6506) target = $region60
        $region59: #{decoder_block_forward.1} parent=51 // pred_region
          _
        $region60: #{decoder_block_forward.1} parent=51 // pred_fallthru
          _
      $region52: #{decoder_block_forward.1} parent=5 // pred_fallthru
        _
      %p6509 = scmp.le.s32.totalorder 2, %s15
      // Predicated region
      $region61: #{decoder_block_forward.1} parent=5 // pred_check
        %p6510 = pneg %p6509
      $region62: #{decoder_block_forward.1} parent=5 // pred_check_branch
        %6512 = sbr.rel (%p6510) target = $region64
      $region63: #{decoder_block_forward.1} parent=5 // pred_region
        %s6513 = ssub.s32 %s15, 2
        // Predicated region
        $region65: #{decoder_block_forward.1} parent=63 // pred_check
          %p6514 = pneg %p217
        $region66: #{decoder_block_forward.1} parent=63 // pred_check_branch
          %6516 = sbr.rel (%p6514) target = $region68
        $region67: #{decoder_block_forward.1} parent=63 // pred_region
          %p6517 = scmp.lt.s32.totalorder %s21, 1
          %s6518 = scalar_select %p6517, %s21, 1
          %s6519 = smul.addr %s6518, 16
          %s6520 = smul.addr %s6519, 8
          %s6521 = scalar_lea.vmem %s8, %s6520
        $region68: #{decoder_block_forward.1} parent=63 // pred_fallthru
          _
      $region64: #{decoder_block_forward.1} parent=5 // pred_fallthru
        _
    $region6: #{decoder_block_forward.1} parent=1 // loop_footer
      %s19 = sadd.s32 1, %s15
    $region7: #{decoder_block_forward.1} parent=1 // loop_footer_branch
      %14 = sbr.rel target = $region3
    $region8: #{decoder_block_forward.1} parent=1 // loop_exit
      _
    %6522 = vsyncpa [#allocation3], 1
    %s6523 = scalar_lea.sflag [#allocation3], 1
    %6524 = vsyncpa %s6523, 1

</llo_original>
